<compile_context>
chip_gen: v7x
topology: tpu7x:2x2x1
jax: 0.10.0
libtpu: 0.0.40
codegen_flags: <defaults>
</compile_context>

<pallas_src>
import math

import jax
import jax.numpy as jnp
from jax.experimental import pallas as pl
from jax.experimental.pallas import tpu as pltpu

_EPS = 1e-5
_LANE = 128
_SUBLANE = 8

# The review suggests DEFAULT / bf16 (+ f32 accumulation) for ~2x+ MXU throughput on
# v6e/v7x, but single-pass bf16 does not hold the 1e-3 check against the f32 reference
# at these magnitudes, so full f32 precision is kept as the default here.
# TODO(synk): relax to Precision.DEFAULT / bf16 inputs when the accuracy budget allows.
_MATMUL_PRECISION = jax.lax.Precision.HIGHEST


def _round_up(x, m):
    return ((x + m - 1) // m) * m


def _cdiv(a, b):
    return (a + b - 1) // b


def _fold_bn(gamma, beta, mean, var):
    """Eval-mode BatchNorm folded to a per-channel (scale, shift)."""
    scale = gamma / jnp.sqrt(var + _EPS)
    shift = beta - mean * scale
    return scale, shift


def _pad2(a, rows, cols):
    return jnp.pad(a, ((0, rows - a.shape[0]), (0, cols - a.shape[1])))


def _choose_batch_block(N, L1, Lp, cp_in, cp_out):
    """Samples per grid step: sublane-aligned output rows, VMEM-bounded, and
    >= 2 grid steps when the batch allows it (v7x megacore sharding)."""
    nb_unit = _SUBLANE // math.gcd(L1, _SUBLANE)      # guarantees Nb*L1 % 8 == 0
    rows_target = 1024                                # aim for big (rows, 128k) slabs
    nb = max(nb_unit, (max(1, rows_target // L1) // nb_unit) * nb_unit)
    nb = min(nb, _round_up(N, nb_unit))
    # Prefer >= 2 grid steps so the "parallel" batch axis can shard across 2 TCs (v7x).
    if N > nb_unit and _cdiv(N, nb) < 2:
        nb = max(nb_unit, _round_up(_cdiv(N, 2), nb_unit))

    def est_bytes(n):
        per_sample = (2 * (Lp * cp_in + L1 * cp_out)            # double-buffered in/out
                      + L1 * (3 * cp_in + 3 * cp_out)           # im2col temporaries
                      + (L1 + 2) * cp_out + 2 * L1 * cp_out)    # scratch + y1/y2
        return 4 * n * per_sample

    budget = 24 * 1024 * 1024   # leaves headroom inside v7x's 64 MiB physical VMEM
    while nb > nb_unit and est_bytes(nb) > budget:
        nb -= nb_unit
    return nb


def _make_kernel(stride, Nb, L1, cp_in, cp_out):
    """Fused conv1+bn1+relu, conv2+bn2, shortcut, add, relu."""
    f32 = jnp.float32

    def kernel(*refs):
        if stride == 1:
            x_ref, w1_ref, b1_ref, w2_ref, b2_ref, out_ref, ypad_ref = refs
        else:
            (x_ref, w1_ref, b1_ref, w2_ref, b2_ref,
             wsc_ref, bsc_ref, out_ref, ypad_ref) = refs

        # ---- conv1 (k=3, stride folded into strided tap reads) ----
        # One (Nb*L1, 3*cp_in) x (3*cp_in, cp_out) MXU matmul: taps sliced straight
        # out of the padded input block (no host im2col) and concatenated along the
        # lane axis (128-aligned -> no cross-lane shuffles).
        taps = []
        for k in range(3):
            if stride == 1:
                taps.append(x_ref[:, pl.ds(k, L1), :])
            else:
                taps.append(x_ref[:, pl.ds(k, L1, stride=stride), :])
        im2col1 = jnp.concatenate(taps, axis=-1).reshape(Nb * L1, 3 * cp_in)
        y1 = jnp.dot(im2col1, w1_ref[...],
                     preferred_element_type=f32, precision=_MATMUL_PRECISION)
        y1 = jnp.maximum(y1 + b1_ref[...], 0.0)          # bn1 scale folded into w1

        # ---- conv2 (k=3, stride=1, pad=1): same single-matmul scheme ----
        # Only the two boundary rows of the scratch need zeroing; rows 1..L1 are fully
        # overwritten every step.  (Not gated on program_id==0: under "parallel"
        # megacore sharding another core may never execute step 0.)
        # TODO(synk): keep y1 in registers (shift via roll/concat) to drop this
        # store/reload round-trip entirely (optional half of review item 5).
        ypad_ref[:, pl.ds(0, 1), :] = jnp.zeros((Nb, 1, cp_out), f32)
        ypad_ref[:, pl.ds(L1 + 1, 1), :] = jnp.zeros((Nb, 1, cp_out), f32)
        ypad_ref[:, pl.ds(1, L1), :] = y1.reshape(Nb, L1, cp_out)
        taps2 = [ypad_ref[:, pl.ds(k, L1), :] for k in range(3)]
        im2col2 = jnp.concatenate(taps2, axis=-1).reshape(Nb * L1, 3 * cp_out)
        y2 = jnp.dot(im2col2, w2_ref[...],
                     preferred_element_type=f32, precision=_MATMUL_PRECISION)
        y2 = y2 + b2_ref[...]                            # bn2 scale folded into w2

        # ---- shortcut: centre tap of im2col1 is exactly x[:, ::stride, :] ----
        xc = im2col1[:, cp_in:2 * cp_in]                 # lane-aligned static slice
        if stride == 1:
            sc = xc                                      # identity shortcut
        else:
            sc = jnp.dot(xc, wsc_ref[...],
                         preferred_element_type=f32, precision=_MATMUL_PRECISION)
            sc = sc + bsc_ref[...]                       # bnsc scale folded into wsc

        out_ref[...] = jnp.maximum(y2 + sc, 0.0).astype(out_ref.dtype)

    return kernel


def basic_block_enc_1d(x_ncl, params, stride):
    """Forward pass of BasicBlockEnc1D.  x_ncl: (N, C_in, L) float32."""
    N, C_in, L = x_ncl.shape
    C_out = C_in * stride
    L1 = (L - 1) // stride + 1            # = (L + 2*1 - 3)//stride + 1
    Lp = L + 2
    cp_in = _round_up(C_in, _LANE)        # lane-dense channel padding
    cp_out = _round_up(C_out, _LANE)

    Nb = _choose_batch_block(N, L1, Lp, cp_in, cp_out)
    N_pad = _round_up(N, Nb)
    grid_n = N_pad // Nb

    # ---- layout glue: NCL -> NLC, pad L by 1 each side, pad C and N (one pad op) ----
    x_nlc = jnp.transpose(x_ncl, (0, 2, 1)).astype(jnp.float32)
    xpad = jnp.pad(x_nlc, ((0, N_pad - N), (1, 1), (0, cp_in - C_in)))

    # ---- fold BN scale into the conv weights; only the shift stays as a bias ----
    s1, b1 = _fold_bn(*params['bn1'])
    s2, b2 = _fold_bn(*params['bn2'])
    w1 = jnp.transpose(params['w1'], (2, 1, 0)) * s1        # (3, C_in, C_out)
    w2 = jnp.transpose(params['w2'], (2, 1, 0)) * s2        # (3, C_out, C_out)
    W1 = jnp.pad(w1, ((0, 0), (0, cp_in - C_in), (0, cp_out - C_out))
                 ).reshape(3 * cp_in, cp_out)
    W2 = jnp.pad(w2, ((0, 0), (0, cp_out - C_out), (0, cp_out - C_out))
                 ).reshape(3 * cp_out, cp_out)
    B1 = _pad2(b1.reshape(1, -1), 1, cp_out)
    B2 = _pad2(b2.reshape(1, -1), 1, cp_out)

    inputs = [xpad, W1, B1, W2, B2]
    in_specs = [
        pl.BlockSpec((Nb, Lp, cp_in), lambda i: (i, 0, 0)),
        pl.BlockSpec((3 * cp_in, cp_out), lambda i: (0, 0)),
        pl.BlockSpec((1, cp_out), lambda i: (0, 0)),
        pl.BlockSpec((3 * cp_out, cp_out), lambda i: (0, 0)),
        pl.BlockSpec((1, cp_out), lambda i: (0, 0)),
    ]
    if stride != 1:
        ssc, bsc = _fold_bn(*params['bnsc'])
        wsc = params['wsc'][:, :, 0].T * ssc                # (C_in, C_out)
        Wsc = _pad2(wsc, cp_in, cp_out)
        Bsc = _pad2(bsc.reshape(1, -1), 1, cp_out)
        inputs += [Wsc, Bsc]
        in_specs += [
            pl.BlockSpec((cp_in, cp_out), lambda i: (0, 0)),
            pl.BlockSpec((1, cp_out), lambda i: (0, 0)),
        ]

    flops = 2 * N_pad * L1 * (3 * cp_in + 3 * cp_out) * cp_out
    if stride != 1:
        flops += 2 * N_pad * L1 * cp_in * cp_out
    weight_bytes = 4 * sum(int(a.size) for a in inputs[1:])
    cost = pl.CostEstimate(
        flops=flops, transcendentals=0,
        bytes_accessed=4 * (int(xpad.size) + N_pad * L1 * cp_out) + weight_bytes)

    kernel = _make_kernel(stride, Nb, L1, cp_in, cp_out)
    out2d = pl.pallas_call(
        kernel,
        grid=(grid_n,),
        in_specs=in_specs,
        out_specs=pl.BlockSpec((Nb * L1, cp_out), lambda i: (i, 0)),
        out_shape=jax.ShapeDtypeStruct((N_pad * L1, cp_out), jnp.float32),
        scratch_shapes=[pltpu.VMEM((Nb, L1 + 2, cp_out), jnp.float32)],
        compiler_params=pltpu.CompilerParams(
            dimension_semantics=("parallel",),
            vmem_limit_bytes=48 * 1024 * 1024),
        cost_estimate=cost,
    )(*inputs)

    out = out2d.reshape(N_pad, L1, cp_out)[:N, :, :C_out]
    return jnp.transpose(out, (0, 2, 1))                    # back to NCL


# -------------------- deterministic parameter init --------------------
def init_params(key, in_planes, stride):
    planes = in_planes * stride
    ks = jax.random.split(key, 6)

    def bn_params(k, c):
        k1, k2, k3, k4 = jax.random.split(k, 4)
        gamma = jax.random.uniform(k1, (c,), minval=0.5, maxval=1.5)
        beta = 0.1 * jax.random.normal(k2, (c,))
        mean = 0.1 * jax.random.normal(k3, (c,))
        var = jax.random.uniform(k4, (c,), minval=0.5, maxval=1.5)
        return (gamma, beta, mean, var)

    p = {
        'w1': 0.3 * jax.random.normal(ks[0], (planes, in_planes, 3), jnp.float32),
        'bn1': bn_params(ks[1], planes),
        'w2': 0.3 * jax.random.normal(ks[2], (planes, planes, 3), jnp.float32),
        'bn2': bn_params(ks[3], planes),
    }
    if stride != 1:
        p['wsc'] = 0.3 * jax.random.normal(ks[4], (planes, in_planes, 1), jnp.float32)
        p['bnsc'] = bn_params(ks[5], planes)
    return p


# -------------------- pure-JAX reference (correctness check) --------------------
def ref_forward(x_ncl, p, stride):
    def conv(x, w, s, pad):
        return jax.lax.conv_general_dilated(
            x, w, window_strides=(s,), padding=[(pad, pad)],
            dimension_numbers=('NCH', 'OIH', 'NCH'),
            precision=jax.lax.Precision.HIGHEST)

    def bn(x, bp):
        g, b, m, v = bp
        return ((x - m[None, :, None]) / jnp.sqrt(v[None, :, None] + _EPS)
                * g[None, :, None] + b[None, :, None])

    out = jax.nn.relu(bn(conv(x_ncl, p['w1'], stride, 1), p['bn1']))
    out = bn(conv(out, p['w2'], 1, 1), p['bn2'])
    if stride == 1:
        sc = x_ncl
    else:
        sc = bn(conv(x_ncl, p['wsc'], stride, 0), p['bnsc'])
    return jax.nn.relu(out + sc)


if __name__ == "__main__":
    # TODO(synk): PyTorch BatchNorm1d in training mode uses batch statistics; this
    # kernel implements eval-mode BN (running stats folded into weights/bias).
    key = jax.random.PRNGKey(0)
    N, L = 2, 16
    for in_planes, stride in [(4, 1), (4, 2)]:
        key, kx, kp = jax.random.split(key, 3)
        x = jax.random.normal(kx, (N, in_planes, L), dtype=jnp.float32)
        params = init_params(kp, in_planes, stride)

        out = basic_block_enc_1d(x, params, stride)
        out = jax.block_until_ready(out)

        ref = ref_forward(x, params, stride)
        assert out.shape == ref.shape, (out.shape, ref.shape)
        max_err = jnp.max(jnp.abs(out - ref))
        assert jnp.allclose(out, ref, atol=1e-3, rtol=1e-3), (
            f"mismatch (stride={stride}): max abs err {max_err}")
    print("KERNEL_OK")
</pallas_src>

<mosaic_0001>
module attributes {stable_mosaic.version = 11 : i64} {
  func.func @kernel(%arg0: i32, %arg1: memref<1x18x128xf32, #tpu.memory_space<vmem>>, %arg2: memref<384x128xf32, #tpu.memory_space<vmem>>, %arg3: memref<1x128xf32, #tpu.memory_space<vmem>>, %arg4: memref<384x128xf32, #tpu.memory_space<vmem>>, %arg5: memref<1x128xf32, #tpu.memory_space<vmem>>, %arg6: memref<16x128xf32, #tpu.memory_space<vmem>>, %arg7: memref<1x18x128xf32, #tpu.memory_space<vmem>>) attributes {dimension_semantics = [#tpu.dimension_semantics<parallel>], iteration_bounds = array<i64: 2>, scalar_prefetch = 0 : i64, scratch_operands = 1 : i64, tpu.core_type = #tpu.core_type<tc>, window_params = [{transform_indices = @transform_0, window_bounds = array<i64: 1, 18, 128>}, {pipeline_mode = #tpu.pipeline_mode<synchronous>, transform_indices = @transform_1, window_bounds = array<i64: 384, 128>}, {pipeline_mode = #tpu.pipeline_mode<synchronous>, transform_indices = @transform_2, window_bounds = array<i64: 1, 128>}, {pipeline_mode = #tpu.pipeline_mode<synchronous>, transform_indices = @transform_3, window_bounds = array<i64: 384, 128>}, {pipeline_mode = #tpu.pipeline_mode<synchronous>, transform_indices = @transform_4, window_bounds = array<i64: 1, 128>}, {transform_indices = @transform_5, window_bounds = array<i64: 16, 128>}]} {
    %c0 = arith.constant 0 : index
    %c0_0 = arith.constant 0 : index
    %c0_1 = arith.constant 0 : index
    %0 = vector.load %arg1[%c0, %c0_0, %c0_1] : memref<1x18x128xf32, #tpu.memory_space<vmem>>, vector<1x16x128xf32>
    %c0_2 = arith.constant 0 : index
    %c1 = arith.constant 1 : index
    %c0_3 = arith.constant 0 : index
    %1 = vector.load %arg1[%c0_2, %c1, %c0_3] : memref<1x18x128xf32, #tpu.memory_space<vmem>>, vector<1x16x128xf32>
    %c0_4 = arith.constant 0 : index
    %c2 = arith.constant 2 : index
    %c0_5 = arith.constant 0 : index
    %2 = vector.load %arg1[%c0_4, %c2, %c0_5] : memref<1x18x128xf32, #tpu.memory_space<vmem>>, vector<1x16x128xf32>
    %3 = tpu.concatenate %0, %1, %2 in 2 : vector<1x16x128xf32>, vector<1x16x128xf32>, vector<1x16x128xf32> -> vector<1x16x384xf32>
    %4 = vector.shape_cast %3 : vector<1x16x384xf32> to vector<16x384xf32>
    %c0_6 = arith.constant 0 : index
    %c0_7 = arith.constant 0 : index
    %5 = vector.load %arg2[%c0_6, %c0_7] : memref<384x128xf32, #tpu.memory_space<vmem>>, vector<384x128xf32>
    %cst = arith.constant dense<0.000000e+00> : vector<16x128xf32>
    %6 = tpu.matmul %4, %5, %cst {dimension_numbers = #tpu.dot_dimension_numbers<[1], [0], [0], [1], [0, 0, 1, 1], [], []>, precision = #tpu.contract_precision<fp32>} : vector<16x384xf32>, vector<384x128xf32>, vector<16x128xf32> -> vector<16x128xf32>
    %c0_8 = arith.constant 0 : index
    %c0_9 = arith.constant 0 : index
    %7 = vector.load %arg3[%c0_8, %c0_9] : memref<1x128xf32, #tpu.memory_space<vmem>>, vector<1x128xf32>
    %8 = vector.broadcast %7 : vector<1x128xf32> to vector<16x128xf32>
    %9 = arith.addf %6, %8 : vector<16x128xf32>
    %cst_10 = arith.constant 0.000000e+00 : f32
    %10 = vector.broadcast %cst_10 : f32 to vector<16x128xf32>
    %11 = arith.maximumf %9, %10 : vector<16x128xf32>
    %cst_11 = arith.constant 0.000000e+00 : f32
    %12 = vector.broadcast %cst_11 : f32 to vector<1x1x128xf32>
    %c0_12 = arith.constant 0 : index
    %c0_13 = arith.constant 0 : index
    %c0_14 = arith.constant 0 : index
    %13 = vector.load %arg7[%c0_12, %c0_13, %c0_14] : memref<1x18x128xf32, #tpu.memory_space<vmem>>, vector<1x1x128xf32>
    tpu.vector_store %arg7[%c0_12, %c0_13, %c0_14], %12 {strides = array<i32>} : memref<1x18x128xf32, #tpu.memory_space<vmem>>, vector<1x1x128xf32>,
    %cst_15 = arith.constant 0.000000e+00 : f32
    %14 = vector.broadcast %cst_15 : f32 to vector<1x1x128xf32>
    %c0_16 = arith.constant 0 : index
    %c17 = arith.constant 17 : index
    %c0_17 = arith.constant 0 : index
    %15 = vector.load %arg7[%c0_16, %c17, %c0_17] : memref<1x18x128xf32, #tpu.memory_space<vmem>>, vector<1x1x128xf32>
    tpu.vector_store %arg7[%c0_16, %c17, %c0_17], %14 {strides = array<i32>} : memref<1x18x128xf32, #tpu.memory_space<vmem>>, vector<1x1x128xf32>,
    %16 = vector.shape_cast %11 : vector<16x128xf32> to vector<1x16x128xf32>
    %c0_18 = arith.constant 0 : index
    %c1_19 = arith.constant 1 : index
    %c0_20 = arith.constant 0 : index
    %17 = vector.load %arg7[%c0_18, %c1_19, %c0_20] : memref<1x18x128xf32, #tpu.memory_space<vmem>>, vector<1x16x128xf32>
    tpu.vector_store %arg7[%c0_18, %c1_19, %c0_20], %16 {strides = array<i32>} : memref<1x18x128xf32, #tpu.memory_space<vmem>>, vector<1x16x128xf32>,
    %c0_21 = arith.constant 0 : index
    %c0_22 = arith.constant 0 : index
    %c0_23 = arith.constant 0 : index
    %18 = vector.load %arg7[%c0_21, %c0_22, %c0_23] : memref<1x18x128xf32, #tpu.memory_space<vmem>>, vector<1x16x128xf32>
    %c0_24 = arith.constant 0 : index
    %c1_25 = arith.constant 1 : index
    %c0_26 = arith.constant 0 : index
    %19 = vector.load %arg7[%c0_24, %c1_25, %c0_26] : memref<1x18x128xf32, #tpu.memory_space<vmem>>, vector<1x16x128xf32>
    %c0_27 = arith.constant 0 : index
    %c2_28 = arith.constant 2 : index
    %c0_29 = arith.constant 0 : index
    %20 = vector.load %arg7[%c0_27, %c2_28, %c0_29] : memref<1x18x128xf32, #tpu.memory_space<vmem>>, vector<1x16x128xf32>
    %21 = tpu.concatenate %18, %19, %20 in 2 : vector<1x16x128xf32>, vector<1x16x128xf32>, vector<1x16x128xf32> -> vector<1x16x384xf32>
    %22 = vector.shape_cast %21 : vector<1x16x384xf32> to vector<16x384xf32>
    %c0_30 = arith.constant 0 : index
    %c0_31 = arith.constant 0 : index
    %23 = vector.load %arg4[%c0_30, %c0_31] : memref<384x128xf32, #tpu.memory_space<vmem>>, vector<384x128xf32>
    %cst_32 = arith.constant dense<0.000000e+00> : vector<16x128xf32>
    %24 = tpu.matmul %22, %23, %cst_32 {dimension_numbers = #tpu.dot_dimension_numbers<[1], [0], [0], [1], [0, 0, 1, 1], [], []>, precision = #tpu.contract_precision<fp32>} : vector<16x384xf32>, vector<384x128xf32>, vector<16x128xf32> -> vector<16x128xf32>
    %c0_33 = arith.constant 0 : index
    %c0_34 = arith.constant 0 : index
    %25 = vector.load %arg5[%c0_33, %c0_34] : memref<1x128xf32, #tpu.memory_space<vmem>>, vector<1x128xf32>
    %26 = vector.broadcast %25 : vector<1x128xf32> to vector<16x128xf32>
    %27 = arith.addf %24, %26 : vector<16x128xf32>
    %28 = vector.extract_strided_slice %4 {offsets = [0, 128], sizes = [16, 128], strides = [1, 1]} : vector<16x384xf32> to vector<16x128xf32>
    %29 = arith.addf %27, %28 : vector<16x128xf32>
    %cst_35 = arith.constant 0.000000e+00 : f32
    %30 = vector.broadcast %cst_35 : f32 to vector<16x128xf32>
    %31 = arith.maximumf %29, %30 : vector<16x128xf32>
    %c0_36 = arith.constant 0 : index
    %c0_37 = arith.constant 0 : index
    %32 = vector.load %arg6[%c0_36, %c0_37] : memref<16x128xf32, #tpu.memory_space<vmem>>, vector<16x128xf32>
    tpu.vector_store %arg6[%c0_36, %c0_37], %31 {strides = array<i32>} : memref<16x128xf32, #tpu.memory_space<vmem>>, vector<16x128xf32>,
    return
  }
  func.func @transform_0(%arg0: i32) -> (i32, i32, i32) {
    %c0_i32 = arith.constant 0 : i32
    %c0_i32_0 = arith.constant 0 : i32
    %c0_i32_1 = arith.constant 0 : i32
    return %arg0, %c0_i32, %c0_i32_0 : i32, i32, i32
  }
  func.func @transform_1(%arg0: i32) -> (i32, i32) {
    %c0_i32 = arith.constant 0 : i32
    %c0_i32_0 = arith.constant 0 : i32
    %c0_i32_1 = arith.constant 0 : i32
    return %c0_i32, %c0_i32_0 : i32, i32
  }
  func.func @transform_2(%arg0: i32) -> (i32, i32) {
    %c0_i32 = arith.constant 0 : i32
    %c0_i32_0 = arith.constant 0 : i32
    %c0_i32_1 = arith.constant 0 : i32
    return %c0_i32, %c0_i32_0 : i32, i32
  }
  func.func @transform_3(%arg0: i32) -> (i32, i32) {
    %c0_i32 = arith.constant 0 : i32
    %c0_i32_0 = arith.constant 0 : i32
    %c0_i32_1 = arith.constant 0 : i32
    return %c0_i32, %c0_i32_0 : i32, i32
  }
  func.func @transform_4(%arg0: i32) -> (i32, i32) {
    %c0_i32 = arith.constant 0 : i32
    %c0_i32_0 = arith.constant 0 : i32
    %c0_i32_1 = arith.constant 0 : i32
    return %c0_i32, %c0_i32_0 : i32, i32
  }
  func.func @transform_5(%arg0: i32) -> (i32, i32) {
    %c0_i32 = arith.constant 0 : i32
    %c0_i32_0 = arith.constant 0 : i32
    return %arg0, %c0_i32 : i32, i32
  }
}

</mosaic_0001>

<llo_original>
// kernel: tpu_custom_call.1
$region0: #{tpu_custom_call.1}
  #allocation0 [shape = 'u32[]', space=smem, size = 0x4, offset = 0x4, fixed_abs, tag = 'smem constant byte address 0x4 - core index']
  #allocation1 [shape = 'u32[144,128]{1,0:T(1,128)}', space=vmem, size = 0x12000, scoped, tag = 'internal scratch']
  #allocation2 [shape = 'f32[1,18,128]{2,1,0:T(8,128)}', space=vmem, size = 0x3000, scoped, tag = 'scratch operand']
  %s0 = inlined_call_operand.vmem [shape: f32[2,18,128], index: 0, kind: input, shape index: {}]
  %s1 = inlined_call_operand.hbm [shape: f32[384,128], index: 1, kind: input, shape index: {}]
  %s2 = inlined_call_operand.vmem [shape: f32[1,128], index: 2, kind: input, shape index: {}]
  %s3 = inlined_call_operand.hbm [shape: f32[384,128], index: 3, kind: input, shape index: {}]
  %s4 = inlined_call_operand.vmem [shape: f32[1,128], index: 4, kind: input, shape index: {}]
  %s5 = inlined_call_operand.hbm [shape: f32[32,128], index: 5, kind: output, shape index: {}]
  %s6 = sld [smem:[#allocation0]]
  $region61: #{tpu_custom_call.1} parent=0
    _
  %s8 = ssub.s32 1, %s6
  %s9 = scalar_select 0, %s8, %s6
  $region1: #{tpu_custom_call.1} parent=0
    #allocation3 [shape = 'u8[196608]{0}', space=vmem, size = 0x30000, scoped, tag = 'input window, operand 1, single buffered']
    #allocation4 [shape = 's32[2]{0}', space=sflag, size = 0x8, scoped, tag = 'scoped memory for tpu_custom_call.1']
    #allocation5 [shape = 's32[2]{0}', space=sflag, size = 0x8, scoped, tag = 'scoped memory for tpu_custom_call.1']
    #allocation6 [shape = 'u8[196608]{0}', space=vmem, size = 0x30000, scoped, tag = 'input window, operand 3, single buffered']
    #allocation7 [shape = 's32[1]{0}', space=sflag, size = 0x4, scoped, tag = 'scoped memory for tpu_custom_call.1']
    #allocation8 [shape = 'u8[16384]{0}', space=vmem, size = 0x4000, scoped, tag = 'output window, operand 0']
    %10 = vsyncpa [#allocation4], 0
    %11 = vsyncpa [#allocation7], 0
    %12 = vsyncpa [#allocation5], 0
    %s13 = scalar_lea.sflag [#allocation5], 1
    %14 = vsyncpa %s13, 0
    loop: start=0, step=1, limit=4
    $region2: #{tpu_custom_call.1} parent=1 // loop_pre_header
      _
    $region3: #{tpu_custom_call.1} parent=1 // loop_header
      %s16 = sphi 0, %s20
      %p17 = scmp.ge.s32.totalorder %s16, 4
      %s26 = sphi 0, %s28
      %s29 = sphi 0, %s26
      %s30 = sphi 0, %s29
      %s46 = sphi 0, %s30
      %s50 = sphi 0, %s50
      %s52 = sphi 0, %s50
      %s53 = sphi 0, %s52
      %s67 = sphi 0, %s53
      %s71 = sphi 0, %s71
      %s73 = sphi 0, %s71
      %s74 = sphi 0, %s73
      %s88 = sphi 0, %s74
      %s92 = sphi 0, %s92
      %s94 = sphi 0, %s92
      %s95 = sphi 0, %s94
      %s109 = sphi 0, %s95
      %s113 = sphi 0, %s113
      %s115 = sphi 0, %s113
      %s116 = sphi 0, %s115
      %s130 = sphi 0, %s116
      %s136 = sphi 0, %s138
      %s139 = sphi 0, %s136
      %s140 = sphi 0, %s139
      %s156 = sphi 0, %s140
    $region4: #{tpu_custom_call.1} parent=1 // loop_header_branch
      %19 = sbr.rel (%p17) target = $region8
    $region5: #{tpu_custom_call.1} parent=1 // loop_body
      %s21 = ssub.s32 %s16, 1
      %s22 = ssub.s32 %s16, 2
      %s23 = sadd.s32 %s16, 1
      %s24 = ssub.s32 %s16, %s23
      %p25 = scmp.eq.s32.totalorder %s24, 0
      %s27 = sadd.s32 %s26, 1
      %s28 = scalar_select %p25, %s26, %s27
      %p31 = pneg %p25
      %p32 = scmp.eq.s32.totalorder %s16, 1
      %p33 = por %p31, %p32
      %p34 = scmp.ne.s32.totalorder %s26, %s29
      %p35 = scmp.eq.s32.totalorder %s16, 0
      %p36 = por %p34, %p35
      %p37 = scmp.ne.s32.totalorder %s26, %s29
      %p38 = scmp.eq.s32.totalorder %s21, 1
      %p39 = por %p37, %p38
      %p40 = scmp.ne.s32.totalorder %s29, %s30
      %p41 = scmp.eq.s32.totalorder %s21, 0
      %p42 = por %p40, %p41
      %p43 = scmp.ne.s32.totalorder %s29, %s30
      %p44 = scmp.eq.s32.totalorder %s22, 1
      %p45 = por %p43, %p44
      %p47 = scmp.ne.s32.totalorder %s30, %s46
      %p48 = scmp.eq.s32.totalorder %s22, 0
      %p49 = por %p47, %p48
      %s51 = sadd.s32 %s50, 1
      %p54 = scmp.eq.s32.totalorder %s16, 1
      %p55 = scmp.ne.s32.totalorder %s50, %s52
      %p56 = scmp.eq.s32.totalorder %s16, 0
      %p57 = por %p55, %p56
      %p58 = scmp.ne.s32.totalorder %s50, %s52
      %p59 = scmp.eq.s32.totalorder %s21, 1
      %p60 = por %p58, %p59
      %p61 = scmp.ne.s32.totalorder %s52, %s53
      %p62 = scmp.eq.s32.totalorder %s21, 0
      %p63 = por %p61, %p62
      %p64 = scmp.ne.s32.totalorder %s52, %s53
      %p65 = scmp.eq.s32.totalorder %s22, 1
      %p66 = por %p64, %p65
      %p68 = scmp.ne.s32.totalorder %s53, %s67
      %p69 = scmp.eq.s32.totalorder %s22, 0
      %p70 = por %p68, %p69
      %s72 = sadd.s32 %s71, 1
      %p75 = scmp.eq.s32.totalorder %s16, 1
      %p76 = scmp.ne.s32.totalorder %s71, %s73
      %p77 = scmp.eq.s32.totalorder %s16, 0
      %p78 = por %p76, %p77
      %p79 = scmp.ne.s32.totalorder %s71, %s73
      %p80 = scmp.eq.s32.totalorder %s21, 1
      %p81 = por %p79, %p80
      %p82 = scmp.ne.s32.totalorder %s73, %s74
      %p83 = scmp.eq.s32.totalorder %s21, 0
      %p84 = por %p82, %p83
      %p85 = scmp.ne.s32.totalorder %s73, %s74
      %p86 = scmp.eq.s32.totalorder %s22, 1
      %p87 = por %p85, %p86
      %p89 = scmp.ne.s32.totalorder %s74, %s88
      %p90 = scmp.eq.s32.totalorder %s22, 0
      %p91 = por %p89, %p90
      %s93 = sadd.s32 %s92, 1
      %p96 = scmp.eq.s32.totalorder %s16, 1
      %p97 = scmp.ne.s32.totalorder %s92, %s94
      %p98 = scmp.eq.s32.totalorder %s16, 0
      %p99 = por %p97, %p98
      %p100 = scmp.ne.s32.totalorder %s92, %s94
      %p101 = scmp.eq.s32.totalorder %s21, 1
      %p102 = por %p100, %p101
      %p103 = scmp.ne.s32.totalorder %s94, %s95
      %p104 = scmp.eq.s32.totalorder %s21, 0
      %p105 = por %p103, %p104
      %p106 = scmp.ne.s32.totalorder %s94, %s95
      %p107 = scmp.eq.s32.totalorder %s22, 1
      %p108 = por %p106, %p107
      %p110 = scmp.ne.s32.totalorder %s95, %s109
      %p111 = scmp.eq.s32.totalorder %s22, 0
      %p112 = por %p110, %p111
      %s114 = sadd.s32 %s113, 1
      %p117 = scmp.eq.s32.totalorder %s16, 1
      %p118 = scmp.ne.s32.totalorder %s113, %s115
      %p119 = scmp.eq.s32.totalorder %s16, 0
      %p120 = por %p118, %p119
      %p121 = scmp.ne.s32.totalorder %s113, %s115
      %p122 = scmp.eq.s32.totalorder %s21, 1
      %p123 = por %p121, %p122
      %p124 = scmp.ne.s32.totalorder %s115, %s116
      %p125 = scmp.eq.s32.totalorder %s21, 0
      %p126 = por %p124, %p125
      %p127 = scmp.ne.s32.totalorder %s115, %s116
      %p128 = scmp.eq.s32.totalorder %s22, 1
      %p129 = por %p127, %p128
      %p131 = scmp.ne.s32.totalorder %s116, %s130
      %p132 = scmp.eq.s32.totalorder %s22, 0
      %p133 = por %p131, %p132
      %s134 = ssub.s32 %s16, %s23
      %p135 = scmp.eq.s32.totalorder %s134, 0
      %s137 = sadd.s32 %s136, 1
      %s138 = scalar_select %p135, %s136, %s137
      %p141 = pneg %p135
      %p142 = scmp.eq.s32.totalorder %s16, 1
      %p143 = por %p141, %p142
      %p144 = scmp.ne.s32.totalorder %s136, %s139
      %p145 = scmp.eq.s32.totalorder %s16, 0
      %p146 = por %p144, %p145
      %p147 = scmp.ne.s32.totalorder %s136, %s139
      %p148 = scmp.eq.s32.totalorder %s21, 1
      %p149 = por %p147, %p148
      %p150 = scmp.ne.s32.totalorder %s139, %s140
      %p151 = scmp.eq.s32.totalorder %s21, 0
      %p152 = por %p150, %p151
      %p153 = scmp.ne.s32.totalorder %s139, %s140
      %p154 = scmp.eq.s32.totalorder %s22, 1
      %p155 = por %p153, %p154
      %p157 = scmp.ne.s32.totalorder %s140, %s156
      %p158 = scmp.eq.s32.totalorder %s22, 0
      %p159 = por %p157, %p158
      %p160 = scmp.le.s32.totalorder 1, %s16
      %p161 = scmp.lt.s32.totalorder %s16, 3
      %p162 = pnand %p160, %p161
      %p163 = pneg %p162
      // Predicated region
      $region9: #{tpu_custom_call.1} parent=5 // pred_check
        _
      $region10: #{tpu_custom_call.1} parent=5 // pred_check_branch
        %165 = sbr.rel (%p162) target = $region12
      $region11: #{tpu_custom_call.1} parent=5 // pred_region
        %s166 = ssub.s32 %s16, 1
        // Predicated region
        $region13: #{tpu_custom_call.1} parent=11 // pred_check
          %p167 = pneg %p63
        $region14: #{tpu_custom_call.1} parent=11 // pred_check_branch
          %169 = sbr.rel (%p167) target = $region16
        $region15: #{tpu_custom_call.1} parent=11 // pred_region
          %s171 = ssub.s32 6144, 6144
          %172 = vsyncadd [#allocation4], %s171
          %s173 = sshll.u32 [#allocation3], 4
          %s174 = int_to_ptr.vmem [resolvable:$true] %s173
          %179 = dma.hbm_to_vmem [thread:$0]  %s1, 6144, %s174, [#allocation4], 128, 128, 8
        $region16: #{tpu_custom_call.1} parent=11 // pred_fallthru
          _
        // Predicated region
        $region17: #{tpu_custom_call.1} parent=11 // pred_check
          %p180 = pneg %p84
        $region18: #{tpu_custom_call.1} parent=11 // pred_check_branch
          %182 = sbr.rel (%p180) target = $region20
        $region19: #{tpu_custom_call.1} parent=11 // pred_region
          _
        $region20: #{tpu_custom_call.1} parent=11 // pred_fallthru
          _
        // Predicated region
        $region21: #{tpu_custom_call.1} parent=11 // pred_check
          %p183 = pneg %p105
        $region22: #{tpu_custom_call.1} parent=11 // pred_check_branch
          %185 = sbr.rel (%p183) target = $region24
        $region23: #{tpu_custom_call.1} parent=11 // pred_region
          %s187 = ssub.s32 6144, 6144
          %188 = vsyncadd [#allocation7], %s187
          %s189 = sshll.u32 [#allocation6], 4
          %s190 = int_to_ptr.vmem [resolvable:$true] %s189
          %195 = dma.hbm_to_vmem [thread:$0]  %s3, 6144, %s190, [#allocation7], 128, 128, 8
        $region24: #{tpu_custom_call.1} parent=11 // pred_fallthru
          _
        // Predicated region
        $region25: #{tpu_custom_call.1} parent=11 // pred_check
          %p196 = pneg %p126
        $region26: #{tpu_custom_call.1} parent=11 // pred_check_branch
          %198 = sbr.rel (%p196) target = $region28
        $region27: #{tpu_custom_call.1} parent=11 // pred_region
          _
        $region28: #{tpu_custom_call.1} parent=11 // pred_fallthru
          _
      $region12: #{tpu_custom_call.1} parent=5 // pred_fallthru
        _
      %p199 = scmp.lt.s32.totalorder %s16, 2
      // Predicated region
      $region29: #{tpu_custom_call.1} parent=5 // pred_check
        %p200 = pneg %p199
      $region30: #{tpu_custom_call.1} parent=5 // pred_check_branch
        %202 = sbr.rel (%p200) target = $region32
      $region31: #{tpu_custom_call.1} parent=5 // pred_region
        // Predicated region
        $region33: #{tpu_custom_call.1} parent=31 // pred_check
          %p203 = pneg %p36
        $region34: #{tpu_custom_call.1} parent=31 // pred_check_branch
          %205 = sbr.rel (%p203) target = $region36
        $region35: #{tpu_custom_call.1} parent=31 // pred_region
          %p206 = scmp.lt.s32.totalorder %s16, 1
          %s207 = scalar_select %p206, %s16, 1
          %s208 = smul.addr %s207, 3
          %s209 = smul.addr %s208, 8
          %s210 = scalar_lea.vmem %s0, %s209
        $region36: #{tpu_custom_call.1} parent=31 // pred_fallthru
          _
      $region32: #{tpu_custom_call.1} parent=5 // pred_fallthru
        _
      %p211 = scmp.le.s32.totalorder 1, %s16
      %p212 = scmp.lt.s32.totalorder %s16, 3
      %p213 = pnand %p211, %p212
      %p214 = pneg %p213
      // Predicated region
      $region37: #{tpu_custom_call.1} parent=5 // pred_check
        _
      $region38: #{tpu_custom_call.1} parent=5 // pred_check_branch
        %216 = sbr.rel (%p213) target = $region40
      $region39: #{tpu_custom_call.1} parent=5 // pred_region
        %s217 = ssub.s32 %s16, 1
        // Predicated region
        $region41: #{tpu_custom_call.1} parent=39 // pred_check
          %p218 = pneg %p63
        $region42: #{tpu_custom_call.1} parent=39 // pred_check_branch
          %220 = sbr.rel (%p218) target = $region44
        $region43: #{tpu_custom_call.1} parent=39 // pred_region
          %221 = dma.done [#allocation4], 6144
        $region44: #{tpu_custom_call.1} parent=39 // pred_fallthru
          _
        // Predicated region
        $region45: #{tpu_custom_call.1} parent=39 // pred_check
          %p222 = pneg %p105
        $region46: #{tpu_custom_call.1} parent=39 // pred_check_branch
          %224 = sbr.rel (%p222) target = $region48
        $region47: #{tpu_custom_call.1} parent=39 // pred_region
          %225 = dma.done [#allocation7], 6144
        $region48: #{tpu_custom_call.1} parent=39 // pred_fallthru
          _
        %p226 = scmp.lt.s32.totalorder %s21, 1
        %s227 = scalar_select %p226, %s21, 1
        %s228 = smul.addr %s227, 3
        %s229 = smul.addr %s228, 8
        %s230 = scalar_lea.vmem %s0, %s229
        %p231 = pneg %p42
        %p232 = pneg %p39
        %p233 = pneg %p63
        %p234 = pneg %p60
        %p235 = pneg %p84
        %p236 = pneg %p81
        %p237 = pneg %p105
        %p238 = pneg %p102
        %p239 = pneg %p126
        %p240 = pneg %p123
        %p241 = pneg %p152
        %p242 = pneg %p149
        %s243 = sand.u32 %s139, 1
        %s244 = scalar_lea.sflag [#allocation5], %s243
        %s245 = sand.u32 %s139, 1
        %s246 = smul.addr %s245, 16
        %s247 = scalar_lea.vmem [#allocation8], %s246
        %p248 = scmp.lt.s32.totalorder %s21, 1
        %s249 = scalar_select %p248, %s21, 1
        %s250 = smul.addr %s249, 3
        %s251 = smul.addr %s250, 8
        %s252 = scalar_lea.vmem %s0, %s251
        %s253 = smul.u32 2, %s21
        %v254 = vld [vmem:[%s252] sm:$0xff]
        %v255 = vld [vmem:[%s252 + $0x8] sm:$0xff]
        %v256 = vld [vmem:[%s252 + $0x1] sm:$0xff]
        %v257 = vld [vmem:[%s252 + $0x9] sm:$0xff]
        %v258 = vld [vmem:[%s252 + $0x2] sm:$0xff]
        %v259 = vld [vmem:[%s252 + $0xa] sm:$0xff]
        %v260 = vld [vmem:[#allocation3] sm:$0xff]
        %v261 = vld [vmem:[#allocation3 + $0x8] sm:$0xff]
        %v262 = vld [vmem:[#allocation3 + $0x10] sm:$0xff]
        %v263 = vld [vmem:[#allocation3 + $0x18] sm:$0xff]
        %v264 = vld [vmem:[#allocation3 + $0x20] sm:$0xff]
        %v265 = vld [vmem:[#allocation3 + $0x28] sm:$0xff]
        %v266 = vld [vmem:[#allocation3 + $0x30] sm:$0xff]
        %v267 = vld [vmem:[#allocation3 + $0x38] sm:$0xff]
        %v268 = vld [vmem:[#allocation3 + $0x40] sm:$0xff]
        %v269 = vld [vmem:[#allocation3 + $0x48] sm:$0xff]
        %v270 = vld [vmem:[#allocation3 + $0x50] sm:$0xff]
        %v271 = vld [vmem:[#allocation3 + $0x58] sm:$0xff]
        %v272 = vld [vmem:[#allocation3 + $0x60] sm:$0xff]
        %v273 = vld [vmem:[#allocation3 + $0x68] sm:$0xff]
        %v274 = vld [vmem:[#allocation3 + $0x70] sm:$0xff]
        %v275 = vld [vmem:[#allocation3 + $0x78] sm:$0xff]
        %v276 = vld [vmem:[#allocation3 + $0x80] sm:$0xff]
        %v277 = vld [vmem:[#allocation3 + $0x88] sm:$0xff]
        %v278 = vld [vmem:[#allocation3 + $0x90] sm:$0xff]
        %v279 = vld [vmem:[#allocation3 + $0x98] sm:$0xff]
        %v280 = vld [vmem:[#allocation3 + $0xa0] sm:$0xff]
        %v281 = vld [vmem:[#allocation3 + $0xa8] sm:$0xff]
        %v282 = vld [vmem:[#allocation3 + $0xb0] sm:$0xff]
        %v283 = vld [vmem:[#allocation3 + $0xb8] sm:$0xff]
        %v284 = vld [vmem:[#allocation3 + $0xc0] sm:$0xff]
        %v285 = vld [vmem:[#allocation3 + $0xc8] sm:$0xff]
        %v286 = vld [vmem:[#allocation3 + $0xd0] sm:$0xff]
        %v287 = vld [vmem:[#allocation3 + $0xd8] sm:$0xff]
        %v288 = vld [vmem:[#allocation3 + $0xe0] sm:$0xff]
        %v289 = vld [vmem:[#allocation3 + $0xe8] sm:$0xff]
        %v290 = vld [vmem:[#allocation3 + $0xf0] sm:$0xff]
        %v291 = vld [vmem:[#allocation3 + $0xf8] sm:$0xff]
        %v292 = vld [vmem:[#allocation3 + $0x100] sm:$0xff]
        %v293 = vld [vmem:[#allocation3 + $0x108] sm:$0xff]
        %v294 = vld [vmem:[#allocation3 + $0x110] sm:$0xff]
        %v295 = vld [vmem:[#allocation3 + $0x118] sm:$0xff]
        %v296 = vld [vmem:[#allocation3 + $0x120] sm:$0xff]
        %v297 = vld [vmem:[#allocation3 + $0x128] sm:$0xff]
        %v298 = vld [vmem:[#allocation3 + $0x130] sm:$0xff]
        %v299 = vld [vmem:[#allocation3 + $0x138] sm:$0xff]
        %v300 = vld [vmem:[#allocation3 + $0x140] sm:$0xff]
        %v301 = vld [vmem:[#allocation3 + $0x148] sm:$0xff]
        %v302 = vld [vmem:[#allocation3 + $0x150] sm:$0xff]
        %v303 = vld [vmem:[#allocation3 + $0x158] sm:$0xff]
        %v304 = vld [vmem:[#allocation3 + $0x160] sm:$0xff]
        %v305 = vld [vmem:[#allocation3 + $0x168] sm:$0xff]
        %v306 = vld [vmem:[#allocation3 + $0x170] sm:$0xff]
        %v307 = vld [vmem:[#allocation3 + $0x178] sm:$0xff]
        %v308 = vld [vmem:[%s2] sm:$0x1]
        %v310 = vlaneseq
        %v311 = vshrl.u32 %v310, 7
        %v312 = vsub.s32 0, %v311
        %v313 = vrot.slane %v308, %v312
        %315 = vmatprep.subr.mxu0 0.0
        %v316 = vand.u32 %v260, 4294901760
        %317 = vmatpush1.msra.mxu0 %v316
        %318 = vmatprep.subr.mxu0 0.0
        %v319 = vand.u32 %v261, 4294901760
        %320 = vmatpush1.msra.mxu0 %v319
        %321 = vmatprep.subr.mxu0 0.0
        %v322 = vand.u32 %v262, 4294901760
        %323 = vmatpush1.msra.mxu0 %v322
        %324 = vmatprep.subr.mxu0 0.0
        %v325 = vand.u32 %v263, 4294901760
        %326 = vmatpush1.msra.mxu0 %v325
        %327 = vmatprep.subr.mxu0 0.0
        %v328 = vand.u32 %v264, 4294901760
        %329 = vmatpush1.msra.mxu0 %v328
        %330 = vmatprep.subr.mxu0 0.0
        %v331 = vand.u32 %v265, 4294901760
        %332 = vmatpush1.msra.mxu0 %v331
        %333 = vmatprep.subr.mxu0 0.0
        %v334 = vand.u32 %v266, 4294901760
        %335 = vmatpush1.msra.mxu0 %v334
        %336 = vmatprep.subr.mxu0 0.0
        %v337 = vand.u32 %v267, 4294901760
        %338 = vmatpush1.msra.mxu0 %v337
        %339 = vmatprep.subr.mxu0 0.0
        %v340 = vand.u32 %v268, 4294901760
        %341 = vmatpush1.msra.mxu0 %v340
        %342 = vmatprep.subr.mxu0 0.0
        %v343 = vand.u32 %v269, 4294901760
        %344 = vmatpush1.msra.mxu0 %v343
        %345 = vmatprep.subr.mxu0 0.0
        %v346 = vand.u32 %v270, 4294901760
        %347 = vmatpush1.msra.mxu0 %v346
        %348 = vmatprep.subr.mxu0 0.0
        %v349 = vand.u32 %v271, 4294901760
        %350 = vmatpush1.msra.mxu0 %v349
        %351 = vmatprep.subr.mxu0 0.0
        %v352 = vand.u32 %v272, 4294901760
        %353 = vmatpush1.msra.mxu0 %v352
        %354 = vmatprep.subr.mxu0 0.0
        %v355 = vand.u32 %v273, 4294901760
        %356 = vmatpush1.msra.mxu0 %v355
        %357 = vmatprep.subr.mxu0 0.0
        %v358 = vand.u32 %v274, 4294901760
        %359 = vmatpush1.msra.mxu0 %v358
        %360 = vmatprep.subr.mxu0 0.0
        %v361 = vand.u32 %v275, 4294901760
        %362 = vmatpush1.msra.mxu0 %v361
        %363 = vmatprep.subr.mxu0 0.0
        %v364 = vand.u32 %v276, 4294901760
        %365 = vmatpush1.msra.mxu0 %v364
        %366 = vmatprep.subr.mxu0 0.0
        %v367 = vand.u32 %v277, 4294901760
        %368 = vmatpush1.msra.mxu0 %v367
        %369 = vmatprep.subr.mxu0 0.0
        %v370 = vand.u32 %v278, 4294901760
        %371 = vmatpush1.msra.mxu0 %v370
        %372 = vmatprep.subr.mxu0 0.0
        %v373 = vand.u32 %v279, 4294901760
        %374 = vmatpush1.msra.mxu0 %v373
        %375 = vmatprep.subr.mxu0 0.0
        %v376 = vand.u32 %v280, 4294901760
        %377 = vmatpush1.msra.mxu0 %v376
        %378 = vmatprep.subr.mxu0 0.0
        %v379 = vand.u32 %v281, 4294901760
        %380 = vmatpush1.msra.mxu0 %v379
        %381 = vmatprep.subr.mxu0 0.0
        %v382 = vand.u32 %v282, 4294901760
        %383 = vmatpush1.msra.mxu0 %v382
        %384 = vmatprep.subr.mxu0 0.0
        %v385 = vand.u32 %v283, 4294901760
        %386 = vmatpush1.msra.mxu0 %v385
        %387 = vmatprep.subr.mxu0 0.0
        %v388 = vand.u32 %v284, 4294901760
        %389 = vmatpush1.msra.mxu0 %v388
        %390 = vmatprep.subr.mxu0 0.0
        %v391 = vand.u32 %v285, 4294901760
        %392 = vmatpush1.msra.mxu0 %v391
        %393 = vmatprep.subr.mxu0 0.0
        %v394 = vand.u32 %v286, 4294901760
        %395 = vmatpush1.msra.mxu0 %v394
        %396 = vmatprep.subr.mxu0 0.0
        %v397 = vand.u32 %v287, 4294901760
        %398 = vmatpush1.msra.mxu0 %v397
        %399 = vmatprep.subr.mxu0 0.0
        %v400 = vand.u32 %v288, 4294901760
        %401 = vmatpush1.msra.mxu0 %v400
        %402 = vmatprep.subr.mxu0 0.0
        %v403 = vand.u32 %v289, 4294901760
        %404 = vmatpush1.msra.mxu0 %v403
        %405 = vmatprep.subr.mxu0 0.0
        %v406 = vand.u32 %v290, 4294901760
        %407 = vmatpush1.msra.mxu0 %v406
        %408 = vmatprep.subr.mxu0 0.0
        %v409 = vand.u32 %v291, 4294901760
        %410 = vmatpush1.msra.mxu0 %v409
        %v411 = vand.u32 %v256, 4294901760
        %v412 = vsub.f32 %v256, %v411
        %v413 = vand.u32 %v412, 4294901760
        %v414 = vsub.f32 %v412, %v413
        %v415 = vand.u32 %v414, 4294901760
        %416 = vmatprep.mubr.f32.mxu0 %v415
        %v417 = vand.u32 %v254, 4294901760
        %v418 = vsub.f32 %v254, %v417
        %v419 = vand.u32 %v418, 4294901760
        %v420 = vsub.f32 %v418, %v419
        %v421 = vand.u32 %v420, 4294901760
        %422 = vmatmul.mubr.f32.gmra.mrb[0].mxu0 %v421
        %v423 = vpop.f32.mrb[0].mxu0
        %v424 = vadd.f32 %v313, %v423
        %v425 = vpop.f32.mrb[0].mxu0
        %v426 = vand.u32 %v257, 4294901760
        %v427 = vsub.f32 %v257, %v426
        %v428 = vand.u32 %v427, 4294901760
        %v429 = vsub.f32 %v427, %v428
        %v430 = vand.u32 %v429, 4294901760
        %431 = vmatprep.mubr.f32.mxu0 %v430
        %v432 = vand.u32 %v255, 4294901760
        %v433 = vsub.f32 %v255, %v432
        %v434 = vand.u32 %v433, 4294901760
        %v435 = vsub.f32 %v433, %v434
        %v436 = vand.u32 %v435, 4294901760
        %437 = vmatmul.mubr.f32.gmra.mrb[0].mxu0 %v436
        %v438 = vpop.f32.mrb[0].mxu0
        %v439 = vadd.f32 %v313, %v438
        %v440 = vpop.f32.mrb[0].mxu0
        %441 = vdwg.mxu0
        %442 = vmatprep.subr.mxu0 0.0
        %v443 = vand.u32 %v260, 4294901760
        %v444 = vsub.f32 %v260, %v443
        %v445 = vand.u32 %v444, 4294901760
        %v446 = vsub.f32 %v444, %v445
        %v447 = vand.u32 %v446, 4294901760
        %448 = vmatpush1.msra.mxu0 %v447
        %449 = vmatprep.subr.mxu0 0.0
        %v450 = vand.u32 %v261, 4294901760
        %v451 = vsub.f32 %v261, %v450
        %v452 = vand.u32 %v451, 4294901760
        %v453 = vsub.f32 %v451, %v452
        %v454 = vand.u32 %v453, 4294901760
        %455 = vmatpush1.msra.mxu0 %v454
        %456 = vmatprep.subr.mxu0 0.0
        %v457 = vand.u32 %v262, 4294901760
        %v458 = vsub.f32 %v262, %v457
        %v459 = vand.u32 %v458, 4294901760
        %v460 = vsub.f32 %v458, %v459
        %v461 = vand.u32 %v460, 4294901760
        %462 = vmatpush1.msra.mxu0 %v461
        %463 = vmatprep.subr.mxu0 0.0
        %v464 = vand.u32 %v263, 4294901760
        %v465 = vsub.f32 %v263, %v464
        %v466 = vand.u32 %v465, 4294901760
        %v467 = vsub.f32 %v465, %v466
        %v468 = vand.u32 %v467, 4294901760
        %469 = vmatpush1.msra.mxu0 %v468
        %470 = vmatprep.subr.mxu0 0.0
        %v471 = vand.u32 %v264, 4294901760
        %v472 = vsub.f32 %v264, %v471
        %v473 = vand.u32 %v472, 4294901760
        %v474 = vsub.f32 %v472, %v473
        %v475 = vand.u32 %v474, 4294901760
        %476 = vmatpush1.msra.mxu0 %v475
        %477 = vmatprep.subr.mxu0 0.0
        %v478 = vand.u32 %v265, 4294901760
        %v479 = vsub.f32 %v265, %v478
        %v480 = vand.u32 %v479, 4294901760
        %v481 = vsub.f32 %v479, %v480
        %v482 = vand.u32 %v481, 4294901760
        %483 = vmatpush1.msra.mxu0 %v482
        %484 = vmatprep.subr.mxu0 0.0
        %v485 = vand.u32 %v266, 4294901760
        %v486 = vsub.f32 %v266, %v485
        %v487 = vand.u32 %v486, 4294901760
        %v488 = vsub.f32 %v486, %v487
        %v489 = vand.u32 %v488, 4294901760
        %490 = vmatpush1.msra.mxu0 %v489
        %491 = vmatprep.subr.mxu0 0.0
        %v492 = vand.u32 %v267, 4294901760
        %v493 = vsub.f32 %v267, %v492
        %v494 = vand.u32 %v493, 4294901760
        %v495 = vsub.f32 %v493, %v494
        %v496 = vand.u32 %v495, 4294901760
        %497 = vmatpush1.msra.mxu0 %v496
        %498 = vmatprep.subr.mxu0 0.0
        %v499 = vand.u32 %v268, 4294901760
        %v500 = vsub.f32 %v268, %v499
        %v501 = vand.u32 %v500, 4294901760
        %v502 = vsub.f32 %v500, %v501
        %v503 = vand.u32 %v502, 4294901760
        %504 = vmatpush1.msra.mxu0 %v503
        %505 = vmatprep.subr.mxu0 0.0
        %v506 = vand.u32 %v269, 4294901760
        %v507 = vsub.f32 %v269, %v506
        %v508 = vand.u32 %v507, 4294901760
        %v509 = vsub.f32 %v507, %v508
        %v510 = vand.u32 %v509, 4294901760
        %511 = vmatpush1.msra.mxu0 %v510
        %512 = vmatprep.subr.mxu0 0.0
        %v513 = vand.u32 %v270, 4294901760
        %v514 = vsub.f32 %v270, %v513
        %v515 = vand.u32 %v514, 4294901760
        %v516 = vsub.f32 %v514, %v515
        %v517 = vand.u32 %v516, 4294901760
        %518 = vmatpush1.msra.mxu0 %v517
        %519 = vmatprep.subr.mxu0 0.0
        %v520 = vand.u32 %v271, 4294901760
        %v521 = vsub.f32 %v271, %v520
        %v522 = vand.u32 %v521, 4294901760
        %v523 = vsub.f32 %v521, %v522
        %v524 = vand.u32 %v523, 4294901760
        %525 = vmatpush1.msra.mxu0 %v524
        %526 = vmatprep.subr.mxu0 0.0
        %v527 = vand.u32 %v272, 4294901760
        %v528 = vsub.f32 %v272, %v527
        %v529 = vand.u32 %v528, 4294901760
        %v530 = vsub.f32 %v528, %v529
        %v531 = vand.u32 %v530, 4294901760
        %532 = vmatpush1.msra.mxu0 %v531
        %533 = vmatprep.subr.mxu0 0.0
        %v534 = vand.u32 %v273, 4294901760
        %v535 = vsub.f32 %v273, %v534
        %v536 = vand.u32 %v535, 4294901760
        %v537 = vsub.f32 %v535, %v536
        %v538 = vand.u32 %v537, 4294901760
        %539 = vmatpush1.msra.mxu0 %v538
        %540 = vmatprep.subr.mxu0 0.0
        %v541 = vand.u32 %v274, 4294901760
        %v542 = vsub.f32 %v274, %v541
        %v543 = vand.u32 %v542, 4294901760
        %v544 = vsub.f32 %v542, %v543
        %v545 = vand.u32 %v544, 4294901760
        %546 = vmatpush1.msra.mxu0 %v545
        %547 = vmatprep.subr.mxu0 0.0
        %v548 = vand.u32 %v275, 4294901760
        %v549 = vsub.f32 %v275, %v548
        %v550 = vand.u32 %v549, 4294901760
        %v551 = vsub.f32 %v549, %v550
        %v552 = vand.u32 %v551, 4294901760
        %553 = vmatpush1.msra.mxu0 %v552
        %554 = vmatprep.subr.mxu0 0.0
        %v555 = vand.u32 %v276, 4294901760
        %v556 = vsub.f32 %v276, %v555
        %v557 = vand.u32 %v556, 4294901760
        %v558 = vsub.f32 %v556, %v557
        %v559 = vand.u32 %v558, 4294901760
        %560 = vmatpush1.msra.mxu0 %v559
        %561 = vmatprep.subr.mxu0 0.0
        %v562 = vand.u32 %v277, 4294901760
        %v563 = vsub.f32 %v277, %v562
        %v564 = vand.u32 %v563, 4294901760
        %v565 = vsub.f32 %v563, %v564
        %v566 = vand.u32 %v565, 4294901760
        %567 = vmatpush1.msra.mxu0 %v566
        %568 = vmatprep.subr.mxu0 0.0
        %v569 = vand.u32 %v278, 4294901760
        %v570 = vsub.f32 %v278, %v569
        %v571 = vand.u32 %v570, 4294901760
        %v572 = vsub.f32 %v570, %v571
        %v573 = vand.u32 %v572, 4294901760
        %574 = vmatpush1.msra.mxu0 %v573
        %575 = vmatprep.subr.mxu0 0.0
        %v576 = vand.u32 %v279, 4294901760
        %v577 = vsub.f32 %v279, %v576
        %v578 = vand.u32 %v577, 4294901760
        %v579 = vsub.f32 %v577, %v578
        %v580 = vand.u32 %v579, 4294901760
        %581 = vmatpush1.msra.mxu0 %v580
        %582 = vmatprep.subr.mxu0 0.0
        %v583 = vand.u32 %v280, 4294901760
        %v584 = vsub.f32 %v280, %v583
        %v585 = vand.u32 %v584, 4294901760
        %v586 = vsub.f32 %v584, %v585
        %v587 = vand.u32 %v586, 4294901760
        %588 = vmatpush1.msra.mxu0 %v587
        %589 = vmatprep.subr.mxu0 0.0
        %v590 = vand.u32 %v281, 4294901760
        %v591 = vsub.f32 %v281, %v590
        %v592 = vand.u32 %v591, 4294901760
        %v593 = vsub.f32 %v591, %v592
        %v594 = vand.u32 %v593, 4294901760
        %595 = vmatpush1.msra.mxu0 %v594
        %596 = vmatprep.subr.mxu0 0.0
        %v597 = vand.u32 %v282, 4294901760
        %v598 = vsub.f32 %v282, %v597
        %v599 = vand.u32 %v598, 4294901760
        %v600 = vsub.f32 %v598, %v599
        %v601 = vand.u32 %v600, 4294901760
        %602 = vmatpush1.msra.mxu0 %v601
        %603 = vmatprep.subr.mxu0 0.0
        %v604 = vand.u32 %v283, 4294901760
        %v605 = vsub.f32 %v283, %v604
        %v606 = vand.u32 %v605, 4294901760
        %v607 = vsub.f32 %v605, %v606
        %v608 = vand.u32 %v607, 4294901760
        %609 = vmatpush1.msra.mxu0 %v608
        %610 = vmatprep.subr.mxu0 0.0
        %v611 = vand.u32 %v284, 4294901760
        %v612 = vsub.f32 %v284, %v611
        %v613 = vand.u32 %v612, 4294901760
        %v614 = vsub.f32 %v612, %v613
        %v615 = vand.u32 %v614, 4294901760
        %616 = vmatpush1.msra.mxu0 %v615
        %617 = vmatprep.subr.mxu0 0.0
        %v618 = vand.u32 %v285, 4294901760
        %v619 = vsub.f32 %v285, %v618
        %v620 = vand.u32 %v619, 4294901760
        %v621 = vsub.f32 %v619, %v620
        %v622 = vand.u32 %v621, 4294901760
        %623 = vmatpush1.msra.mxu0 %v622
        %624 = vmatprep.subr.mxu0 0.0
        %v625 = vand.u32 %v286, 4294901760
        %v626 = vsub.f32 %v286, %v625
        %v627 = vand.u32 %v626, 4294901760
        %v628 = vsub.f32 %v626, %v627
        %v629 = vand.u32 %v628, 4294901760
        %630 = vmatpush1.msra.mxu0 %v629
        %631 = vmatprep.subr.mxu0 0.0
        %v632 = vand.u32 %v287, 4294901760
        %v633 = vsub.f32 %v287, %v632
        %v634 = vand.u32 %v633, 4294901760
        %v635 = vsub.f32 %v633, %v634
        %v636 = vand.u32 %v635, 4294901760
        %637 = vmatpush1.msra.mxu0 %v636
        %638 = vmatprep.subr.mxu0 0.0
        %v639 = vand.u32 %v288, 4294901760
        %v640 = vsub.f32 %v288, %v639
        %v641 = vand.u32 %v640, 4294901760
        %v642 = vsub.f32 %v640, %v641
        %v643 = vand.u32 %v642, 4294901760
        %644 = vmatpush1.msra.mxu0 %v643
        %645 = vmatprep.subr.mxu0 0.0
        %v646 = vand.u32 %v289, 4294901760
        %v647 = vsub.f32 %v289, %v646
        %v648 = vand.u32 %v647, 4294901760
        %v649 = vsub.f32 %v647, %v648
        %v650 = vand.u32 %v649, 4294901760
        %651 = vmatpush1.msra.mxu0 %v650
        %652 = vmatprep.subr.mxu0 0.0
        %v653 = vand.u32 %v290, 4294901760
        %v654 = vsub.f32 %v290, %v653
        %v655 = vand.u32 %v654, 4294901760
        %v656 = vsub.f32 %v654, %v655
        %v657 = vand.u32 %v656, 4294901760
        %658 = vmatpush1.msra.mxu0 %v657
        %659 = vmatprep.subr.mxu0 0.0
        %v660 = vand.u32 %v291, 4294901760
        %v661 = vsub.f32 %v291, %v660
        %v662 = vand.u32 %v661, 4294901760
        %v663 = vsub.f32 %v661, %v662
        %v664 = vand.u32 %v663, 4294901760
        %665 = vmatpush1.msra.mxu0 %v664
        %v666 = vand.u32 %v256, 4294901760
        %667 = vmatprep.mubr.f32.mxu0 %v666
        %v668 = vand.u32 %v254, 4294901760
        %669 = vmatmul.mubr.f32.gmra.mrb[0].mxu0 %v668
        %v670 = vpop.f32.mrb[0].mxu0
        %v671 = vadd.f32 %v424, %v670
        %v672 = vpop.f32.mrb[0].mxu0
        %v673 = vand.u32 %v257, 4294901760
        %674 = vmatprep.mubr.f32.mxu0 %v673
        %v675 = vand.u32 %v255, 4294901760
        %676 = vmatmul.mubr.f32.gmra.mrb[0].mxu0 %v675
        %v677 = vpop.f32.mrb[0].mxu0
        %v678 = vadd.f32 %v439, %v677
        %v679 = vpop.f32.mrb[0].mxu0
        %680 = vdwg.mxu0
        %681 = vmatprep.subr.mxu0 0.0
        %v682 = vand.u32 %v260, 4294901760
        %v683 = vsub.f32 %v260, %v682
        %684 = vmatpush1.msra.mxu0 %v683
        %685 = vmatprep.subr.mxu0 0.0
        %v686 = vand.u32 %v261, 4294901760
        %v687 = vsub.f32 %v261, %v686
        %688 = vmatpush1.msra.mxu0 %v687
        %689 = vmatprep.subr.mxu0 0.0
        %v690 = vand.u32 %v262, 4294901760
        %v691 = vsub.f32 %v262, %v690
        %692 = vmatpush1.msra.mxu0 %v691
        %693 = vmatprep.subr.mxu0 0.0
        %v694 = vand.u32 %v263, 4294901760
        %v695 = vsub.f32 %v263, %v694
        %696 = vmatpush1.msra.mxu0 %v695
        %697 = vmatprep.subr.mxu0 0.0
        %v698 = vand.u32 %v264, 4294901760
        %v699 = vsub.f32 %v264, %v698
        %700 = vmatpush1.msra.mxu0 %v699
        %701 = vmatprep.subr.mxu0 0.0
        %v702 = vand.u32 %v265, 4294901760
        %v703 = vsub.f32 %v265, %v702
        %704 = vmatpush1.msra.mxu0 %v703
        %705 = vmatprep.subr.mxu0 0.0
        %v706 = vand.u32 %v266, 4294901760
        %v707 = vsub.f32 %v266, %v706
        %708 = vmatpush1.msra.mxu0 %v707
        %709 = vmatprep.subr.mxu0 0.0
        %v710 = vand.u32 %v267, 4294901760
        %v711 = vsub.f32 %v267, %v710
        %712 = vmatpush1.msra.mxu0 %v711
        %713 = vmatprep.subr.mxu0 0.0
        %v714 = vand.u32 %v268, 4294901760
        %v715 = vsub.f32 %v268, %v714
        %716 = vmatpush1.msra.mxu0 %v715
        %717 = vmatprep.subr.mxu0 0.0
        %v718 = vand.u32 %v269, 4294901760
        %v719 = vsub.f32 %v269, %v718
        %720 = vmatpush1.msra.mxu0 %v719
        %721 = vmatprep.subr.mxu0 0.0
        %v722 = vand.u32 %v270, 4294901760
        %v723 = vsub.f32 %v270, %v722
        %724 = vmatpush1.msra.mxu0 %v723
        %725 = vmatprep.subr.mxu0 0.0
        %v726 = vand.u32 %v271, 4294901760
        %v727 = vsub.f32 %v271, %v726
        %728 = vmatpush1.msra.mxu0 %v727
        %729 = vmatprep.subr.mxu0 0.0
        %v730 = vand.u32 %v272, 4294901760
        %v731 = vsub.f32 %v272, %v730
        %732 = vmatpush1.msra.mxu0 %v731
        %733 = vmatprep.subr.mxu0 0.0
        %v734 = vand.u32 %v273, 4294901760
        %v735 = vsub.f32 %v273, %v734
        %736 = vmatpush1.msra.mxu0 %v735
        %737 = vmatprep.subr.mxu0 0.0
        %v738 = vand.u32 %v274, 4294901760
        %v739 = vsub.f32 %v274, %v738
        %740 = vmatpush1.msra.mxu0 %v739
        %741 = vmatprep.subr.mxu0 0.0
        %v742 = vand.u32 %v275, 4294901760
        %v743 = vsub.f32 %v275, %v742
        %744 = vmatpush1.msra.mxu0 %v743
        %745 = vmatprep.subr.mxu0 0.0
        %v746 = vand.u32 %v276, 4294901760
        %v747 = vsub.f32 %v276, %v746
        %748 = vmatpush1.msra.mxu0 %v747
        %749 = vmatprep.subr.mxu0 0.0
        %v750 = vand.u32 %v277, 4294901760
        %v751 = vsub.f32 %v277, %v750
        %752 = vmatpush1.msra.mxu0 %v751
        %753 = vmatprep.subr.mxu0 0.0
        %v754 = vand.u32 %v278, 4294901760
        %v755 = vsub.f32 %v278, %v754
        %756 = vmatpush1.msra.mxu0 %v755
        %757 = vmatprep.subr.mxu0 0.0
        %v758 = vand.u32 %v279, 4294901760
        %v759 = vsub.f32 %v279, %v758
        %760 = vmatpush1.msra.mxu0 %v759
        %761 = vmatprep.subr.mxu0 0.0
        %v762 = vand.u32 %v280, 4294901760
        %v763 = vsub.f32 %v280, %v762
        %764 = vmatpush1.msra.mxu0 %v763
        %765 = vmatprep.subr.mxu0 0.0
        %v766 = vand.u32 %v281, 4294901760
        %v767 = vsub.f32 %v281, %v766
        %768 = vmatpush1.msra.mxu0 %v767
        %769 = vmatprep.subr.mxu0 0.0
        %v770 = vand.u32 %v282, 4294901760
        %v771 = vsub.f32 %v282, %v770
        %772 = vmatpush1.msra.mxu0 %v771
        %773 = vmatprep.subr.mxu0 0.0
        %v774 = vand.u32 %v283, 4294901760
        %v775 = vsub.f32 %v283, %v774
        %776 = vmatpush1.msra.mxu0 %v775
        %777 = vmatprep.subr.mxu0 0.0
        %v778 = vand.u32 %v284, 4294901760
        %v779 = vsub.f32 %v284, %v778
        %780 = vmatpush1.msra.mxu0 %v779
        %781 = vmatprep.subr.mxu0 0.0
        %v782 = vand.u32 %v285, 4294901760
        %v783 = vsub.f32 %v285, %v782
        %784 = vmatpush1.msra.mxu0 %v783
        %785 = vmatprep.subr.mxu0 0.0
        %v786 = vand.u32 %v286, 4294901760
        %v787 = vsub.f32 %v286, %v786
        %788 = vmatpush1.msra.mxu0 %v787
        %789 = vmatprep.subr.mxu0 0.0
        %v790 = vand.u32 %v287, 4294901760
        %v791 = vsub.f32 %v287, %v790
        %792 = vmatpush1.msra.mxu0 %v791
        %793 = vmatprep.subr.mxu0 0.0
        %v794 = vand.u32 %v288, 4294901760
        %v795 = vsub.f32 %v288, %v794
        %796 = vmatpush1.msra.mxu0 %v795
        %797 = vmatprep.subr.mxu0 0.0
        %v798 = vand.u32 %v289, 4294901760
        %v799 = vsub.f32 %v289, %v798
        %800 = vmatpush1.msra.mxu0 %v799
        %801 = vmatprep.subr.mxu0 0.0
        %v802 = vand.u32 %v290, 4294901760
        %v803 = vsub.f32 %v290, %v802
        %804 = vmatpush1.msra.mxu0 %v803
        %805 = vmatprep.subr.mxu0 0.0
        %v806 = vand.u32 %v291, 4294901760
        %v807 = vsub.f32 %v291, %v806
        %808 = vmatpush1.msra.mxu0 %v807
        %v809 = vand.u32 %v256, 4294901760
        %v810 = vsub.f32 %v256, %v809
        %811 = vmatprep.mubr.f32.mxu0 %v810
        %v812 = vand.u32 %v254, 4294901760
        %v813 = vsub.f32 %v254, %v812
        %814 = vmatmul.mubr.f32.gmra.mrb[0].mxu0 %v813
        %v815 = vpop.f32.mrb[0].mxu0
        %v816 = vadd.f32 %v671, %v815
        %v817 = vpop.f32.mrb[0].mxu0
        %v818 = vand.u32 %v257, 4294901760
        %v819 = vsub.f32 %v257, %v818
        %820 = vmatprep.mubr.f32.mxu0 %v819
        %v821 = vand.u32 %v255, 4294901760
        %v822 = vsub.f32 %v255, %v821
        %823 = vmatmul.mubr.f32.gmra.mrb[0].mxu0 %v822
        %v824 = vpop.f32.mrb[0].mxu0
        %v825 = vadd.f32 %v678, %v824
        %v826 = vpop.f32.mrb[0].mxu0
        %827 = vdwg.mxu0
        %828 = vmatprep.subr.mxu0 0.0
        %v829 = vand.u32 %v260, 4294901760
        %830 = vmatpush1.msra.mxu0 %v829
        %831 = vmatprep.subr.mxu0 0.0
        %v832 = vand.u32 %v261, 4294901760
        %833 = vmatpush1.msra.mxu0 %v832
        %834 = vmatprep.subr.mxu0 0.0
        %v835 = vand.u32 %v262, 4294901760
        %836 = vmatpush1.msra.mxu0 %v835
        %837 = vmatprep.subr.mxu0 0.0
        %v838 = vand.u32 %v263, 4294901760
        %839 = vmatpush1.msra.mxu0 %v838
        %840 = vmatprep.subr.mxu0 0.0
        %v841 = vand.u32 %v264, 4294901760
        %842 = vmatpush1.msra.mxu0 %v841
        %843 = vmatprep.subr.mxu0 0.0
        %v844 = vand.u32 %v265, 4294901760
        %845 = vmatpush1.msra.mxu0 %v844
        %846 = vmatprep.subr.mxu0 0.0
        %v847 = vand.u32 %v266, 4294901760
        %848 = vmatpush1.msra.mxu0 %v847
        %849 = vmatprep.subr.mxu0 0.0
        %v850 = vand.u32 %v267, 4294901760
        %851 = vmatpush1.msra.mxu0 %v850
        %852 = vmatprep.subr.mxu0 0.0
        %v853 = vand.u32 %v268, 4294901760
        %854 = vmatpush1.msra.mxu0 %v853
        %855 = vmatprep.subr.mxu0 0.0
        %v856 = vand.u32 %v269, 4294901760
        %857 = vmatpush1.msra.mxu0 %v856
        %858 = vmatprep.subr.mxu0 0.0
        %v859 = vand.u32 %v270, 4294901760
        %860 = vmatpush1.msra.mxu0 %v859
        %861 = vmatprep.subr.mxu0 0.0
        %v862 = vand.u32 %v271, 4294901760
        %863 = vmatpush1.msra.mxu0 %v862
        %864 = vmatprep.subr.mxu0 0.0
        %v865 = vand.u32 %v272, 4294901760
        %866 = vmatpush1.msra.mxu0 %v865
        %867 = vmatprep.subr.mxu0 0.0
        %v868 = vand.u32 %v273, 4294901760
        %869 = vmatpush1.msra.mxu0 %v868
        %870 = vmatprep.subr.mxu0 0.0
        %v871 = vand.u32 %v274, 4294901760
        %872 = vmatpush1.msra.mxu0 %v871
        %873 = vmatprep.subr.mxu0 0.0
        %v874 = vand.u32 %v275, 4294901760
        %875 = vmatpush1.msra.mxu0 %v874
        %876 = vmatprep.subr.mxu0 0.0
        %v877 = vand.u32 %v276, 4294901760
        %878 = vmatpush1.msra.mxu0 %v877
        %879 = vmatprep.subr.mxu0 0.0
        %v880 = vand.u32 %v277, 4294901760
        %881 = vmatpush1.msra.mxu0 %v880
        %882 = vmatprep.subr.mxu0 0.0
        %v883 = vand.u32 %v278, 4294901760
        %884 = vmatpush1.msra.mxu0 %v883
        %885 = vmatprep.subr.mxu0 0.0
        %v886 = vand.u32 %v279, 4294901760
        %887 = vmatpush1.msra.mxu0 %v886
        %888 = vmatprep.subr.mxu0 0.0
        %v889 = vand.u32 %v280, 4294901760
        %890 = vmatpush1.msra.mxu0 %v889
        %891 = vmatprep.subr.mxu0 0.0
        %v892 = vand.u32 %v281, 4294901760
        %893 = vmatpush1.msra.mxu0 %v892
        %894 = vmatprep.subr.mxu0 0.0
        %v895 = vand.u32 %v282, 4294901760
        %896 = vmatpush1.msra.mxu0 %v895
        %897 = vmatprep.subr.mxu0 0.0
        %v898 = vand.u32 %v283, 4294901760
        %899 = vmatpush1.msra.mxu0 %v898
        %900 = vmatprep.subr.mxu0 0.0
        %v901 = vand.u32 %v284, 4294901760
        %902 = vmatpush1.msra.mxu0 %v901
        %903 = vmatprep.subr.mxu0 0.0
        %v904 = vand.u32 %v285, 4294901760
        %905 = vmatpush1.msra.mxu0 %v904
        %906 = vmatprep.subr.mxu0 0.0
        %v907 = vand.u32 %v286, 4294901760
        %908 = vmatpush1.msra.mxu0 %v907
        %909 = vmatprep.subr.mxu0 0.0
        %v910 = vand.u32 %v287, 4294901760
        %911 = vmatpush1.msra.mxu0 %v910
        %912 = vmatprep.subr.mxu0 0.0
        %v913 = vand.u32 %v288, 4294901760
        %914 = vmatpush1.msra.mxu0 %v913
        %915 = vmatprep.subr.mxu0 0.0
        %v916 = vand.u32 %v289, 4294901760
        %917 = vmatpush1.msra.mxu0 %v916
        %918 = vmatprep.subr.mxu0 0.0
        %v919 = vand.u32 %v290, 4294901760
        %920 = vmatpush1.msra.mxu0 %v919
        %921 = vmatprep.subr.mxu0 0.0
        %v922 = vand.u32 %v291, 4294901760
        %923 = vmatpush1.msra.mxu0 %v922
        %v924 = vand.u32 %v256, 4294901760
        %v925 = vsub.f32 %v256, %v924
        %v926 = vand.u32 %v925, 4294901760
        %927 = vmatprep.mubr.f32.mxu0 %v926
        %v928 = vand.u32 %v254, 4294901760
        %v929 = vsub.f32 %v254, %v928
        %v930 = vand.u32 %v929, 4294901760
        %931 = vmatmul.mubr.f32.gmra.mrb[0].mxu0 %v930
        %v932 = vpop.f32.mrb[0].mxu0
        %v933 = vadd.f32 %v816, %v932
        %v934 = vpop.f32.mrb[0].mxu0
        %v935 = vand.u32 %v257, 4294901760
        %v936 = vsub.f32 %v257, %v935
        %v937 = vand.u32 %v936, 4294901760
        %938 = vmatprep.mubr.f32.mxu0 %v937
        %v939 = vand.u32 %v255, 4294901760
        %v940 = vsub.f32 %v255, %v939
        %v941 = vand.u32 %v940, 4294901760
        %942 = vmatmul.mubr.f32.gmra.mrb[0].mxu0 %v941
        %v943 = vpop.f32.mrb[0].mxu0
        %v944 = vadd.f32 %v825, %v943
        %v945 = vpop.f32.mrb[0].mxu0
        %946 = vdwg.mxu0
        %947 = vmatprep.subr.mxu0 0.0
        %v948 = vand.u32 %v260, 4294901760
        %v949 = vsub.f32 %v260, %v948
        %v950 = vand.u32 %v949, 4294901760
        %951 = vmatpush1.msra.mxu0 %v950
        %952 = vmatprep.subr.mxu0 0.0
        %v953 = vand.u32 %v261, 4294901760
        %v954 = vsub.f32 %v261, %v953
        %v955 = vand.u32 %v954, 4294901760
        %956 = vmatpush1.msra.mxu0 %v955
        %957 = vmatprep.subr.mxu0 0.0
        %v958 = vand.u32 %v262, 4294901760
        %v959 = vsub.f32 %v262, %v958
        %v960 = vand.u32 %v959, 4294901760
        %961 = vmatpush1.msra.mxu0 %v960
        %962 = vmatprep.subr.mxu0 0.0
        %v963 = vand.u32 %v263, 4294901760
        %v964 = vsub.f32 %v263, %v963
        %v965 = vand.u32 %v964, 4294901760
        %966 = vmatpush1.msra.mxu0 %v965
        %967 = vmatprep.subr.mxu0 0.0
        %v968 = vand.u32 %v264, 4294901760
        %v969 = vsub.f32 %v264, %v968
        %v970 = vand.u32 %v969, 4294901760
        %971 = vmatpush1.msra.mxu0 %v970
        %972 = vmatprep.subr.mxu0 0.0
        %v973 = vand.u32 %v265, 4294901760
        %v974 = vsub.f32 %v265, %v973
        %v975 = vand.u32 %v974, 4294901760
        %976 = vmatpush1.msra.mxu0 %v975
        %977 = vmatprep.subr.mxu0 0.0
        %v978 = vand.u32 %v266, 4294901760
        %v979 = vsub.f32 %v266, %v978
        %v980 = vand.u32 %v979, 4294901760
        %981 = vmatpush1.msra.mxu0 %v980
        %982 = vmatprep.subr.mxu0 0.0
        %v983 = vand.u32 %v267, 4294901760
        %v984 = vsub.f32 %v267, %v983
        %v985 = vand.u32 %v984, 4294901760
        %986 = vmatpush1.msra.mxu0 %v985
        %987 = vmatprep.subr.mxu0 0.0
        %v988 = vand.u32 %v268, 4294901760
        %v989 = vsub.f32 %v268, %v988
        %v990 = vand.u32 %v989, 4294901760
        %991 = vmatpush1.msra.mxu0 %v990
        %992 = vmatprep.subr.mxu0 0.0
        %v993 = vand.u32 %v269, 4294901760
        %v994 = vsub.f32 %v269, %v993
        %v995 = vand.u32 %v994, 4294901760
        %996 = vmatpush1.msra.mxu0 %v995
        %997 = vmatprep.subr.mxu0 0.0
        %v998 = vand.u32 %v270, 4294901760
        %v999 = vsub.f32 %v270, %v998
        %v1000 = vand.u32 %v999, 4294901760
        %1001 = vmatpush1.msra.mxu0 %v1000
        %1002 = vmatprep.subr.mxu0 0.0
        %v1003 = vand.u32 %v271, 4294901760
        %v1004 = vsub.f32 %v271, %v1003
        %v1005 = vand.u32 %v1004, 4294901760
        %1006 = vmatpush1.msra.mxu0 %v1005
        %1007 = vmatprep.subr.mxu0 0.0
        %v1008 = vand.u32 %v272, 4294901760
        %v1009 = vsub.f32 %v272, %v1008
        %v1010 = vand.u32 %v1009, 4294901760
        %1011 = vmatpush1.msra.mxu0 %v1010
        %1012 = vmatprep.subr.mxu0 0.0
        %v1013 = vand.u32 %v273, 4294901760
        %v1014 = vsub.f32 %v273, %v1013
        %v1015 = vand.u32 %v1014, 4294901760
        %1016 = vmatpush1.msra.mxu0 %v1015
        %1017 = vmatprep.subr.mxu0 0.0
        %v1018 = vand.u32 %v274, 4294901760
        %v1019 = vsub.f32 %v274, %v1018
        %v1020 = vand.u32 %v1019, 4294901760
        %1021 = vmatpush1.msra.mxu0 %v1020
        %1022 = vmatprep.subr.mxu0 0.0
        %v1023 = vand.u32 %v275, 4294901760
        %v1024 = vsub.f32 %v275, %v1023
        %v1025 = vand.u32 %v1024, 4294901760
        %1026 = vmatpush1.msra.mxu0 %v1025
        %1027 = vmatprep.subr.mxu0 0.0
        %v1028 = vand.u32 %v276, 4294901760
        %v1029 = vsub.f32 %v276, %v1028
        %v1030 = vand.u32 %v1029, 4294901760
        %1031 = vmatpush1.msra.mxu0 %v1030
        %1032 = vmatprep.subr.mxu0 0.0
        %v1033 = vand.u32 %v277, 4294901760
        %v1034 = vsub.f32 %v277, %v1033
        %v1035 = vand.u32 %v1034, 4294901760
        %1036 = vmatpush1.msra.mxu0 %v1035
        %1037 = vmatprep.subr.mxu0 0.0
        %v1038 = vand.u32 %v278, 4294901760
        %v1039 = vsub.f32 %v278, %v1038
        %v1040 = vand.u32 %v1039, 4294901760
        %1041 = vmatpush1.msra.mxu0 %v1040
        %1042 = vmatprep.subr.mxu0 0.0
        %v1043 = vand.u32 %v279, 4294901760
        %v1044 = vsub.f32 %v279, %v1043
        %v1045 = vand.u32 %v1044, 4294901760
        %1046 = vmatpush1.msra.mxu0 %v1045
        %1047 = vmatprep.subr.mxu0 0.0
        %v1048 = vand.u32 %v280, 4294901760
        %v1049 = vsub.f32 %v280, %v1048
        %v1050 = vand.u32 %v1049, 4294901760
        %1051 = vmatpush1.msra.mxu0 %v1050
        %1052 = vmatprep.subr.mxu0 0.0
        %v1053 = vand.u32 %v281, 4294901760
        %v1054 = vsub.f32 %v281, %v1053
        %v1055 = vand.u32 %v1054, 4294901760
        %1056 = vmatpush1.msra.mxu0 %v1055
        %1057 = vmatprep.subr.mxu0 0.0
        %v1058 = vand.u32 %v282, 4294901760
        %v1059 = vsub.f32 %v282, %v1058
        %v1060 = vand.u32 %v1059, 4294901760
        %1061 = vmatpush1.msra.mxu0 %v1060
        %1062 = vmatprep.subr.mxu0 0.0
        %v1063 = vand.u32 %v283, 4294901760
        %v1064 = vsub.f32 %v283, %v1063
        %v1065 = vand.u32 %v1064, 4294901760
        %1066 = vmatpush1.msra.mxu0 %v1065
        %1067 = vmatprep.subr.mxu0 0.0
        %v1068 = vand.u32 %v284, 4294901760
        %v1069 = vsub.f32 %v284, %v1068
        %v1070 = vand.u32 %v1069, 4294901760
        %1071 = vmatpush1.msra.mxu0 %v1070
        %1072 = vmatprep.subr.mxu0 0.0
        %v1073 = vand.u32 %v285, 4294901760
        %v1074 = vsub.f32 %v285, %v1073
        %v1075 = vand.u32 %v1074, 4294901760
        %1076 = vmatpush1.msra.mxu0 %v1075
        %1077 = vmatprep.subr.mxu0 0.0
        %v1078 = vand.u32 %v286, 4294901760
        %v1079 = vsub.f32 %v286, %v1078
        %v1080 = vand.u32 %v1079, 4294901760
        %1081 = vmatpush1.msra.mxu0 %v1080
        %1082 = vmatprep.subr.mxu0 0.0
        %v1083 = vand.u32 %v287, 4294901760
        %v1084 = vsub.f32 %v287, %v1083
        %v1085 = vand.u32 %v1084, 4294901760
        %1086 = vmatpush1.msra.mxu0 %v1085
        %1087 = vmatprep.subr.mxu0 0.0
        %v1088 = vand.u32 %v288, 4294901760
        %v1089 = vsub.f32 %v288, %v1088
        %v1090 = vand.u32 %v1089, 4294901760
        %1091 = vmatpush1.msra.mxu0 %v1090
        %1092 = vmatprep.subr.mxu0 0.0
        %v1093 = vand.u32 %v289, 4294901760
        %v1094 = vsub.f32 %v289, %v1093
        %v1095 = vand.u32 %v1094, 4294901760
        %1096 = vmatpush1.msra.mxu0 %v1095
        %1097 = vmatprep.subr.mxu0 0.0
        %v1098 = vand.u32 %v290, 4294901760
        %v1099 = vsub.f32 %v290, %v1098
        %v1100 = vand.u32 %v1099, 4294901760
        %1101 = vmatpush1.msra.mxu0 %v1100
        %1102 = vmatprep.subr.mxu0 0.0
        %v1103 = vand.u32 %v291, 4294901760
        %v1104 = vsub.f32 %v291, %v1103
        %v1105 = vand.u32 %v1104, 4294901760
        %1106 = vmatpush1.msra.mxu0 %v1105
        %v1107 = vand.u32 %v256, 4294901760
        %1108 = vmatprep.mubr.f32.mxu0 %v1107
        %v1109 = vand.u32 %v254, 4294901760
        %1110 = vmatmul.mubr.f32.gmra.mrb[0].mxu0 %v1109
        %v1111 = vpop.f32.mrb[0].mxu0
        %v1112 = vadd.f32 %v933, %v1111
        %v1113 = vpop.f32.mrb[0].mxu0
        %v1114 = vand.u32 %v257, 4294901760
        %1115 = vmatprep.mubr.f32.mxu0 %v1114
        %v1116 = vand.u32 %v255, 4294901760
        %1117 = vmatmul.mubr.f32.gmra.mrb[0].mxu0 %v1116
        %v1118 = vpop.f32.mrb[0].mxu0
        %v1119 = vadd.f32 %v944, %v1118
        %v1120 = vpop.f32.mrb[0].mxu0
        %1121 = vdwg.mxu0
        %1122 = vmatprep.subr.mxu0 0.0
        %v1123 = vand.u32 %v260, 4294901760
        %1124 = vmatpush1.msra.mxu0 %v1123
        %1125 = vmatprep.subr.mxu0 0.0
        %v1126 = vand.u32 %v261, 4294901760
        %1127 = vmatpush1.msra.mxu0 %v1126
        %1128 = vmatprep.subr.mxu0 0.0
        %v1129 = vand.u32 %v262, 4294901760
        %1130 = vmatpush1.msra.mxu0 %v1129
        %1131 = vmatprep.subr.mxu0 0.0
        %v1132 = vand.u32 %v263, 4294901760
        %1133 = vmatpush1.msra.mxu0 %v1132
        %1134 = vmatprep.subr.mxu0 0.0
        %v1135 = vand.u32 %v264, 4294901760
        %1136 = vmatpush1.msra.mxu0 %v1135
        %1137 = vmatprep.subr.mxu0 0.0
        %v1138 = vand.u32 %v265, 4294901760
        %1139 = vmatpush1.msra.mxu0 %v1138
        %1140 = vmatprep.subr.mxu0 0.0
        %v1141 = vand.u32 %v266, 4294901760
        %1142 = vmatpush1.msra.mxu0 %v1141
        %1143 = vmatprep.subr.mxu0 0.0
        %v1144 = vand.u32 %v267, 4294901760
        %1145 = vmatpush1.msra.mxu0 %v1144
        %1146 = vmatprep.subr.mxu0 0.0
        %v1147 = vand.u32 %v268, 4294901760
        %1148 = vmatpush1.msra.mxu0 %v1147
        %1149 = vmatprep.subr.mxu0 0.0
        %v1150 = vand.u32 %v269, 4294901760
        %1151 = vmatpush1.msra.mxu0 %v1150
        %1152 = vmatprep.subr.mxu0 0.0
        %v1153 = vand.u32 %v270, 4294901760
        %1154 = vmatpush1.msra.mxu0 %v1153
        %1155 = vmatprep.subr.mxu0 0.0
        %v1156 = vand.u32 %v271, 4294901760
        %1157 = vmatpush1.msra.mxu0 %v1156
        %1158 = vmatprep.subr.mxu0 0.0
        %v1159 = vand.u32 %v272, 4294901760
        %1160 = vmatpush1.msra.mxu0 %v1159
        %1161 = vmatprep.subr.mxu0 0.0
        %v1162 = vand.u32 %v273, 4294901760
        %1163 = vmatpush1.msra.mxu0 %v1162
        %1164 = vmatprep.subr.mxu0 0.0
        %v1165 = vand.u32 %v274, 4294901760
        %1166 = vmatpush1.msra.mxu0 %v1165
        %1167 = vmatprep.subr.mxu0 0.0
        %v1168 = vand.u32 %v275, 4294901760
        %1169 = vmatpush1.msra.mxu0 %v1168
        %1170 = vmatprep.subr.mxu0 0.0
        %v1171 = vand.u32 %v276, 4294901760
        %1172 = vmatpush1.msra.mxu0 %v1171
        %1173 = vmatprep.subr.mxu0 0.0
        %v1174 = vand.u32 %v277, 4294901760
        %1175 = vmatpush1.msra.mxu0 %v1174
        %1176 = vmatprep.subr.mxu0 0.0
        %v1177 = vand.u32 %v278, 4294901760
        %1178 = vmatpush1.msra.mxu0 %v1177
        %1179 = vmatprep.subr.mxu0 0.0
        %v1180 = vand.u32 %v279, 4294901760
        %1181 = vmatpush1.msra.mxu0 %v1180
        %1182 = vmatprep.subr.mxu0 0.0
        %v1183 = vand.u32 %v280, 4294901760
        %1184 = vmatpush1.msra.mxu0 %v1183
        %1185 = vmatprep.subr.mxu0 0.0
        %v1186 = vand.u32 %v281, 4294901760
        %1187 = vmatpush1.msra.mxu0 %v1186
        %1188 = vmatprep.subr.mxu0 0.0
        %v1189 = vand.u32 %v282, 4294901760
        %1190 = vmatpush1.msra.mxu0 %v1189
        %1191 = vmatprep.subr.mxu0 0.0
        %v1192 = vand.u32 %v283, 4294901760
        %1193 = vmatpush1.msra.mxu0 %v1192
        %1194 = vmatprep.subr.mxu0 0.0
        %v1195 = vand.u32 %v284, 4294901760
        %1196 = vmatpush1.msra.mxu0 %v1195
        %1197 = vmatprep.subr.mxu0 0.0
        %v1198 = vand.u32 %v285, 4294901760
        %1199 = vmatpush1.msra.mxu0 %v1198
        %1200 = vmatprep.subr.mxu0 0.0
        %v1201 = vand.u32 %v286, 4294901760
        %1202 = vmatpush1.msra.mxu0 %v1201
        %1203 = vmatprep.subr.mxu0 0.0
        %v1204 = vand.u32 %v287, 4294901760
        %1205 = vmatpush1.msra.mxu0 %v1204
        %1206 = vmatprep.subr.mxu0 0.0
        %v1207 = vand.u32 %v288, 4294901760
        %1208 = vmatpush1.msra.mxu0 %v1207
        %1209 = vmatprep.subr.mxu0 0.0
        %v1210 = vand.u32 %v289, 4294901760
        %1211 = vmatpush1.msra.mxu0 %v1210
        %1212 = vmatprep.subr.mxu0 0.0
        %v1213 = vand.u32 %v290, 4294901760
        %1214 = vmatpush1.msra.mxu0 %v1213
        %1215 = vmatprep.subr.mxu0 0.0
        %v1216 = vand.u32 %v291, 4294901760
        %1217 = vmatpush1.msra.mxu0 %v1216
        %v1218 = vand.u32 %v256, 4294901760
        %1219 = vmatprep.mubr.f32.mxu0 %v1218
        %v1220 = vand.u32 %v254, 4294901760
        %1221 = vmatmul.mubr.f32.gmra.mrb[0].mxu0 %v1220
        %v1222 = vpop.f32.mrb[0].mxu0
        %v1223 = vadd.f32 %v1112, %v1222
        %v1224 = vpop.f32.mrb[0].mxu0
        %v1225 = vand.u32 %v257, 4294901760
        %1226 = vmatprep.mubr.f32.mxu0 %v1225
        %v1227 = vand.u32 %v255, 4294901760
        %1228 = vmatmul.mubr.f32.gmra.mrb[0].mxu0 %v1227
        %v1229 = vpop.f32.mrb[0].mxu0
        %v1230 = vadd.f32 %v1119, %v1229
        %v1231 = vpop.f32.mrb[0].mxu0
        %1232 = vdwg.mxu0
        %1233 = vmatprep.subr.mxu0 0.0
        %v1234 = vand.u32 %v292, 4294901760
        %1235 = vmatpush1.msra.mxu0 %v1234
        %1236 = vmatprep.subr.mxu0 0.0
        %v1237 = vand.u32 %v293, 4294901760
        %1238 = vmatpush1.msra.mxu0 %v1237
        %1239 = vmatprep.subr.mxu0 0.0
        %v1240 = vand.u32 %v294, 4294901760
        %1241 = vmatpush1.msra.mxu0 %v1240
        %1242 = vmatprep.subr.mxu0 0.0
        %v1243 = vand.u32 %v295, 4294901760
        %1244 = vmatpush1.msra.mxu0 %v1243
        %1245 = vmatprep.subr.mxu0 0.0
        %v1246 = vand.u32 %v296, 4294901760
        %1247 = vmatpush1.msra.mxu0 %v1246
        %1248 = vmatprep.subr.mxu0 0.0
        %v1249 = vand.u32 %v297, 4294901760
        %1250 = vmatpush1.msra.mxu0 %v1249
        %1251 = vmatprep.subr.mxu0 0.0
        %v1252 = vand.u32 %v298, 4294901760
        %1253 = vmatpush1.msra.mxu0 %v1252
        %1254 = vmatprep.subr.mxu0 0.0
        %v1255 = vand.u32 %v299, 4294901760
        %1256 = vmatpush1.msra.mxu0 %v1255
        %1257 = vmatprep.subr.mxu0 0.0
        %v1258 = vand.u32 %v300, 4294901760
        %1259 = vmatpush1.msra.mxu0 %v1258
        %1260 = vmatprep.subr.mxu0 0.0
        %v1261 = vand.u32 %v301, 4294901760
        %1262 = vmatpush1.msra.mxu0 %v1261
        %1263 = vmatprep.subr.mxu0 0.0
        %v1264 = vand.u32 %v302, 4294901760
        %1265 = vmatpush1.msra.mxu0 %v1264
        %1266 = vmatprep.subr.mxu0 0.0
        %v1267 = vand.u32 %v303, 4294901760
        %1268 = vmatpush1.msra.mxu0 %v1267
        %1269 = vmatprep.subr.mxu0 0.0
        %v1270 = vand.u32 %v304, 4294901760
        %1271 = vmatpush1.msra.mxu0 %v1270
        %1272 = vmatprep.subr.mxu0 0.0
        %v1273 = vand.u32 %v305, 4294901760
        %1274 = vmatpush1.msra.mxu0 %v1273
        %1275 = vmatprep.subr.mxu0 0.0
        %v1276 = vand.u32 %v306, 4294901760
        %1277 = vmatpush1.msra.mxu0 %v1276
        %1278 = vmatprep.subr.mxu0 0.0
        %v1279 = vand.u32 %v307, 4294901760
        %1280 = vmatpush1.msra.mxu0 %v1279
        %1281 = vmatprep.subr.mxu0 0.0
        %1282 = vmatpush1.msra.mxu0 0.0
        %1283 = vmatprep.subr.mxu0 0.0
        %1284 = vmatpush1.msra.mxu0 0.0
        %1285 = vmatprep.subr.mxu0 0.0
        %1286 = vmatpush1.msra.mxu0 0.0
        %1287 = vmatprep.subr.mxu0 0.0
        %1288 = vmatpush1.msra.mxu0 0.0
        %1289 = vmatprep.subr.mxu0 0.0
        %1290 = vmatpush1.msra.mxu0 0.0
        %1291 = vmatprep.subr.mxu0 0.0
        %1292 = vmatpush1.msra.mxu0 0.0
        %1293 = vmatprep.subr.mxu0 0.0
        %1294 = vmatpush1.msra.mxu0 0.0
        %1295 = vmatprep.subr.mxu0 0.0
        %1296 = vmatpush1.msra.mxu0 0.0
        %1297 = vmatprep.subr.mxu0 0.0
        %1298 = vmatpush1.msra.mxu0 0.0
        %1299 = vmatprep.subr.mxu0 0.0
        %1300 = vmatpush1.msra.mxu0 0.0
        %1301 = vmatprep.subr.mxu0 0.0
        %1302 = vmatpush1.msra.mxu0 0.0
        %1303 = vmatprep.subr.mxu0 0.0
        %1304 = vmatpush1.msra.mxu0 0.0
        %1305 = vmatprep.subr.mxu0 0.0
        %1306 = vmatpush1.msra.mxu0 0.0
        %1307 = vmatprep.subr.mxu0 0.0
        %1308 = vmatpush1.msra.mxu0 0.0
        %1309 = vmatprep.subr.mxu0 0.0
        %1310 = vmatpush1.msra.mxu0 0.0
        %1311 = vmatprep.subr.mxu0 0.0
        %1312 = vmatpush1.msra.mxu0 0.0
        %1313 = vmatprep.mubr.f32.mxu0 0.0
        %v1314 = vand.u32 %v258, 4294901760
        %v1315 = vsub.f32 %v258, %v1314
        %v1316 = vand.u32 %v1315, 4294901760
        %v1317 = vsub.f32 %v1315, %v1316
        %v1318 = vand.u32 %v1317, 4294901760
        %1319 = vmatmul.mubr.f32.gmra.mrb[0].mxu0 %v1318
        %v1320 = vpop.f32.mrb[0].mxu0
        %v1321 = vadd.f32 %v1223, %v1320
        %v1322 = vpop.f32.mrb[0].mxu0
        %1323 = vmatprep.mubr.f32.mxu0 0.0
        %v1324 = vand.u32 %v259, 4294901760
        %v1325 = vsub.f32 %v259, %v1324
        %v1326 = vand.u32 %v1325, 4294901760
        %v1327 = vsub.f32 %v1325, %v1326
        %v1328 = vand.u32 %v1327, 4294901760
        %1329 = vmatmul.mubr.f32.gmra.mrb[0].mxu0 %v1328
        %v1330 = vpop.f32.mrb[0].mxu0
        %v1331 = vadd.f32 %v1230, %v1330
        %v1332 = vpop.f32.mrb[0].mxu0
        %1333 = vdwg.mxu0
        %1334 = vmatprep.subr.mxu0 0.0
        %v1335 = vand.u32 %v292, 4294901760
        %v1336 = vsub.f32 %v292, %v1335
        %v1337 = vand.u32 %v1336, 4294901760
        %v1338 = vsub.f32 %v1336, %v1337
        %v1339 = vand.u32 %v1338, 4294901760
        %1340 = vmatpush1.msra.mxu0 %v1339
        %1341 = vmatprep.subr.mxu0 0.0
        %v1342 = vand.u32 %v293, 4294901760
        %v1343 = vsub.f32 %v293, %v1342
        %v1344 = vand.u32 %v1343, 4294901760
        %v1345 = vsub.f32 %v1343, %v1344
        %v1346 = vand.u32 %v1345, 4294901760
        %1347 = vmatpush1.msra.mxu0 %v1346
        %1348 = vmatprep.subr.mxu0 0.0
        %v1349 = vand.u32 %v294, 4294901760
        %v1350 = vsub.f32 %v294, %v1349
        %v1351 = vand.u32 %v1350, 4294901760
        %v1352 = vsub.f32 %v1350, %v1351
        %v1353 = vand.u32 %v1352, 4294901760
        %1354 = vmatpush1.msra.mxu0 %v1353
        %1355 = vmatprep.subr.mxu0 0.0
        %v1356 = vand.u32 %v295, 4294901760
        %v1357 = vsub.f32 %v295, %v1356
        %v1358 = vand.u32 %v1357, 4294901760
        %v1359 = vsub.f32 %v1357, %v1358
        %v1360 = vand.u32 %v1359, 4294901760
        %1361 = vmatpush1.msra.mxu0 %v1360
        %1362 = vmatprep.subr.mxu0 0.0
        %v1363 = vand.u32 %v296, 4294901760
        %v1364 = vsub.f32 %v296, %v1363
        %v1365 = vand.u32 %v1364, 4294901760
        %v1366 = vsub.f32 %v1364, %v1365
        %v1367 = vand.u32 %v1366, 4294901760
        %1368 = vmatpush1.msra.mxu0 %v1367
        %1369 = vmatprep.subr.mxu0 0.0
        %v1370 = vand.u32 %v297, 4294901760
        %v1371 = vsub.f32 %v297, %v1370
        %v1372 = vand.u32 %v1371, 4294901760
        %v1373 = vsub.f32 %v1371, %v1372
        %v1374 = vand.u32 %v1373, 4294901760
        %1375 = vmatpush1.msra.mxu0 %v1374
        %1376 = vmatprep.subr.mxu0 0.0
        %v1377 = vand.u32 %v298, 4294901760
        %v1378 = vsub.f32 %v298, %v1377
        %v1379 = vand.u32 %v1378, 4294901760
        %v1380 = vsub.f32 %v1378, %v1379
        %v1381 = vand.u32 %v1380, 4294901760
        %1382 = vmatpush1.msra.mxu0 %v1381
        %1383 = vmatprep.subr.mxu0 0.0
        %v1384 = vand.u32 %v299, 4294901760
        %v1385 = vsub.f32 %v299, %v1384
        %v1386 = vand.u32 %v1385, 4294901760
        %v1387 = vsub.f32 %v1385, %v1386
        %v1388 = vand.u32 %v1387, 4294901760
        %1389 = vmatpush1.msra.mxu0 %v1388
        %1390 = vmatprep.subr.mxu0 0.0
        %v1391 = vand.u32 %v300, 4294901760
        %v1392 = vsub.f32 %v300, %v1391
        %v1393 = vand.u32 %v1392, 4294901760
        %v1394 = vsub.f32 %v1392, %v1393
        %v1395 = vand.u32 %v1394, 4294901760
        %1396 = vmatpush1.msra.mxu0 %v1395
        %1397 = vmatprep.subr.mxu0 0.0
        %v1398 = vand.u32 %v301, 4294901760
        %v1399 = vsub.f32 %v301, %v1398
        %v1400 = vand.u32 %v1399, 4294901760
        %v1401 = vsub.f32 %v1399, %v1400
        %v1402 = vand.u32 %v1401, 4294901760
        %1403 = vmatpush1.msra.mxu0 %v1402
        %1404 = vmatprep.subr.mxu0 0.0
        %v1405 = vand.u32 %v302, 4294901760
        %v1406 = vsub.f32 %v302, %v1405
        %v1407 = vand.u32 %v1406, 4294901760
        %v1408 = vsub.f32 %v1406, %v1407
        %v1409 = vand.u32 %v1408, 4294901760
        %1410 = vmatpush1.msra.mxu0 %v1409
        %1411 = vmatprep.subr.mxu0 0.0
        %v1412 = vand.u32 %v303, 4294901760
        %v1413 = vsub.f32 %v303, %v1412
        %v1414 = vand.u32 %v1413, 4294901760
        %v1415 = vsub.f32 %v1413, %v1414
        %v1416 = vand.u32 %v1415, 4294901760
        %1417 = vmatpush1.msra.mxu0 %v1416
        %1418 = vmatprep.subr.mxu0 0.0
        %v1419 = vand.u32 %v304, 4294901760
        %v1420 = vsub.f32 %v304, %v1419
        %v1421 = vand.u32 %v1420, 4294901760
        %v1422 = vsub.f32 %v1420, %v1421
        %v1423 = vand.u32 %v1422, 4294901760
        %1424 = vmatpush1.msra.mxu0 %v1423
        %1425 = vmatprep.subr.mxu0 0.0
        %v1426 = vand.u32 %v305, 4294901760
        %v1427 = vsub.f32 %v305, %v1426
        %v1428 = vand.u32 %v1427, 4294901760
        %v1429 = vsub.f32 %v1427, %v1428
        %v1430 = vand.u32 %v1429, 4294901760
        %1431 = vmatpush1.msra.mxu0 %v1430
        %1432 = vmatprep.subr.mxu0 0.0
        %v1433 = vand.u32 %v306, 4294901760
        %v1434 = vsub.f32 %v306, %v1433
        %v1435 = vand.u32 %v1434, 4294901760
        %v1436 = vsub.f32 %v1434, %v1435
        %v1437 = vand.u32 %v1436, 4294901760
        %1438 = vmatpush1.msra.mxu0 %v1437
        %1439 = vmatprep.subr.mxu0 0.0
        %v1440 = vand.u32 %v307, 4294901760
        %v1441 = vsub.f32 %v307, %v1440
        %v1442 = vand.u32 %v1441, 4294901760
        %v1443 = vsub.f32 %v1441, %v1442
        %v1444 = vand.u32 %v1443, 4294901760
        %1445 = vmatpush1.msra.mxu0 %v1444
        %1446 = vmatprep.subr.mxu0 0.0
        %1447 = vmatpush1.msra.mxu0 0.0
        %1448 = vmatprep.subr.mxu0 0.0
        %1449 = vmatpush1.msra.mxu0 0.0
        %1450 = vmatprep.subr.mxu0 0.0
        %1451 = vmatpush1.msra.mxu0 0.0
        %1452 = vmatprep.subr.mxu0 0.0
        %1453 = vmatpush1.msra.mxu0 0.0
        %1454 = vmatprep.subr.mxu0 0.0
        %1455 = vmatpush1.msra.mxu0 0.0
        %1456 = vmatprep.subr.mxu0 0.0
        %1457 = vmatpush1.msra.mxu0 0.0
        %1458 = vmatprep.subr.mxu0 0.0
        %1459 = vmatpush1.msra.mxu0 0.0
        %1460 = vmatprep.subr.mxu0 0.0
        %1461 = vmatpush1.msra.mxu0 0.0
        %1462 = vmatprep.subr.mxu0 0.0
        %1463 = vmatpush1.msra.mxu0 0.0
        %1464 = vmatprep.subr.mxu0 0.0
        %1465 = vmatpush1.msra.mxu0 0.0
        %1466 = vmatprep.subr.mxu0 0.0
        %1467 = vmatpush1.msra.mxu0 0.0
        %1468 = vmatprep.subr.mxu0 0.0
        %1469 = vmatpush1.msra.mxu0 0.0
        %1470 = vmatprep.subr.mxu0 0.0
        %1471 = vmatpush1.msra.mxu0 0.0
        %1472 = vmatprep.subr.mxu0 0.0
        %1473 = vmatpush1.msra.mxu0 0.0
        %1474 = vmatprep.subr.mxu0 0.0
        %1475 = vmatpush1.msra.mxu0 0.0
        %1476 = vmatprep.subr.mxu0 0.0
        %1477 = vmatpush1.msra.mxu0 0.0
        %1478 = vmatprep.mubr.f32.mxu0 0.0
        %v1479 = vand.u32 %v258, 4294901760
        %1480 = vmatmul.mubr.f32.gmra.mrb[0].mxu0 %v1479
        %v1481 = vpop.f32.mrb[0].mxu0
        %v1482 = vadd.f32 %v1321, %v1481
        %v1483 = vpop.f32.mrb[0].mxu0
        %1484 = vmatprep.mubr.f32.mxu0 0.0
        %v1485 = vand.u32 %v259, 4294901760
        %1486 = vmatmul.mubr.f32.gmra.mrb[0].mxu0 %v1485
        %v1487 = vpop.f32.mrb[0].mxu0
        %v1488 = vadd.f32 %v1331, %v1487
        %v1489 = vpop.f32.mrb[0].mxu0
        %1490 = vdwg.mxu0
        %1491 = vmatprep.subr.mxu0 0.0
        %v1492 = vand.u32 %v292, 4294901760
        %v1493 = vsub.f32 %v292, %v1492
        %1494 = vmatpush1.msra.mxu0 %v1493
        %1495 = vmatprep.subr.mxu0 0.0
        %v1496 = vand.u32 %v293, 4294901760
        %v1497 = vsub.f32 %v293, %v1496
        %1498 = vmatpush1.msra.mxu0 %v1497
        %1499 = vmatprep.subr.mxu0 0.0
        %v1500 = vand.u32 %v294, 4294901760
        %v1501 = vsub.f32 %v294, %v1500
        %1502 = vmatpush1.msra.mxu0 %v1501
        %1503 = vmatprep.subr.mxu0 0.0
        %v1504 = vand.u32 %v295, 4294901760
        %v1505 = vsub.f32 %v295, %v1504
        %1506 = vmatpush1.msra.mxu0 %v1505
        %1507 = vmatprep.subr.mxu0 0.0
        %v1508 = vand.u32 %v296, 4294901760
        %v1509 = vsub.f32 %v296, %v1508
        %1510 = vmatpush1.msra.mxu0 %v1509
        %1511 = vmatprep.subr.mxu0 0.0
        %v1512 = vand.u32 %v297, 4294901760
        %v1513 = vsub.f32 %v297, %v1512
        %1514 = vmatpush1.msra.mxu0 %v1513
        %1515 = vmatprep.subr.mxu0 0.0
        %v1516 = vand.u32 %v298, 4294901760
        %v1517 = vsub.f32 %v298, %v1516
        %1518 = vmatpush1.msra.mxu0 %v1517
        %1519 = vmatprep.subr.mxu0 0.0
        %v1520 = vand.u32 %v299, 4294901760
        %v1521 = vsub.f32 %v299, %v1520
        %1522 = vmatpush1.msra.mxu0 %v1521
        %1523 = vmatprep.subr.mxu0 0.0
        %v1524 = vand.u32 %v300, 4294901760
        %v1525 = vsub.f32 %v300, %v1524
        %1526 = vmatpush1.msra.mxu0 %v1525
        %1527 = vmatprep.subr.mxu0 0.0
        %v1528 = vand.u32 %v301, 4294901760
        %v1529 = vsub.f32 %v301, %v1528
        %1530 = vmatpush1.msra.mxu0 %v1529
        %1531 = vmatprep.subr.mxu0 0.0
        %v1532 = vand.u32 %v302, 4294901760
        %v1533 = vsub.f32 %v302, %v1532
        %1534 = vmatpush1.msra.mxu0 %v1533
        %1535 = vmatprep.subr.mxu0 0.0
        %v1536 = vand.u32 %v303, 4294901760
        %v1537 = vsub.f32 %v303, %v1536
        %1538 = vmatpush1.msra.mxu0 %v1537
        %1539 = vmatprep.subr.mxu0 0.0
        %v1540 = vand.u32 %v304, 4294901760
        %v1541 = vsub.f32 %v304, %v1540
        %1542 = vmatpush1.msra.mxu0 %v1541
        %1543 = vmatprep.subr.mxu0 0.0
        %v1544 = vand.u32 %v305, 4294901760
        %v1545 = vsub.f32 %v305, %v1544
        %1546 = vmatpush1.msra.mxu0 %v1545
        %1547 = vmatprep.subr.mxu0 0.0
        %v1548 = vand.u32 %v306, 4294901760
        %v1549 = vsub.f32 %v306, %v1548
        %1550 = vmatpush1.msra.mxu0 %v1549
        %1551 = vmatprep.subr.mxu0 0.0
        %v1552 = vand.u32 %v307, 4294901760
        %v1553 = vsub.f32 %v307, %v1552
        %1554 = vmatpush1.msra.mxu0 %v1553
        %1555 = vmatprep.subr.mxu0 0.0
        %1556 = vmatpush1.msra.mxu0 0.0
        %1557 = vmatprep.subr.mxu0 0.0
        %1558 = vmatpush1.msra.mxu0 0.0
        %1559 = vmatprep.subr.mxu0 0.0
        %1560 = vmatpush1.msra.mxu0 0.0
        %1561 = vmatprep.subr.mxu0 0.0
        %1562 = vmatpush1.msra.mxu0 0.0
        %1563 = vmatprep.subr.mxu0 0.0
        %1564 = vmatpush1.msra.mxu0 0.0
        %1565 = vmatprep.subr.mxu0 0.0
        %1566 = vmatpush1.msra.mxu0 0.0
        %1567 = vmatprep.subr.mxu0 0.0
        %1568 = vmatpush1.msra.mxu0 0.0
        %1569 = vmatprep.subr.mxu0 0.0
        %1570 = vmatpush1.msra.mxu0 0.0
        %1571 = vmatprep.subr.mxu0 0.0
        %1572 = vmatpush1.msra.mxu0 0.0
        %1573 = vmatprep.subr.mxu0 0.0
        %1574 = vmatpush1.msra.mxu0 0.0
        %1575 = vmatprep.subr.mxu0 0.0
        %1576 = vmatpush1.msra.mxu0 0.0
        %1577 = vmatprep.subr.mxu0 0.0
        %1578 = vmatpush1.msra.mxu0 0.0
        %1579 = vmatprep.subr.mxu0 0.0
        %1580 = vmatpush1.msra.mxu0 0.0
        %1581 = vmatprep.subr.mxu0 0.0
        %1582 = vmatpush1.msra.mxu0 0.0
        %1583 = vmatprep.subr.mxu0 0.0
        %1584 = vmatpush1.msra.mxu0 0.0
        %1585 = vmatprep.subr.mxu0 0.0
        %1586 = vmatpush1.msra.mxu0 0.0
        %1587 = vmatprep.mubr.f32.mxu0 0.0
        %v1588 = vand.u32 %v258, 4294901760
        %v1589 = vsub.f32 %v258, %v1588
        %1590 = vmatmul.mubr.f32.gmra.mrb[0].mxu0 %v1589
        %v1591 = vpop.f32.mrb[0].mxu0
        %v1592 = vadd.f32 %v1482, %v1591
        %v1593 = vpop.f32.mrb[0].mxu0
        %1594 = vmatprep.mubr.f32.mxu0 0.0
        %v1595 = vand.u32 %v259, 4294901760
        %v1596 = vsub.f32 %v259, %v1595
        %1597 = vmatmul.mubr.f32.gmra.mrb[0].mxu0 %v1596
        %v1598 = vpop.f32.mrb[0].mxu0
        %v1599 = vadd.f32 %v1488, %v1598
        %v1600 = vpop.f32.mrb[0].mxu0
        %1601 = vdwg.mxu0
        %1602 = vmatprep.subr.mxu0 0.0
        %v1603 = vand.u32 %v292, 4294901760
        %1604 = vmatpush1.msra.mxu0 %v1603
        %1605 = vmatprep.subr.mxu0 0.0
        %v1606 = vand.u32 %v293, 4294901760
        %1607 = vmatpush1.msra.mxu0 %v1606
        %1608 = vmatprep.subr.mxu0 0.0
        %v1609 = vand.u32 %v294, 4294901760
        %1610 = vmatpush1.msra.mxu0 %v1609
        %1611 = vmatprep.subr.mxu0 0.0
        %v1612 = vand.u32 %v295, 4294901760
        %1613 = vmatpush1.msra.mxu0 %v1612
        %1614 = vmatprep.subr.mxu0 0.0
        %v1615 = vand.u32 %v296, 4294901760
        %1616 = vmatpush1.msra.mxu0 %v1615
        %1617 = vmatprep.subr.mxu0 0.0
        %v1618 = vand.u32 %v297, 4294901760
        %1619 = vmatpush1.msra.mxu0 %v1618
        %1620 = vmatprep.subr.mxu0 0.0
        %v1621 = vand.u32 %v298, 4294901760
        %1622 = vmatpush1.msra.mxu0 %v1621
        %1623 = vmatprep.subr.mxu0 0.0
        %v1624 = vand.u32 %v299, 4294901760
        %1625 = vmatpush1.msra.mxu0 %v1624
        %1626 = vmatprep.subr.mxu0 0.0
        %v1627 = vand.u32 %v300, 4294901760
        %1628 = vmatpush1.msra.mxu0 %v1627
        %1629 = vmatprep.subr.mxu0 0.0
        %v1630 = vand.u32 %v301, 4294901760
        %1631 = vmatpush1.msra.mxu0 %v1630
        %1632 = vmatprep.subr.mxu0 0.0
        %v1633 = vand.u32 %v302, 4294901760
        %1634 = vmatpush1.msra.mxu0 %v1633
        %1635 = vmatprep.subr.mxu0 0.0
        %v1636 = vand.u32 %v303, 4294901760
        %1637 = vmatpush1.msra.mxu0 %v1636
        %1638 = vmatprep.subr.mxu0 0.0
        %v1639 = vand.u32 %v304, 4294901760
        %1640 = vmatpush1.msra.mxu0 %v1639
        %1641 = vmatprep.subr.mxu0 0.0
        %v1642 = vand.u32 %v305, 4294901760
        %1643 = vmatpush1.msra.mxu0 %v1642
        %1644 = vmatprep.subr.mxu0 0.0
        %v1645 = vand.u32 %v306, 4294901760
        %1646 = vmatpush1.msra.mxu0 %v1645
        %1647 = vmatprep.subr.mxu0 0.0
        %v1648 = vand.u32 %v307, 4294901760
        %1649 = vmatpush1.msra.mxu0 %v1648
        %1650 = vmatprep.subr.mxu0 0.0
        %1651 = vmatpush1.msra.mxu0 0.0
        %1652 = vmatprep.subr.mxu0 0.0
        %1653 = vmatpush1.msra.mxu0 0.0
        %1654 = vmatprep.subr.mxu0 0.0
        %1655 = vmatpush1.msra.mxu0 0.0
        %1656 = vmatprep.subr.mxu0 0.0
        %1657 = vmatpush1.msra.mxu0 0.0
        %1658 = vmatprep.subr.mxu0 0.0
        %1659 = vmatpush1.msra.mxu0 0.0
        %1660 = vmatprep.subr.mxu0 0.0
        %1661 = vmatpush1.msra.mxu0 0.0
        %1662 = vmatprep.subr.mxu0 0.0
        %1663 = vmatpush1.msra.mxu0 0.0
        %1664 = vmatprep.subr.mxu0 0.0
        %1665 = vmatpush1.msra.mxu0 0.0
        %1666 = vmatprep.subr.mxu0 0.0
        %1667 = vmatpush1.msra.mxu0 0.0
        %1668 = vmatprep.subr.mxu0 0.0
        %1669 = vmatpush1.msra.mxu0 0.0
        %1670 = vmatprep.subr.mxu0 0.0
        %1671 = vmatpush1.msra.mxu0 0.0
        %1672 = vmatprep.subr.mxu0 0.0
        %1673 = vmatpush1.msra.mxu0 0.0
        %1674 = vmatprep.subr.mxu0 0.0
        %1675 = vmatpush1.msra.mxu0 0.0
        %1676 = vmatprep.subr.mxu0 0.0
        %1677 = vmatpush1.msra.mxu0 0.0
        %1678 = vmatprep.subr.mxu0 0.0
        %1679 = vmatpush1.msra.mxu0 0.0
        %1680 = vmatprep.subr.mxu0 0.0
        %1681 = vmatpush1.msra.mxu0 0.0
        %1682 = vmatprep.mubr.f32.mxu0 0.0
        %v1683 = vand.u32 %v258, 4294901760
        %v1684 = vsub.f32 %v258, %v1683
        %v1685 = vand.u32 %v1684, 4294901760
        %1686 = vmatmul.mubr.f32.gmra.mrb[0].mxu0 %v1685
        %v1687 = vpop.f32.mrb[0].mxu0
        %v1688 = vadd.f32 %v1592, %v1687
        %v1689 = vpop.f32.mrb[0].mxu0
        %1690 = vmatprep.mubr.f32.mxu0 0.0
        %v1691 = vand.u32 %v259, 4294901760
        %v1692 = vsub.f32 %v259, %v1691
        %v1693 = vand.u32 %v1692, 4294901760
        %1694 = vmatmul.mubr.f32.gmra.mrb[0].mxu0 %v1693
        %v1695 = vpop.f32.mrb[0].mxu0
        %v1696 = vadd.f32 %v1599, %v1695
        %v1697 = vpop.f32.mrb[0].mxu0
        %1698 = vdwg.mxu0
        %1699 = vmatprep.subr.mxu0 0.0
        %v1700 = vand.u32 %v292, 4294901760
        %v1701 = vsub.f32 %v292, %v1700
        %v1702 = vand.u32 %v1701, 4294901760
        %1703 = vmatpush1.msra.mxu0 %v1702
        %1704 = vmatprep.subr.mxu0 0.0
        %v1705 = vand.u32 %v293, 4294901760
        %v1706 = vsub.f32 %v293, %v1705
        %v1707 = vand.u32 %v1706, 4294901760
        %1708 = vmatpush1.msra.mxu0 %v1707
        %1709 = vmatprep.subr.mxu0 0.0
        %v1710 = vand.u32 %v294, 4294901760
        %v1711 = vsub.f32 %v294, %v1710
        %v1712 = vand.u32 %v1711, 4294901760
        %1713 = vmatpush1.msra.mxu0 %v1712
        %1714 = vmatprep.subr.mxu0 0.0
        %v1715 = vand.u32 %v295, 4294901760
        %v1716 = vsub.f32 %v295, %v1715
        %v1717 = vand.u32 %v1716, 4294901760
        %1718 = vmatpush1.msra.mxu0 %v1717
        %1719 = vmatprep.subr.mxu0 0.0
        %v1720 = vand.u32 %v296, 4294901760
        %v1721 = vsub.f32 %v296, %v1720
        %v1722 = vand.u32 %v1721, 4294901760
        %1723 = vmatpush1.msra.mxu0 %v1722
        %1724 = vmatprep.subr.mxu0 0.0
        %v1725 = vand.u32 %v297, 4294901760
        %v1726 = vsub.f32 %v297, %v1725
        %v1727 = vand.u32 %v1726, 4294901760
        %1728 = vmatpush1.msra.mxu0 %v1727
        %1729 = vmatprep.subr.mxu0 0.0
        %v1730 = vand.u32 %v298, 4294901760
        %v1731 = vsub.f32 %v298, %v1730
        %v1732 = vand.u32 %v1731, 4294901760
        %1733 = vmatpush1.msra.mxu0 %v1732
        %1734 = vmatprep.subr.mxu0 0.0
        %v1735 = vand.u32 %v299, 4294901760
        %v1736 = vsub.f32 %v299, %v1735
        %v1737 = vand.u32 %v1736, 4294901760
        %1738 = vmatpush1.msra.mxu0 %v1737
        %1739 = vmatprep.subr.mxu0 0.0
        %v1740 = vand.u32 %v300, 4294901760
        %v1741 = vsub.f32 %v300, %v1740
        %v1742 = vand.u32 %v1741, 4294901760
        %1743 = vmatpush1.msra.mxu0 %v1742
        %1744 = vmatprep.subr.mxu0 0.0
        %v1745 = vand.u32 %v301, 4294901760
        %v1746 = vsub.f32 %v301, %v1745
        %v1747 = vand.u32 %v1746, 4294901760
        %1748 = vmatpush1.msra.mxu0 %v1747
        %1749 = vmatprep.subr.mxu0 0.0
        %v1750 = vand.u32 %v302, 4294901760
        %v1751 = vsub.f32 %v302, %v1750
        %v1752 = vand.u32 %v1751, 4294901760
        %1753 = vmatpush1.msra.mxu0 %v1752
        %1754 = vmatprep.subr.mxu0 0.0
        %v1755 = vand.u32 %v303, 4294901760
        %v1756 = vsub.f32 %v303, %v1755
        %v1757 = vand.u32 %v1756, 4294901760
        %1758 = vmatpush1.msra.mxu0 %v1757
        %1759 = vmatprep.subr.mxu0 0.0
        %v1760 = vand.u32 %v304, 4294901760
        %v1761 = vsub.f32 %v304, %v1760
        %v1762 = vand.u32 %v1761, 4294901760
        %1763 = vmatpush1.msra.mxu0 %v1762
        %1764 = vmatprep.subr.mxu0 0.0
        %v1765 = vand.u32 %v305, 4294901760
        %v1766 = vsub.f32 %v305, %v1765
        %v1767 = vand.u32 %v1766, 4294901760
        %1768 = vmatpush1.msra.mxu0 %v1767
        %1769 = vmatprep.subr.mxu0 0.0
        %v1770 = vand.u32 %v306, 4294901760
        %v1771 = vsub.f32 %v306, %v1770
        %v1772 = vand.u32 %v1771, 4294901760
        %1773 = vmatpush1.msra.mxu0 %v1772
        %1774 = vmatprep.subr.mxu0 0.0
        %v1775 = vand.u32 %v307, 4294901760
        %v1776 = vsub.f32 %v307, %v1775
        %v1777 = vand.u32 %v1776, 4294901760
        %1778 = vmatpush1.msra.mxu0 %v1777
        %1779 = vmatprep.subr.mxu0 0.0
        %1780 = vmatpush1.msra.mxu0 0.0
        %1781 = vmatprep.subr.mxu0 0.0
        %1782 = vmatpush1.msra.mxu0 0.0
        %1783 = vmatprep.subr.mxu0 0.0
        %1784 = vmatpush1.msra.mxu0 0.0
        %1785 = vmatprep.subr.mxu0 0.0
        %1786 = vmatpush1.msra.mxu0 0.0
        %1787 = vmatprep.subr.mxu0 0.0
        %1788 = vmatpush1.msra.mxu0 0.0
        %1789 = vmatprep.subr.mxu0 0.0
        %1790 = vmatpush1.msra.mxu0 0.0
        %1791 = vmatprep.subr.mxu0 0.0
        %1792 = vmatpush1.msra.mxu0 0.0
        %1793 = vmatprep.subr.mxu0 0.0
        %1794 = vmatpush1.msra.mxu0 0.0
        %1795 = vmatprep.subr.mxu0 0.0
        %1796 = vmatpush1.msra.mxu0 0.0
        %1797 = vmatprep.subr.mxu0 0.0
        %1798 = vmatpush1.msra.mxu0 0.0
        %1799 = vmatprep.subr.mxu0 0.0
        %1800 = vmatpush1.msra.mxu0 0.0
        %1801 = vmatprep.subr.mxu0 0.0
        %1802 = vmatpush1.msra.mxu0 0.0
        %1803 = vmatprep.subr.mxu0 0.0
        %1804 = vmatpush1.msra.mxu0 0.0
        %1805 = vmatprep.subr.mxu0 0.0
        %1806 = vmatpush1.msra.mxu0 0.0
        %1807 = vmatprep.subr.mxu0 0.0
        %1808 = vmatpush1.msra.mxu0 0.0
        %1809 = vmatprep.subr.mxu0 0.0
        %1810 = vmatpush1.msra.mxu0 0.0
        %1811 = vmatprep.mubr.f32.mxu0 0.0
        %v1812 = vand.u32 %v258, 4294901760
        %1813 = vmatmul.mubr.f32.gmra.mrb[0].mxu0 %v1812
        %v1814 = vpop.f32.mrb[0].mxu0
        %v1815 = vadd.f32 %v1688, %v1814
        %v1816 = vpop.f32.mrb[0].mxu0
        %1817 = vmatprep.mubr.f32.mxu0 0.0
        %v1818 = vand.u32 %v259, 4294901760
        %1819 = vmatmul.mubr.f32.gmra.mrb[0].mxu0 %v1818
        %v1820 = vpop.f32.mrb[0].mxu0
        %v1821 = vadd.f32 %v1696, %v1820
        %v1822 = vpop.f32.mrb[0].mxu0
        %1823 = vdwg.mxu0
        %1824 = vmatprep.subr.mxu0 0.0
        %v1825 = vand.u32 %v292, 4294901760
        %1826 = vmatpush1.msra.mxu0 %v1825
        %1827 = vmatprep.subr.mxu0 0.0
        %v1828 = vand.u32 %v293, 4294901760
        %1829 = vmatpush1.msra.mxu0 %v1828
        %1830 = vmatprep.subr.mxu0 0.0
        %v1831 = vand.u32 %v294, 4294901760
        %1832 = vmatpush1.msra.mxu0 %v1831
        %1833 = vmatprep.subr.mxu0 0.0
        %v1834 = vand.u32 %v295, 4294901760
        %1835 = vmatpush1.msra.mxu0 %v1834
        %1836 = vmatprep.subr.mxu0 0.0
        %v1837 = vand.u32 %v296, 4294901760
        %1838 = vmatpush1.msra.mxu0 %v1837
        %1839 = vmatprep.subr.mxu0 0.0
        %v1840 = vand.u32 %v297, 4294901760
        %1841 = vmatpush1.msra.mxu0 %v1840
        %1842 = vmatprep.subr.mxu0 0.0
        %v1843 = vand.u32 %v298, 4294901760
        %1844 = vmatpush1.msra.mxu0 %v1843
        %1845 = vmatprep.subr.mxu0 0.0
        %v1846 = vand.u32 %v299, 4294901760
        %1847 = vmatpush1.msra.mxu0 %v1846
        %1848 = vmatprep.subr.mxu0 0.0
        %v1849 = vand.u32 %v300, 4294901760
        %1850 = vmatpush1.msra.mxu0 %v1849
        %1851 = vmatprep.subr.mxu0 0.0
        %v1852 = vand.u32 %v301, 4294901760
        %1853 = vmatpush1.msra.mxu0 %v1852
        %1854 = vmatprep.subr.mxu0 0.0
        %v1855 = vand.u32 %v302, 4294901760
        %1856 = vmatpush1.msra.mxu0 %v1855
        %1857 = vmatprep.subr.mxu0 0.0
        %v1858 = vand.u32 %v303, 4294901760
        %1859 = vmatpush1.msra.mxu0 %v1858
        %1860 = vmatprep.subr.mxu0 0.0
        %v1861 = vand.u32 %v304, 4294901760
        %1862 = vmatpush1.msra.mxu0 %v1861
        %1863 = vmatprep.subr.mxu0 0.0
        %v1864 = vand.u32 %v305, 4294901760
        %1865 = vmatpush1.msra.mxu0 %v1864
        %1866 = vmatprep.subr.mxu0 0.0
        %v1867 = vand.u32 %v306, 4294901760
        %1868 = vmatpush1.msra.mxu0 %v1867
        %1869 = vmatprep.subr.mxu0 0.0
        %v1870 = vand.u32 %v307, 4294901760
        %1871 = vmatpush1.msra.mxu0 %v1870
        %1872 = vmatprep.subr.mxu0 0.0
        %1873 = vmatpush1.msra.mxu0 0.0
        %1874 = vmatprep.subr.mxu0 0.0
        %1875 = vmatpush1.msra.mxu0 0.0
        %1876 = vmatprep.subr.mxu0 0.0
        %1877 = vmatpush1.msra.mxu0 0.0
        %1878 = vmatprep.subr.mxu0 0.0
        %1879 = vmatpush1.msra.mxu0 0.0
        %1880 = vmatprep.subr.mxu0 0.0
        %1881 = vmatpush1.msra.mxu0 0.0
        %1882 = vmatprep.subr.mxu0 0.0
        %1883 = vmatpush1.msra.mxu0 0.0
        %1884 = vmatprep.subr.mxu0 0.0
        %1885 = vmatpush1.msra.mxu0 0.0
        %1886 = vmatprep.subr.mxu0 0.0
        %1887 = vmatpush1.msra.mxu0 0.0
        %1888 = vmatprep.subr.mxu0 0.0
        %1889 = vmatpush1.msra.mxu0 0.0
        %1890 = vmatprep.subr.mxu0 0.0
        %1891 = vmatpush1.msra.mxu0 0.0
        %1892 = vmatprep.subr.mxu0 0.0
        %1893 = vmatpush1.msra.mxu0 0.0
        %1894 = vmatprep.subr.mxu0 0.0
        %1895 = vmatpush1.msra.mxu0 0.0
        %1896 = vmatprep.subr.mxu0 0.0
        %1897 = vmatpush1.msra.mxu0 0.0
        %1898 = vmatprep.subr.mxu0 0.0
        %1899 = vmatpush1.msra.mxu0 0.0
        %1900 = vmatprep.subr.mxu0 0.0
        %1901 = vmatpush1.msra.mxu0 0.0
        %1902 = vmatprep.subr.mxu0 0.0
        %1903 = vmatpush1.msra.mxu0 0.0
        %1904 = vmatprep.mubr.f32.mxu0 0.0
        %v1905 = vand.u32 %v258, 4294901760
        %1906 = vmatmul.mubr.f32.gmra.mrb[0].mxu0 %v1905
        %v1907 = vpop.f32.mrb[0].mxu0
        %v1908 = vadd.f32 %v1815, %v1907
        %v1909 = vpop.f32.mrb[0].mxu0
        %1910 = vmatprep.mubr.f32.mxu0 0.0
        %v1911 = vand.u32 %v259, 4294901760
        %1912 = vmatmul.mubr.f32.gmra.mrb[0].mxu0 %v1911
        %v1913 = vpop.f32.mrb[0].mxu0
        %v1914 = vadd.f32 %v1821, %v1913
        %v1915 = vpop.f32.mrb[0].mxu0
        %1916 = vdwg.mxu0
        %v1917 = vmax.f32 %v1908, 0.0
        %v1918 = vmax.f32 %v1914, 0.0
        %1919 = vst [vmem:[#allocation2] sm:$0x1] 0.0
        %1920 = vst [vmem:[#allocation2 + $0x11] sm:$0x1] 0.0
        %1921 = vst [vmem:[#allocation2 + $0x1] sm:$0xff] %v1917
        %1922 = vst [vmem:[#allocation2 + $0x9] sm:$0xff] %v1918
        %v1923 = vld [vmem:[#allocation2] sm:$0xff]
        %v1924 = vld [vmem:[#allocation2 + $0x8] sm:$0xff]
        %v1925 = vld [vmem:[#allocation2 + $0x1] sm:$0xff]
        %v1926 = vld [vmem:[#allocation2 + $0x9] sm:$0xff]
        %v1927 = vld [vmem:[#allocation2 + $0x2] sm:$0xff]
        %v1928 = vld [vmem:[#allocation2 + $0xa] sm:$0xff]
        %v1929 = vld [vmem:[#allocation6] sm:$0xff]
        %v1930 = vld [vmem:[#allocation6 + $0x8] sm:$0xff]
        %v1931 = vld [vmem:[#allocation6 + $0x10] sm:$0xff]
        %v1932 = vld [vmem:[#allocation6 + $0x18] sm:$0xff]
        %v1933 = vld [vmem:[#allocation6 + $0x20] sm:$0xff]
        %v1934 = vld [vmem:[#allocation6 + $0x28] sm:$0xff]
        %v1935 = vld [vmem:[#allocation6 + $0x30] sm:$0xff]
        %v1936 = vld [vmem:[#allocation6 + $0x38] sm:$0xff]
        %v1937 = vld [vmem:[#allocation6 + $0x40] sm:$0xff]
        %v1938 = vld [vmem:[#allocation6 + $0x48] sm:$0xff]
        %v1939 = vld [vmem:[#allocation6 + $0x50] sm:$0xff]
        %v1940 = vld [vmem:[#allocation6 + $0x58] sm:$0xff]
        %v1941 = vld [vmem:[#allocation6 + $0x60] sm:$0xff]
        %v1942 = vld [vmem:[#allocation6 + $0x68] sm:$0xff]
        %v1943 = vld [vmem:[#allocation6 + $0x70] sm:$0xff]
        %v1944 = vld [vmem:[#allocation6 + $0x78] sm:$0xff]
        %v1945 = vld [vmem:[#allocation6 + $0x80] sm:$0xff]
        %v1946 = vld [vmem:[#allocation6 + $0x88] sm:$0xff]
        %v1947 = vld [vmem:[#allocation6 + $0x90] sm:$0xff]
        %v1948 = vld [vmem:[#allocation6 + $0x98] sm:$0xff]
        %v1949 = vld [vmem:[#allocation6 + $0xa0] sm:$0xff]
        %v1950 = vld [vmem:[#allocation6 + $0xa8] sm:$0xff]
        %v1951 = vld [vmem:[#allocation6 + $0xb0] sm:$0xff]
        %v1952 = vld [vmem:[#allocation6 + $0xb8] sm:$0xff]
        %v1953 = vld [vmem:[#allocation6 + $0xc0] sm:$0xff]
        %v1954 = vld [vmem:[#allocation6 + $0xc8] sm:$0xff]
        %v1955 = vld [vmem:[#allocation6 + $0xd0] sm:$0xff]
        %v1956 = vld [vmem:[#allocation6 + $0xd8] sm:$0xff]
        %v1957 = vld [vmem:[#allocation6 + $0xe0] sm:$0xff]
        %v1958 = vld [vmem:[#allocation6 + $0xe8] sm:$0xff]
        %v1959 = vld [vmem:[#allocation6 + $0xf0] sm:$0xff]
        %v1960 = vld [vmem:[#allocation6 + $0xf8] sm:$0xff]
        %v1961 = vld [vmem:[#allocation6 + $0x100] sm:$0xff]
        %v1962 = vld [vmem:[#allocation6 + $0x108] sm:$0xff]
        %v1963 = vld [vmem:[#allocation6 + $0x110] sm:$0xff]
        %v1964 = vld [vmem:[#allocation6 + $0x118] sm:$0xff]
        %v1965 = vld [vmem:[#allocation6 + $0x120] sm:$0xff]
        %v1966 = vld [vmem:[#allocation6 + $0x128] sm:$0xff]
        %v1967 = vld [vmem:[#allocation6 + $0x130] sm:$0xff]
        %v1968 = vld [vmem:[#allocation6 + $0x138] sm:$0xff]
        %v1969 = vld [vmem:[#allocation6 + $0x140] sm:$0xff]
        %v1970 = vld [vmem:[#allocation6 + $0x148] sm:$0xff]
        %v1971 = vld [vmem:[#allocation6 + $0x150] sm:$0xff]
        %v1972 = vld [vmem:[#allocation6 + $0x158] sm:$0xff]
        %v1973 = vld [vmem:[#allocation6 + $0x160] sm:$0xff]
        %v1974 = vld [vmem:[#allocation6 + $0x168] sm:$0xff]
        %v1975 = vld [vmem:[#allocation6 + $0x170] sm:$0xff]
        %v1976 = vld [vmem:[#allocation6 + $0x178] sm:$0xff]
        %v1977 = vld [vmem:[%s4] sm:$0x1]
        %v1979 = vlaneseq
        %v1980 = vshrl.u32 %v1979, 7
        %v1981 = vsub.s32 0, %v1980
        %v1982 = vrot.slane %v1977, %v1981
        %1984 = vmatprep.subr.mxu0 0.0
        %v1985 = vand.u32 %v1929, 4294901760
        %1986 = vmatpush1.msra.mxu0 %v1985
        %1987 = vmatprep.subr.mxu0 0.0
        %v1988 = vand.u32 %v1930, 4294901760
        %1989 = vmatpush1.msra.mxu0 %v1988
        %1990 = vmatprep.subr.mxu0 0.0
        %v1991 = vand.u32 %v1931, 4294901760
        %1992 = vmatpush1.msra.mxu0 %v1991
        %1993 = vmatprep.subr.mxu0 0.0
        %v1994 = vand.u32 %v1932, 4294901760
        %1995 = vmatpush1.msra.mxu0 %v1994
        %1996 = vmatprep.subr.mxu0 0.0
        %v1997 = vand.u32 %v1933, 4294901760
        %1998 = vmatpush1.msra.mxu0 %v1997
        %1999 = vmatprep.subr.mxu0 0.0
        %v2000 = vand.u32 %v1934, 4294901760
        %2001 = vmatpush1.msra.mxu0 %v2000
        %2002 = vmatprep.subr.mxu0 0.0
        %v2003 = vand.u32 %v1935, 4294901760
        %2004 = vmatpush1.msra.mxu0 %v2003
        %2005 = vmatprep.subr.mxu0 0.0
        %v2006 = vand.u32 %v1936, 4294901760
        %2007 = vmatpush1.msra.mxu0 %v2006
        %2008 = vmatprep.subr.mxu0 0.0
        %v2009 = vand.u32 %v1937, 4294901760
        %2010 = vmatpush1.msra.mxu0 %v2009
        %2011 = vmatprep.subr.mxu0 0.0
        %v2012 = vand.u32 %v1938, 4294901760
        %2013 = vmatpush1.msra.mxu0 %v2012
        %2014 = vmatprep.subr.mxu0 0.0
        %v2015 = vand.u32 %v1939, 4294901760
        %2016 = vmatpush1.msra.mxu0 %v2015
        %2017 = vmatprep.subr.mxu0 0.0
        %v2018 = vand.u32 %v1940, 4294901760
        %2019 = vmatpush1.msra.mxu0 %v2018
        %2020 = vmatprep.subr.mxu0 0.0
        %v2021 = vand.u32 %v1941, 4294901760
        %2022 = vmatpush1.msra.mxu0 %v2021
        %2023 = vmatprep.subr.mxu0 0.0
        %v2024 = vand.u32 %v1942, 4294901760
        %2025 = vmatpush1.msra.mxu0 %v2024
        %2026 = vmatprep.subr.mxu0 0.0
        %v2027 = vand.u32 %v1943, 4294901760
        %2028 = vmatpush1.msra.mxu0 %v2027
        %2029 = vmatprep.subr.mxu0 0.0
        %v2030 = vand.u32 %v1944, 4294901760
        %2031 = vmatpush1.msra.mxu0 %v2030
        %2032 = vmatprep.subr.mxu0 0.0
        %v2033 = vand.u32 %v1945, 4294901760
        %2034 = vmatpush1.msra.mxu0 %v2033
        %2035 = vmatprep.subr.mxu0 0.0
        %v2036 = vand.u32 %v1946, 4294901760
        %2037 = vmatpush1.msra.mxu0 %v2036
        %2038 = vmatprep.subr.mxu0 0.0
        %v2039 = vand.u32 %v1947, 4294901760
        %2040 = vmatpush1.msra.mxu0 %v2039
        %2041 = vmatprep.subr.mxu0 0.0
        %v2042 = vand.u32 %v1948, 4294901760
        %2043 = vmatpush1.msra.mxu0 %v2042
        %2044 = vmatprep.subr.mxu0 0.0
        %v2045 = vand.u32 %v1949, 4294901760
        %2046 = vmatpush1.msra.mxu0 %v2045
        %2047 = vmatprep.subr.mxu0 0.0
        %v2048 = vand.u32 %v1950, 4294901760
        %2049 = vmatpush1.msra.mxu0 %v2048
        %2050 = vmatprep.subr.mxu0 0.0
        %v2051 = vand.u32 %v1951, 4294901760
        %2052 = vmatpush1.msra.mxu0 %v2051
        %2053 = vmatprep.subr.mxu0 0.0
        %v2054 = vand.u32 %v1952, 4294901760
        %2055 = vmatpush1.msra.mxu0 %v2054
        %2056 = vmatprep.subr.mxu0 0.0
        %v2057 = vand.u32 %v1953, 4294901760
        %2058 = vmatpush1.msra.mxu0 %v2057
        %2059 = vmatprep.subr.mxu0 0.0
        %v2060 = vand.u32 %v1954, 4294901760
        %2061 = vmatpush1.msra.mxu0 %v2060
        %2062 = vmatprep.subr.mxu0 0.0
        %v2063 = vand.u32 %v1955, 4294901760
        %2064 = vmatpush1.msra.mxu0 %v2063
        %2065 = vmatprep.subr.mxu0 0.0
        %v2066 = vand.u32 %v1956, 4294901760
        %2067 = vmatpush1.msra.mxu0 %v2066
        %2068 = vmatprep.subr.mxu0 0.0
        %v2069 = vand.u32 %v1957, 4294901760
        %2070 = vmatpush1.msra.mxu0 %v2069
        %2071 = vmatprep.subr.mxu0 0.0
        %v2072 = vand.u32 %v1958, 4294901760
        %2073 = vmatpush1.msra.mxu0 %v2072
        %2074 = vmatprep.subr.mxu0 0.0
        %v2075 = vand.u32 %v1959, 4294901760
        %2076 = vmatpush1.msra.mxu0 %v2075
        %2077 = vmatprep.subr.mxu0 0.0
        %v2078 = vand.u32 %v1960, 4294901760
        %2079 = vmatpush1.msra.mxu0 %v2078
        %v2080 = vand.u32 %v1925, 4294901760
        %v2081 = vsub.f32 %v1925, %v2080
        %v2082 = vand.u32 %v2081, 4294901760
        %v2083 = vsub.f32 %v2081, %v2082
        %v2084 = vand.u32 %v2083, 4294901760
        %2085 = vmatprep.mubr.f32.mxu0 %v2084
        %v2086 = vand.u32 %v1923, 4294901760
        %v2087 = vsub.f32 %v1923, %v2086
        %v2088 = vand.u32 %v2087, 4294901760
        %v2089 = vsub.f32 %v2087, %v2088
        %v2090 = vand.u32 %v2089, 4294901760
        %2091 = vmatmul.mubr.f32.gmra.mrb[0].mxu0 %v2090
        %v2092 = vpop.f32.mrb[0].mxu0
        %v2093 = vadd.f32 %v1982, %v2092
        %v2094 = vpop.f32.mrb[0].mxu0
        %v2095 = vand.u32 %v1926, 4294901760
        %v2096 = vsub.f32 %v1926, %v2095
        %v2097 = vand.u32 %v2096, 4294901760
        %v2098 = vsub.f32 %v2096, %v2097
        %v2099 = vand.u32 %v2098, 4294901760
        %2100 = vmatprep.mubr.f32.mxu0 %v2099
        %v2101 = vand.u32 %v1924, 4294901760
        %v2102 = vsub.f32 %v1924, %v2101
        %v2103 = vand.u32 %v2102, 4294901760
        %v2104 = vsub.f32 %v2102, %v2103
        %v2105 = vand.u32 %v2104, 4294901760
        %2106 = vmatmul.mubr.f32.gmra.mrb[0].mxu0 %v2105
        %v2107 = vpop.f32.mrb[0].mxu0
        %v2108 = vadd.f32 %v1982, %v2107
        %v2109 = vpop.f32.mrb[0].mxu0
        %2110 = vdwg.mxu0
        %2111 = vmatprep.subr.mxu0 0.0
        %v2112 = vand.u32 %v1929, 4294901760
        %v2113 = vsub.f32 %v1929, %v2112
        %v2114 = vand.u32 %v2113, 4294901760
        %v2115 = vsub.f32 %v2113, %v2114
        %v2116 = vand.u32 %v2115, 4294901760
        %2117 = vmatpush1.msra.mxu0 %v2116
        %2118 = vmatprep.subr.mxu0 0.0
        %v2119 = vand.u32 %v1930, 4294901760
        %v2120 = vsub.f32 %v1930, %v2119
        %v2121 = vand.u32 %v2120, 4294901760
        %v2122 = vsub.f32 %v2120, %v2121
        %v2123 = vand.u32 %v2122, 4294901760
        %2124 = vmatpush1.msra.mxu0 %v2123
        %2125 = vmatprep.subr.mxu0 0.0
        %v2126 = vand.u32 %v1931, 4294901760
        %v2127 = vsub.f32 %v1931, %v2126
        %v2128 = vand.u32 %v2127, 4294901760
        %v2129 = vsub.f32 %v2127, %v2128
        %v2130 = vand.u32 %v2129, 4294901760
        %2131 = vmatpush1.msra.mxu0 %v2130
        %2132 = vmatprep.subr.mxu0 0.0
        %v2133 = vand.u32 %v1932, 4294901760
        %v2134 = vsub.f32 %v1932, %v2133
        %v2135 = vand.u32 %v2134, 4294901760
        %v2136 = vsub.f32 %v2134, %v2135
        %v2137 = vand.u32 %v2136, 4294901760
        %2138 = vmatpush1.msra.mxu0 %v2137
        %2139 = vmatprep.subr.mxu0 0.0
        %v2140 = vand.u32 %v1933, 4294901760
        %v2141 = vsub.f32 %v1933, %v2140
        %v2142 = vand.u32 %v2141, 4294901760
        %v2143 = vsub.f32 %v2141, %v2142
        %v2144 = vand.u32 %v2143, 4294901760
        %2145 = vmatpush1.msra.mxu0 %v2144
        %2146 = vmatprep.subr.mxu0 0.0
        %v2147 = vand.u32 %v1934, 4294901760
        %v2148 = vsub.f32 %v1934, %v2147
        %v2149 = vand.u32 %v2148, 4294901760
        %v2150 = vsub.f32 %v2148, %v2149
        %v2151 = vand.u32 %v2150, 4294901760
        %2152 = vmatpush1.msra.mxu0 %v2151
        %2153 = vmatprep.subr.mxu0 0.0
        %v2154 = vand.u32 %v1935, 4294901760
        %v2155 = vsub.f32 %v1935, %v2154
        %v2156 = vand.u32 %v2155, 4294901760
        %v2157 = vsub.f32 %v2155, %v2156
        %v2158 = vand.u32 %v2157, 4294901760
        %2159 = vmatpush1.msra.mxu0 %v2158
        %2160 = vmatprep.subr.mxu0 0.0
        %v2161 = vand.u32 %v1936, 4294901760
        %v2162 = vsub.f32 %v1936, %v2161
        %v2163 = vand.u32 %v2162, 4294901760
        %v2164 = vsub.f32 %v2162, %v2163
        %v2165 = vand.u32 %v2164, 4294901760
        %2166 = vmatpush1.msra.mxu0 %v2165
        %2167 = vmatprep.subr.mxu0 0.0
        %v2168 = vand.u32 %v1937, 4294901760
        %v2169 = vsub.f32 %v1937, %v2168
        %v2170 = vand.u32 %v2169, 4294901760
        %v2171 = vsub.f32 %v2169, %v2170
        %v2172 = vand.u32 %v2171, 4294901760
        %2173 = vmatpush1.msra.mxu0 %v2172
        %2174 = vmatprep.subr.mxu0 0.0
        %v2175 = vand.u32 %v1938, 4294901760
        %v2176 = vsub.f32 %v1938, %v2175
        %v2177 = vand.u32 %v2176, 4294901760
        %v2178 = vsub.f32 %v2176, %v2177
        %v2179 = vand.u32 %v2178, 4294901760
        %2180 = vmatpush1.msra.mxu0 %v2179
        %2181 = vmatprep.subr.mxu0 0.0
        %v2182 = vand.u32 %v1939, 4294901760
        %v2183 = vsub.f32 %v1939, %v2182
        %v2184 = vand.u32 %v2183, 4294901760
        %v2185 = vsub.f32 %v2183, %v2184
        %v2186 = vand.u32 %v2185, 4294901760
        %2187 = vmatpush1.msra.mxu0 %v2186
        %2188 = vmatprep.subr.mxu0 0.0
        %v2189 = vand.u32 %v1940, 4294901760
        %v2190 = vsub.f32 %v1940, %v2189
        %v2191 = vand.u32 %v2190, 4294901760
        %v2192 = vsub.f32 %v2190, %v2191
        %v2193 = vand.u32 %v2192, 4294901760
        %2194 = vmatpush1.msra.mxu0 %v2193
        %2195 = vmatprep.subr.mxu0 0.0
        %v2196 = vand.u32 %v1941, 4294901760
        %v2197 = vsub.f32 %v1941, %v2196
        %v2198 = vand.u32 %v2197, 4294901760
        %v2199 = vsub.f32 %v2197, %v2198
        %v2200 = vand.u32 %v2199, 4294901760
        %2201 = vmatpush1.msra.mxu0 %v2200
        %2202 = vmatprep.subr.mxu0 0.0
        %v2203 = vand.u32 %v1942, 4294901760
        %v2204 = vsub.f32 %v1942, %v2203
        %v2205 = vand.u32 %v2204, 4294901760
        %v2206 = vsub.f32 %v2204, %v2205
        %v2207 = vand.u32 %v2206, 4294901760
        %2208 = vmatpush1.msra.mxu0 %v2207
        %2209 = vmatprep.subr.mxu0 0.0
        %v2210 = vand.u32 %v1943, 4294901760
        %v2211 = vsub.f32 %v1943, %v2210
        %v2212 = vand.u32 %v2211, 4294901760
        %v2213 = vsub.f32 %v2211, %v2212
        %v2214 = vand.u32 %v2213, 4294901760
        %2215 = vmatpush1.msra.mxu0 %v2214
        %2216 = vmatprep.subr.mxu0 0.0
        %v2217 = vand.u32 %v1944, 4294901760
        %v2218 = vsub.f32 %v1944, %v2217
        %v2219 = vand.u32 %v2218, 4294901760
        %v2220 = vsub.f32 %v2218, %v2219
        %v2221 = vand.u32 %v2220, 4294901760
        %2222 = vmatpush1.msra.mxu0 %v2221
        %2223 = vmatprep.subr.mxu0 0.0
        %v2224 = vand.u32 %v1945, 4294901760
        %v2225 = vsub.f32 %v1945, %v2224
        %v2226 = vand.u32 %v2225, 4294901760
        %v2227 = vsub.f32 %v2225, %v2226
        %v2228 = vand.u32 %v2227, 4294901760
        %2229 = vmatpush1.msra.mxu0 %v2228
        %2230 = vmatprep.subr.mxu0 0.0
        %v2231 = vand.u32 %v1946, 4294901760
        %v2232 = vsub.f32 %v1946, %v2231
        %v2233 = vand.u32 %v2232, 4294901760
        %v2234 = vsub.f32 %v2232, %v2233
        %v2235 = vand.u32 %v2234, 4294901760
        %2236 = vmatpush1.msra.mxu0 %v2235
        %2237 = vmatprep.subr.mxu0 0.0
        %v2238 = vand.u32 %v1947, 4294901760
        %v2239 = vsub.f32 %v1947, %v2238
        %v2240 = vand.u32 %v2239, 4294901760
        %v2241 = vsub.f32 %v2239, %v2240
        %v2242 = vand.u32 %v2241, 4294901760
        %2243 = vmatpush1.msra.mxu0 %v2242
        %2244 = vmatprep.subr.mxu0 0.0
        %v2245 = vand.u32 %v1948, 4294901760
        %v2246 = vsub.f32 %v1948, %v2245
        %v2247 = vand.u32 %v2246, 4294901760
        %v2248 = vsub.f32 %v2246, %v2247
        %v2249 = vand.u32 %v2248, 4294901760
        %2250 = vmatpush1.msra.mxu0 %v2249
        %2251 = vmatprep.subr.mxu0 0.0
        %v2252 = vand.u32 %v1949, 4294901760
        %v2253 = vsub.f32 %v1949, %v2252
        %v2254 = vand.u32 %v2253, 4294901760
        %v2255 = vsub.f32 %v2253, %v2254
        %v2256 = vand.u32 %v2255, 4294901760
        %2257 = vmatpush1.msra.mxu0 %v2256
        %2258 = vmatprep.subr.mxu0 0.0
        %v2259 = vand.u32 %v1950, 4294901760
        %v2260 = vsub.f32 %v1950, %v2259
        %v2261 = vand.u32 %v2260, 4294901760
        %v2262 = vsub.f32 %v2260, %v2261
        %v2263 = vand.u32 %v2262, 4294901760
        %2264 = vmatpush1.msra.mxu0 %v2263
        %2265 = vmatprep.subr.mxu0 0.0
        %v2266 = vand.u32 %v1951, 4294901760
        %v2267 = vsub.f32 %v1951, %v2266
        %v2268 = vand.u32 %v2267, 4294901760
        %v2269 = vsub.f32 %v2267, %v2268
        %v2270 = vand.u32 %v2269, 4294901760
        %2271 = vmatpush1.msra.mxu0 %v2270
        %2272 = vmatprep.subr.mxu0 0.0
        %v2273 = vand.u32 %v1952, 4294901760
        %v2274 = vsub.f32 %v1952, %v2273
        %v2275 = vand.u32 %v2274, 4294901760
        %v2276 = vsub.f32 %v2274, %v2275
        %v2277 = vand.u32 %v2276, 4294901760
        %2278 = vmatpush1.msra.mxu0 %v2277
        %2279 = vmatprep.subr.mxu0 0.0
        %v2280 = vand.u32 %v1953, 4294901760
        %v2281 = vsub.f32 %v1953, %v2280
        %v2282 = vand.u32 %v2281, 4294901760
        %v2283 = vsub.f32 %v2281, %v2282
        %v2284 = vand.u32 %v2283, 4294901760
        %2285 = vmatpush1.msra.mxu0 %v2284
        %2286 = vmatprep.subr.mxu0 0.0
        %v2287 = vand.u32 %v1954, 4294901760
        %v2288 = vsub.f32 %v1954, %v2287
        %v2289 = vand.u32 %v2288, 4294901760
        %v2290 = vsub.f32 %v2288, %v2289
        %v2291 = vand.u32 %v2290, 4294901760
        %2292 = vmatpush1.msra.mxu0 %v2291
        %2293 = vmatprep.subr.mxu0 0.0
        %v2294 = vand.u32 %v1955, 4294901760
        %v2295 = vsub.f32 %v1955, %v2294
        %v2296 = vand.u32 %v2295, 4294901760
        %v2297 = vsub.f32 %v2295, %v2296
        %v2298 = vand.u32 %v2297, 4294901760
        %2299 = vmatpush1.msra.mxu0 %v2298
        %2300 = vmatprep.subr.mxu0 0.0
        %v2301 = vand.u32 %v1956, 4294901760
        %v2302 = vsub.f32 %v1956, %v2301
        %v2303 = vand.u32 %v2302, 4294901760
        %v2304 = vsub.f32 %v2302, %v2303
        %v2305 = vand.u32 %v2304, 4294901760
        %2306 = vmatpush1.msra.mxu0 %v2305
        %2307 = vmatprep.subr.mxu0 0.0
        %v2308 = vand.u32 %v1957, 4294901760
        %v2309 = vsub.f32 %v1957, %v2308
        %v2310 = vand.u32 %v2309, 4294901760
        %v2311 = vsub.f32 %v2309, %v2310
        %v2312 = vand.u32 %v2311, 4294901760
        %2313 = vmatpush1.msra.mxu0 %v2312
        %2314 = vmatprep.subr.mxu0 0.0
        %v2315 = vand.u32 %v1958, 4294901760
        %v2316 = vsub.f32 %v1958, %v2315
        %v2317 = vand.u32 %v2316, 4294901760
        %v2318 = vsub.f32 %v2316, %v2317
        %v2319 = vand.u32 %v2318, 4294901760
        %2320 = vmatpush1.msra.mxu0 %v2319
        %2321 = vmatprep.subr.mxu0 0.0
        %v2322 = vand.u32 %v1959, 4294901760
        %v2323 = vsub.f32 %v1959, %v2322
        %v2324 = vand.u32 %v2323, 4294901760
        %v2325 = vsub.f32 %v2323, %v2324
        %v2326 = vand.u32 %v2325, 4294901760
        %2327 = vmatpush1.msra.mxu0 %v2326
        %2328 = vmatprep.subr.mxu0 0.0
        %v2329 = vand.u32 %v1960, 4294901760
        %v2330 = vsub.f32 %v1960, %v2329
        %v2331 = vand.u32 %v2330, 4294901760
        %v2332 = vsub.f32 %v2330, %v2331
        %v2333 = vand.u32 %v2332, 4294901760
        %2334 = vmatpush1.msra.mxu0 %v2333
        %v2335 = vand.u32 %v1925, 4294901760
        %2336 = vmatprep.mubr.f32.mxu0 %v2335
        %v2337 = vand.u32 %v1923, 4294901760
        %2338 = vmatmul.mubr.f32.gmra.mrb[0].mxu0 %v2337
        %v2339 = vpop.f32.mrb[0].mxu0
        %v2340 = vadd.f32 %v2093, %v2339
        %v2341 = vpop.f32.mrb[0].mxu0
        %v2342 = vand.u32 %v1926, 4294901760
        %2343 = vmatprep.mubr.f32.mxu0 %v2342
        %v2344 = vand.u32 %v1924, 4294901760
        %2345 = vmatmul.mubr.f32.gmra.mrb[0].mxu0 %v2344
        %v2346 = vpop.f32.mrb[0].mxu0
        %v2347 = vadd.f32 %v2108, %v2346
        %v2348 = vpop.f32.mrb[0].mxu0
        %2349 = vdwg.mxu0
        %2350 = vmatprep.subr.mxu0 0.0
        %v2351 = vand.u32 %v1929, 4294901760
        %v2352 = vsub.f32 %v1929, %v2351
        %2353 = vmatpush1.msra.mxu0 %v2352
        %2354 = vmatprep.subr.mxu0 0.0
        %v2355 = vand.u32 %v1930, 4294901760
        %v2356 = vsub.f32 %v1930, %v2355
        %2357 = vmatpush1.msra.mxu0 %v2356
        %2358 = vmatprep.subr.mxu0 0.0
        %v2359 = vand.u32 %v1931, 4294901760
        %v2360 = vsub.f32 %v1931, %v2359
        %2361 = vmatpush1.msra.mxu0 %v2360
        %2362 = vmatprep.subr.mxu0 0.0
        %v2363 = vand.u32 %v1932, 4294901760
        %v2364 = vsub.f32 %v1932, %v2363
        %2365 = vmatpush1.msra.mxu0 %v2364
        %2366 = vmatprep.subr.mxu0 0.0
        %v2367 = vand.u32 %v1933, 4294901760
        %v2368 = vsub.f32 %v1933, %v2367
        %2369 = vmatpush1.msra.mxu0 %v2368
        %2370 = vmatprep.subr.mxu0 0.0
        %v2371 = vand.u32 %v1934, 4294901760
        %v2372 = vsub.f32 %v1934, %v2371
        %2373 = vmatpush1.msra.mxu0 %v2372
        %2374 = vmatprep.subr.mxu0 0.0
        %v2375 = vand.u32 %v1935, 4294901760
        %v2376 = vsub.f32 %v1935, %v2375
        %2377 = vmatpush1.msra.mxu0 %v2376
        %2378 = vmatprep.subr.mxu0 0.0
        %v2379 = vand.u32 %v1936, 4294901760
        %v2380 = vsub.f32 %v1936, %v2379
        %2381 = vmatpush1.msra.mxu0 %v2380
        %2382 = vmatprep.subr.mxu0 0.0
        %v2383 = vand.u32 %v1937, 4294901760
        %v2384 = vsub.f32 %v1937, %v2383
        %2385 = vmatpush1.msra.mxu0 %v2384
        %2386 = vmatprep.subr.mxu0 0.0
        %v2387 = vand.u32 %v1938, 4294901760
        %v2388 = vsub.f32 %v1938, %v2387
        %2389 = vmatpush1.msra.mxu0 %v2388
        %2390 = vmatprep.subr.mxu0 0.0
        %v2391 = vand.u32 %v1939, 4294901760
        %v2392 = vsub.f32 %v1939, %v2391
        %2393 = vmatpush1.msra.mxu0 %v2392
        %2394 = vmatprep.subr.mxu0 0.0
        %v2395 = vand.u32 %v1940, 4294901760
        %v2396 = vsub.f32 %v1940, %v2395
        %2397 = vmatpush1.msra.mxu0 %v2396
        %2398 = vmatprep.subr.mxu0 0.0
        %v2399 = vand.u32 %v1941, 4294901760
        %v2400 = vsub.f32 %v1941, %v2399
        %2401 = vmatpush1.msra.mxu0 %v2400
        %2402 = vmatprep.subr.mxu0 0.0
        %v2403 = vand.u32 %v1942, 4294901760
        %v2404 = vsub.f32 %v1942, %v2403
        %2405 = vmatpush1.msra.mxu0 %v2404
        %2406 = vmatprep.subr.mxu0 0.0
        %v2407 = vand.u32 %v1943, 4294901760
        %v2408 = vsub.f32 %v1943, %v2407
        %2409 = vmatpush1.msra.mxu0 %v2408
        %2410 = vmatprep.subr.mxu0 0.0
        %v2411 = vand.u32 %v1944, 4294901760
        %v2412 = vsub.f32 %v1944, %v2411
        %2413 = vmatpush1.msra.mxu0 %v2412
        %2414 = vmatprep.subr.mxu0 0.0
        %v2415 = vand.u32 %v1945, 4294901760
        %v2416 = vsub.f32 %v1945, %v2415
        %2417 = vmatpush1.msra.mxu0 %v2416
        %2418 = vmatprep.subr.mxu0 0.0
        %v2419 = vand.u32 %v1946, 4294901760
        %v2420 = vsub.f32 %v1946, %v2419
        %2421 = vmatpush1.msra.mxu0 %v2420
        %2422 = vmatprep.subr.mxu0 0.0
        %v2423 = vand.u32 %v1947, 4294901760
        %v2424 = vsub.f32 %v1947, %v2423
        %2425 = vmatpush1.msra.mxu0 %v2424
        %2426 = vmatprep.subr.mxu0 0.0
        %v2427 = vand.u32 %v1948, 4294901760
        %v2428 = vsub.f32 %v1948, %v2427
        %2429 = vmatpush1.msra.mxu0 %v2428
        %2430 = vmatprep.subr.mxu0 0.0
        %v2431 = vand.u32 %v1949, 4294901760
        %v2432 = vsub.f32 %v1949, %v2431
        %2433 = vmatpush1.msra.mxu0 %v2432
        %2434 = vmatprep.subr.mxu0 0.0
        %v2435 = vand.u32 %v1950, 4294901760
        %v2436 = vsub.f32 %v1950, %v2435
        %2437 = vmatpush1.msra.mxu0 %v2436
        %2438 = vmatprep.subr.mxu0 0.0
        %v2439 = vand.u32 %v1951, 4294901760
        %v2440 = vsub.f32 %v1951, %v2439
        %2441 = vmatpush1.msra.mxu0 %v2440
        %2442 = vmatprep.subr.mxu0 0.0
        %v2443 = vand.u32 %v1952, 4294901760
        %v2444 = vsub.f32 %v1952, %v2443
        %2445 = vmatpush1.msra.mxu0 %v2444
        %2446 = vmatprep.subr.mxu0 0.0
        %v2447 = vand.u32 %v1953, 4294901760
        %v2448 = vsub.f32 %v1953, %v2447
        %2449 = vmatpush1.msra.mxu0 %v2448
        %2450 = vmatprep.subr.mxu0 0.0
        %v2451 = vand.u32 %v1954, 4294901760
        %v2452 = vsub.f32 %v1954, %v2451
        %2453 = vmatpush1.msra.mxu0 %v2452
        %2454 = vmatprep.subr.mxu0 0.0
        %v2455 = vand.u32 %v1955, 4294901760
        %v2456 = vsub.f32 %v1955, %v2455
        %2457 = vmatpush1.msra.mxu0 %v2456
        %2458 = vmatprep.subr.mxu0 0.0
        %v2459 = vand.u32 %v1956, 4294901760
        %v2460 = vsub.f32 %v1956, %v2459
        %2461 = vmatpush1.msra.mxu0 %v2460
        %2462 = vmatprep.subr.mxu0 0.0
        %v2463 = vand.u32 %v1957, 4294901760
        %v2464 = vsub.f32 %v1957, %v2463
        %2465 = vmatpush1.msra.mxu0 %v2464
        %2466 = vmatprep.subr.mxu0 0.0
        %v2467 = vand.u32 %v1958, 4294901760
        %v2468 = vsub.f32 %v1958, %v2467
        %2469 = vmatpush1.msra.mxu0 %v2468
        %2470 = vmatprep.subr.mxu0 0.0
        %v2471 = vand.u32 %v1959, 4294901760
        %v2472 = vsub.f32 %v1959, %v2471
        %2473 = vmatpush1.msra.mxu0 %v2472
        %2474 = vmatprep.subr.mxu0 0.0
        %v2475 = vand.u32 %v1960, 4294901760
        %v2476 = vsub.f32 %v1960, %v2475
        %2477 = vmatpush1.msra.mxu0 %v2476
        %v2478 = vand.u32 %v1925, 4294901760
        %v2479 = vsub.f32 %v1925, %v2478
        %2480 = vmatprep.mubr.f32.mxu0 %v2479
        %v2481 = vand.u32 %v1923, 4294901760
        %v2482 = vsub.f32 %v1923, %v2481
        %2483 = vmatmul.mubr.f32.gmra.mrb[0].mxu0 %v2482
        %v2484 = vpop.f32.mrb[0].mxu0
        %v2485 = vadd.f32 %v2340, %v2484
        %v2486 = vpop.f32.mrb[0].mxu0
        %v2487 = vand.u32 %v1926, 4294901760
        %v2488 = vsub.f32 %v1926, %v2487
        %2489 = vmatprep.mubr.f32.mxu0 %v2488
        %v2490 = vand.u32 %v1924, 4294901760
        %v2491 = vsub.f32 %v1924, %v2490
        %2492 = vmatmul.mubr.f32.gmra.mrb[0].mxu0 %v2491
        %v2493 = vpop.f32.mrb[0].mxu0
        %v2494 = vadd.f32 %v2347, %v2493
        %v2495 = vpop.f32.mrb[0].mxu0
        %2496 = vdwg.mxu0
        %2497 = vmatprep.subr.mxu0 0.0
        %v2498 = vand.u32 %v1929, 4294901760
        %2499 = vmatpush1.msra.mxu0 %v2498
        %2500 = vmatprep.subr.mxu0 0.0
        %v2501 = vand.u32 %v1930, 4294901760
        %2502 = vmatpush1.msra.mxu0 %v2501
        %2503 = vmatprep.subr.mxu0 0.0
        %v2504 = vand.u32 %v1931, 4294901760
        %2505 = vmatpush1.msra.mxu0 %v2504
        %2506 = vmatprep.subr.mxu0 0.0
        %v2507 = vand.u32 %v1932, 4294901760
        %2508 = vmatpush1.msra.mxu0 %v2507
        %2509 = vmatprep.subr.mxu0 0.0
        %v2510 = vand.u32 %v1933, 4294901760
        %2511 = vmatpush1.msra.mxu0 %v2510
        %2512 = vmatprep.subr.mxu0 0.0
        %v2513 = vand.u32 %v1934, 4294901760
        %2514 = vmatpush1.msra.mxu0 %v2513
        %2515 = vmatprep.subr.mxu0 0.0
        %v2516 = vand.u32 %v1935, 4294901760
        %2517 = vmatpush1.msra.mxu0 %v2516
        %2518 = vmatprep.subr.mxu0 0.0
        %v2519 = vand.u32 %v1936, 4294901760
        %2520 = vmatpush1.msra.mxu0 %v2519
        %2521 = vmatprep.subr.mxu0 0.0
        %v2522 = vand.u32 %v1937, 4294901760
        %2523 = vmatpush1.msra.mxu0 %v2522
        %2524 = vmatprep.subr.mxu0 0.0
        %v2525 = vand.u32 %v1938, 4294901760
        %2526 = vmatpush1.msra.mxu0 %v2525
        %2527 = vmatprep.subr.mxu0 0.0
        %v2528 = vand.u32 %v1939, 4294901760
        %2529 = vmatpush1.msra.mxu0 %v2528
        %2530 = vmatprep.subr.mxu0 0.0
        %v2531 = vand.u32 %v1940, 4294901760
        %2532 = vmatpush1.msra.mxu0 %v2531
        %2533 = vmatprep.subr.mxu0 0.0
        %v2534 = vand.u32 %v1941, 4294901760
        %2535 = vmatpush1.msra.mxu0 %v2534
        %2536 = vmatprep.subr.mxu0 0.0
        %v2537 = vand.u32 %v1942, 4294901760
        %2538 = vmatpush1.msra.mxu0 %v2537
        %2539 = vmatprep.subr.mxu0 0.0
        %v2540 = vand.u32 %v1943, 4294901760
        %2541 = vmatpush1.msra.mxu0 %v2540
        %2542 = vmatprep.subr.mxu0 0.0
        %v2543 = vand.u32 %v1944, 4294901760
        %2544 = vmatpush1.msra.mxu0 %v2543
        %2545 = vmatprep.subr.mxu0 0.0
        %v2546 = vand.u32 %v1945, 4294901760
        %2547 = vmatpush1.msra.mxu0 %v2546
        %2548 = vmatprep.subr.mxu0 0.0
        %v2549 = vand.u32 %v1946, 4294901760
        %2550 = vmatpush1.msra.mxu0 %v2549
        %2551 = vmatprep.subr.mxu0 0.0
        %v2552 = vand.u32 %v1947, 4294901760
        %2553 = vmatpush1.msra.mxu0 %v2552
        %2554 = vmatprep.subr.mxu0 0.0
        %v2555 = vand.u32 %v1948, 4294901760
        %2556 = vmatpush1.msra.mxu0 %v2555
        %2557 = vmatprep.subr.mxu0 0.0
        %v2558 = vand.u32 %v1949, 4294901760
        %2559 = vmatpush1.msra.mxu0 %v2558
        %2560 = vmatprep.subr.mxu0 0.0
        %v2561 = vand.u32 %v1950, 4294901760
        %2562 = vmatpush1.msra.mxu0 %v2561
        %2563 = vmatprep.subr.mxu0 0.0
        %v2564 = vand.u32 %v1951, 4294901760
        %2565 = vmatpush1.msra.mxu0 %v2564
        %2566 = vmatprep.subr.mxu0 0.0
        %v2567 = vand.u32 %v1952, 4294901760
        %2568 = vmatpush1.msra.mxu0 %v2567
        %2569 = vmatprep.subr.mxu0 0.0
        %v2570 = vand.u32 %v1953, 4294901760
        %2571 = vmatpush1.msra.mxu0 %v2570
        %2572 = vmatprep.subr.mxu0 0.0
        %v2573 = vand.u32 %v1954, 4294901760
        %2574 = vmatpush1.msra.mxu0 %v2573
        %2575 = vmatprep.subr.mxu0 0.0
        %v2576 = vand.u32 %v1955, 4294901760
        %2577 = vmatpush1.msra.mxu0 %v2576
        %2578 = vmatprep.subr.mxu0 0.0
        %v2579 = vand.u32 %v1956, 4294901760
        %2580 = vmatpush1.msra.mxu0 %v2579
        %2581 = vmatprep.subr.mxu0 0.0
        %v2582 = vand.u32 %v1957, 4294901760
        %2583 = vmatpush1.msra.mxu0 %v2582
        %2584 = vmatprep.subr.mxu0 0.0
        %v2585 = vand.u32 %v1958, 4294901760
        %2586 = vmatpush1.msra.mxu0 %v2585
        %2587 = vmatprep.subr.mxu0 0.0
        %v2588 = vand.u32 %v1959, 4294901760
        %2589 = vmatpush1.msra.mxu0 %v2588
        %2590 = vmatprep.subr.mxu0 0.0
        %v2591 = vand.u32 %v1960, 4294901760
        %2592 = vmatpush1.msra.mxu0 %v2591
        %v2593 = vand.u32 %v1925, 4294901760
        %v2594 = vsub.f32 %v1925, %v2593
        %v2595 = vand.u32 %v2594, 4294901760
        %2596 = vmatprep.mubr.f32.mxu0 %v2595
        %v2597 = vand.u32 %v1923, 4294901760
        %v2598 = vsub.f32 %v1923, %v2597
        %v2599 = vand.u32 %v2598, 4294901760
        %2600 = vmatmul.mubr.f32.gmra.mrb[0].mxu0 %v2599
        %v2601 = vpop.f32.mrb[0].mxu0
        %v2602 = vadd.f32 %v2485, %v2601
        %v2603 = vpop.f32.mrb[0].mxu0
        %v2604 = vand.u32 %v1926, 4294901760
        %v2605 = vsub.f32 %v1926, %v2604
        %v2606 = vand.u32 %v2605, 4294901760
        %2607 = vmatprep.mubr.f32.mxu0 %v2606
        %v2608 = vand.u32 %v1924, 4294901760
        %v2609 = vsub.f32 %v1924, %v2608
        %v2610 = vand.u32 %v2609, 4294901760
        %2611 = vmatmul.mubr.f32.gmra.mrb[0].mxu0 %v2610
        %v2612 = vpop.f32.mrb[0].mxu0
        %v2613 = vadd.f32 %v2494, %v2612
        %v2614 = vpop.f32.mrb[0].mxu0
        %2615 = vdwg.mxu0
        %2616 = vmatprep.subr.mxu0 0.0
        %v2617 = vand.u32 %v1929, 4294901760
        %v2618 = vsub.f32 %v1929, %v2617
        %v2619 = vand.u32 %v2618, 4294901760
        %2620 = vmatpush1.msra.mxu0 %v2619
        %2621 = vmatprep.subr.mxu0 0.0
        %v2622 = vand.u32 %v1930, 4294901760
        %v2623 = vsub.f32 %v1930, %v2622
        %v2624 = vand.u32 %v2623, 4294901760
        %2625 = vmatpush1.msra.mxu0 %v2624
        %2626 = vmatprep.subr.mxu0 0.0
        %v2627 = vand.u32 %v1931, 4294901760
        %v2628 = vsub.f32 %v1931, %v2627
        %v2629 = vand.u32 %v2628, 4294901760
        %2630 = vmatpush1.msra.mxu0 %v2629
        %2631 = vmatprep.subr.mxu0 0.0
        %v2632 = vand.u32 %v1932, 4294901760
        %v2633 = vsub.f32 %v1932, %v2632
        %v2634 = vand.u32 %v2633, 4294901760
        %2635 = vmatpush1.msra.mxu0 %v2634
        %2636 = vmatprep.subr.mxu0 0.0
        %v2637 = vand.u32 %v1933, 4294901760
        %v2638 = vsub.f32 %v1933, %v2637
        %v2639 = vand.u32 %v2638, 4294901760
        %2640 = vmatpush1.msra.mxu0 %v2639
        %2641 = vmatprep.subr.mxu0 0.0
        %v2642 = vand.u32 %v1934, 4294901760
        %v2643 = vsub.f32 %v1934, %v2642
        %v2644 = vand.u32 %v2643, 4294901760
        %2645 = vmatpush1.msra.mxu0 %v2644
        %2646 = vmatprep.subr.mxu0 0.0
        %v2647 = vand.u32 %v1935, 4294901760
        %v2648 = vsub.f32 %v1935, %v2647
        %v2649 = vand.u32 %v2648, 4294901760
        %2650 = vmatpush1.msra.mxu0 %v2649
        %2651 = vmatprep.subr.mxu0 0.0
        %v2652 = vand.u32 %v1936, 4294901760
        %v2653 = vsub.f32 %v1936, %v2652
        %v2654 = vand.u32 %v2653, 4294901760
        %2655 = vmatpush1.msra.mxu0 %v2654
        %2656 = vmatprep.subr.mxu0 0.0
        %v2657 = vand.u32 %v1937, 4294901760
        %v2658 = vsub.f32 %v1937, %v2657
        %v2659 = vand.u32 %v2658, 4294901760
        %2660 = vmatpush1.msra.mxu0 %v2659
        %2661 = vmatprep.subr.mxu0 0.0
        %v2662 = vand.u32 %v1938, 4294901760
        %v2663 = vsub.f32 %v1938, %v2662
        %v2664 = vand.u32 %v2663, 4294901760
        %2665 = vmatpush1.msra.mxu0 %v2664
        %2666 = vmatprep.subr.mxu0 0.0
        %v2667 = vand.u32 %v1939, 4294901760
        %v2668 = vsub.f32 %v1939, %v2667
        %v2669 = vand.u32 %v2668, 4294901760
        %2670 = vmatpush1.msra.mxu0 %v2669
        %2671 = vmatprep.subr.mxu0 0.0
        %v2672 = vand.u32 %v1940, 4294901760
        %v2673 = vsub.f32 %v1940, %v2672
        %v2674 = vand.u32 %v2673, 4294901760
        %2675 = vmatpush1.msra.mxu0 %v2674
        %2676 = vmatprep.subr.mxu0 0.0
        %v2677 = vand.u32 %v1941, 4294901760
        %v2678 = vsub.f32 %v1941, %v2677
        %v2679 = vand.u32 %v2678, 4294901760
        %2680 = vmatpush1.msra.mxu0 %v2679
        %2681 = vmatprep.subr.mxu0 0.0
        %v2682 = vand.u32 %v1942, 4294901760
        %v2683 = vsub.f32 %v1942, %v2682
        %v2684 = vand.u32 %v2683, 4294901760
        %2685 = vmatpush1.msra.mxu0 %v2684
        %2686 = vmatprep.subr.mxu0 0.0
        %v2687 = vand.u32 %v1943, 4294901760
        %v2688 = vsub.f32 %v1943, %v2687
        %v2689 = vand.u32 %v2688, 4294901760
        %2690 = vmatpush1.msra.mxu0 %v2689
        %2691 = vmatprep.subr.mxu0 0.0
        %v2692 = vand.u32 %v1944, 4294901760
        %v2693 = vsub.f32 %v1944, %v2692
        %v2694 = vand.u32 %v2693, 4294901760
        %2695 = vmatpush1.msra.mxu0 %v2694
        %2696 = vmatprep.subr.mxu0 0.0
        %v2697 = vand.u32 %v1945, 4294901760
        %v2698 = vsub.f32 %v1945, %v2697
        %v2699 = vand.u32 %v2698, 4294901760
        %2700 = vmatpush1.msra.mxu0 %v2699
        %2701 = vmatprep.subr.mxu0 0.0
        %v2702 = vand.u32 %v1946, 4294901760
        %v2703 = vsub.f32 %v1946, %v2702
        %v2704 = vand.u32 %v2703, 4294901760
        %2705 = vmatpush1.msra.mxu0 %v2704
        %2706 = vmatprep.subr.mxu0 0.0
        %v2707 = vand.u32 %v1947, 4294901760
        %v2708 = vsub.f32 %v1947, %v2707
        %v2709 = vand.u32 %v2708, 4294901760
        %2710 = vmatpush1.msra.mxu0 %v2709
        %2711 = vmatprep.subr.mxu0 0.0
        %v2712 = vand.u32 %v1948, 4294901760
        %v2713 = vsub.f32 %v1948, %v2712
        %v2714 = vand.u32 %v2713, 4294901760
        %2715 = vmatpush1.msra.mxu0 %v2714
        %2716 = vmatprep.subr.mxu0 0.0
        %v2717 = vand.u32 %v1949, 4294901760
        %v2718 = vsub.f32 %v1949, %v2717
        %v2719 = vand.u32 %v2718, 4294901760
        %2720 = vmatpush1.msra.mxu0 %v2719
        %2721 = vmatprep.subr.mxu0 0.0
        %v2722 = vand.u32 %v1950, 4294901760
        %v2723 = vsub.f32 %v1950, %v2722
        %v2724 = vand.u32 %v2723, 4294901760
        %2725 = vmatpush1.msra.mxu0 %v2724
        %2726 = vmatprep.subr.mxu0 0.0
        %v2727 = vand.u32 %v1951, 4294901760
        %v2728 = vsub.f32 %v1951, %v2727
        %v2729 = vand.u32 %v2728, 4294901760
        %2730 = vmatpush1.msra.mxu0 %v2729
        %2731 = vmatprep.subr.mxu0 0.0
        %v2732 = vand.u32 %v1952, 4294901760
        %v2733 = vsub.f32 %v1952, %v2732
        %v2734 = vand.u32 %v2733, 4294901760
        %2735 = vmatpush1.msra.mxu0 %v2734
        %2736 = vmatprep.subr.mxu0 0.0
        %v2737 = vand.u32 %v1953, 4294901760
        %v2738 = vsub.f32 %v1953, %v2737
        %v2739 = vand.u32 %v2738, 4294901760
        %2740 = vmatpush1.msra.mxu0 %v2739
        %2741 = vmatprep.subr.mxu0 0.0
        %v2742 = vand.u32 %v1954, 4294901760
        %v2743 = vsub.f32 %v1954, %v2742
        %v2744 = vand.u32 %v2743, 4294901760
        %2745 = vmatpush1.msra.mxu0 %v2744
        %2746 = vmatprep.subr.mxu0 0.0
        %v2747 = vand.u32 %v1955, 4294901760
        %v2748 = vsub.f32 %v1955, %v2747
        %v2749 = vand.u32 %v2748, 4294901760
        %2750 = vmatpush1.msra.mxu0 %v2749
        %2751 = vmatprep.subr.mxu0 0.0
        %v2752 = vand.u32 %v1956, 4294901760
        %v2753 = vsub.f32 %v1956, %v2752
        %v2754 = vand.u32 %v2753, 4294901760
        %2755 = vmatpush1.msra.mxu0 %v2754
        %2756 = vmatprep.subr.mxu0 0.0
        %v2757 = vand.u32 %v1957, 4294901760
        %v2758 = vsub.f32 %v1957, %v2757
        %v2759 = vand.u32 %v2758, 4294901760
        %2760 = vmatpush1.msra.mxu0 %v2759
        %2761 = vmatprep.subr.mxu0 0.0
        %v2762 = vand.u32 %v1958, 4294901760
        %v2763 = vsub.f32 %v1958, %v2762
        %v2764 = vand.u32 %v2763, 4294901760
        %2765 = vmatpush1.msra.mxu0 %v2764
        %2766 = vmatprep.subr.mxu0 0.0
        %v2767 = vand.u32 %v1959, 4294901760
        %v2768 = vsub.f32 %v1959, %v2767
        %v2769 = vand.u32 %v2768, 4294901760
        %2770 = vmatpush1.msra.mxu0 %v2769
        %2771 = vmatprep.subr.mxu0 0.0
        %v2772 = vand.u32 %v1960, 4294901760
        %v2773 = vsub.f32 %v1960, %v2772
        %v2774 = vand.u32 %v2773, 4294901760
        %2775 = vmatpush1.msra.mxu0 %v2774
        %v2776 = vand.u32 %v1925, 4294901760
        %2777 = vmatprep.mubr.f32.mxu0 %v2776
        %v2778 = vand.u32 %v1923, 4294901760
        %2779 = vmatmul.mubr.f32.gmra.mrb[0].mxu0 %v2778
        %v2780 = vpop.f32.mrb[0].mxu0
        %v2781 = vadd.f32 %v2602, %v2780
        %v2782 = vpop.f32.mrb[0].mxu0
        %v2783 = vand.u32 %v1926, 4294901760
        %2784 = vmatprep.mubr.f32.mxu0 %v2783
        %v2785 = vand.u32 %v1924, 4294901760
        %2786 = vmatmul.mubr.f32.gmra.mrb[0].mxu0 %v2785
        %v2787 = vpop.f32.mrb[0].mxu0
        %v2788 = vadd.f32 %v2613, %v2787
        %v2789 = vpop.f32.mrb[0].mxu0
        %2790 = vdwg.mxu0
        %2791 = vmatprep.subr.mxu0 0.0
        %v2792 = vand.u32 %v1929, 4294901760
        %2793 = vmatpush1.msra.mxu0 %v2792
        %2794 = vmatprep.subr.mxu0 0.0
        %v2795 = vand.u32 %v1930, 4294901760
        %2796 = vmatpush1.msra.mxu0 %v2795
        %2797 = vmatprep.subr.mxu0 0.0
        %v2798 = vand.u32 %v1931, 4294901760
        %2799 = vmatpush1.msra.mxu0 %v2798
        %2800 = vmatprep.subr.mxu0 0.0
        %v2801 = vand.u32 %v1932, 4294901760
        %2802 = vmatpush1.msra.mxu0 %v2801
        %2803 = vmatprep.subr.mxu0 0.0
        %v2804 = vand.u32 %v1933, 4294901760
        %2805 = vmatpush1.msra.mxu0 %v2804
        %2806 = vmatprep.subr.mxu0 0.0
        %v2807 = vand.u32 %v1934, 4294901760
        %2808 = vmatpush1.msra.mxu0 %v2807
        %2809 = vmatprep.subr.mxu0 0.0
        %v2810 = vand.u32 %v1935, 4294901760
        %2811 = vmatpush1.msra.mxu0 %v2810
        %2812 = vmatprep.subr.mxu0 0.0
        %v2813 = vand.u32 %v1936, 4294901760
        %2814 = vmatpush1.msra.mxu0 %v2813
        %2815 = vmatprep.subr.mxu0 0.0
        %v2816 = vand.u32 %v1937, 4294901760
        %2817 = vmatpush1.msra.mxu0 %v2816
        %2818 = vmatprep.subr.mxu0 0.0
        %v2819 = vand.u32 %v1938, 4294901760
        %2820 = vmatpush1.msra.mxu0 %v2819
        %2821 = vmatprep.subr.mxu0 0.0
        %v2822 = vand.u32 %v1939, 4294901760
        %2823 = vmatpush1.msra.mxu0 %v2822
        %2824 = vmatprep.subr.mxu0 0.0
        %v2825 = vand.u32 %v1940, 4294901760
        %2826 = vmatpush1.msra.mxu0 %v2825
        %2827 = vmatprep.subr.mxu0 0.0
        %v2828 = vand.u32 %v1941, 4294901760
        %2829 = vmatpush1.msra.mxu0 %v2828
        %2830 = vmatprep.subr.mxu0 0.0
        %v2831 = vand.u32 %v1942, 4294901760
        %2832 = vmatpush1.msra.mxu0 %v2831
        %2833 = vmatprep.subr.mxu0 0.0
        %v2834 = vand.u32 %v1943, 4294901760
        %2835 = vmatpush1.msra.mxu0 %v2834
        %2836 = vmatprep.subr.mxu0 0.0
        %v2837 = vand.u32 %v1944, 4294901760
        %2838 = vmatpush1.msra.mxu0 %v2837
        %2839 = vmatprep.subr.mxu0 0.0
        %v2840 = vand.u32 %v1945, 4294901760
        %2841 = vmatpush1.msra.mxu0 %v2840
        %2842 = vmatprep.subr.mxu0 0.0
        %v2843 = vand.u32 %v1946, 4294901760
        %2844 = vmatpush1.msra.mxu0 %v2843
        %2845 = vmatprep.subr.mxu0 0.0
        %v2846 = vand.u32 %v1947, 4294901760
        %2847 = vmatpush1.msra.mxu0 %v2846
        %2848 = vmatprep.subr.mxu0 0.0
        %v2849 = vand.u32 %v1948, 4294901760
        %2850 = vmatpush1.msra.mxu0 %v2849
        %2851 = vmatprep.subr.mxu0 0.0
        %v2852 = vand.u32 %v1949, 4294901760
        %2853 = vmatpush1.msra.mxu0 %v2852
        %2854 = vmatprep.subr.mxu0 0.0
        %v2855 = vand.u32 %v1950, 4294901760
        %2856 = vmatpush1.msra.mxu0 %v2855
        %2857 = vmatprep.subr.mxu0 0.0
        %v2858 = vand.u32 %v1951, 4294901760
        %2859 = vmatpush1.msra.mxu0 %v2858
        %2860 = vmatprep.subr.mxu0 0.0
        %v2861 = vand.u32 %v1952, 4294901760
        %2862 = vmatpush1.msra.mxu0 %v2861
        %2863 = vmatprep.subr.mxu0 0.0
        %v2864 = vand.u32 %v1953, 4294901760
        %2865 = vmatpush1.msra.mxu0 %v2864
        %2866 = vmatprep.subr.mxu0 0.0
        %v2867 = vand.u32 %v1954, 4294901760
        %2868 = vmatpush1.msra.mxu0 %v2867
        %2869 = vmatprep.subr.mxu0 0.0
        %v2870 = vand.u32 %v1955, 4294901760
        %2871 = vmatpush1.msra.mxu0 %v2870
        %2872 = vmatprep.subr.mxu0 0.0
        %v2873 = vand.u32 %v1956, 4294901760
        %2874 = vmatpush1.msra.mxu0 %v2873
        %2875 = vmatprep.subr.mxu0 0.0
        %v2876 = vand.u32 %v1957, 4294901760
        %2877 = vmatpush1.msra.mxu0 %v2876
        %2878 = vmatprep.subr.mxu0 0.0
        %v2879 = vand.u32 %v1958, 4294901760
        %2880 = vmatpush1.msra.mxu0 %v2879
        %2881 = vmatprep.subr.mxu0 0.0
        %v2882 = vand.u32 %v1959, 4294901760
        %2883 = vmatpush1.msra.mxu0 %v2882
        %2884 = vmatprep.subr.mxu0 0.0
        %v2885 = vand.u32 %v1960, 4294901760
        %2886 = vmatpush1.msra.mxu0 %v2885
        %v2887 = vand.u32 %v1925, 4294901760
        %2888 = vmatprep.mubr.f32.mxu0 %v2887
        %v2889 = vand.u32 %v1923, 4294901760
        %2890 = vmatmul.mubr.f32.gmra.mrb[0].mxu0 %v2889
        %v2891 = vpop.f32.mrb[0].mxu0
        %v2892 = vadd.f32 %v2781, %v2891
        %v2893 = vpop.f32.mrb[0].mxu0
        %v2894 = vand.u32 %v1926, 4294901760
        %2895 = vmatprep.mubr.f32.mxu0 %v2894
        %v2896 = vand.u32 %v1924, 4294901760
        %2897 = vmatmul.mubr.f32.gmra.mrb[0].mxu0 %v2896
        %v2898 = vpop.f32.mrb[0].mxu0
        %v2899 = vadd.f32 %v2788, %v2898
        %v2900 = vpop.f32.mrb[0].mxu0
        %2901 = vdwg.mxu0
        %2902 = vmatprep.subr.mxu0 0.0
        %v2903 = vand.u32 %v1961, 4294901760
        %2904 = vmatpush1.msra.mxu0 %v2903
        %2905 = vmatprep.subr.mxu0 0.0
        %v2906 = vand.u32 %v1962, 4294901760
        %2907 = vmatpush1.msra.mxu0 %v2906
        %2908 = vmatprep.subr.mxu0 0.0
        %v2909 = vand.u32 %v1963, 4294901760
        %2910 = vmatpush1.msra.mxu0 %v2909
        %2911 = vmatprep.subr.mxu0 0.0
        %v2912 = vand.u32 %v1964, 4294901760
        %2913 = vmatpush1.msra.mxu0 %v2912
        %2914 = vmatprep.subr.mxu0 0.0
        %v2915 = vand.u32 %v1965, 4294901760
        %2916 = vmatpush1.msra.mxu0 %v2915
        %2917 = vmatprep.subr.mxu0 0.0
        %v2918 = vand.u32 %v1966, 4294901760
        %2919 = vmatpush1.msra.mxu0 %v2918
        %2920 = vmatprep.subr.mxu0 0.0
        %v2921 = vand.u32 %v1967, 4294901760
        %2922 = vmatpush1.msra.mxu0 %v2921
        %2923 = vmatprep.subr.mxu0 0.0
        %v2924 = vand.u32 %v1968, 4294901760
        %2925 = vmatpush1.msra.mxu0 %v2924
        %2926 = vmatprep.subr.mxu0 0.0
        %v2927 = vand.u32 %v1969, 4294901760
        %2928 = vmatpush1.msra.mxu0 %v2927
        %2929 = vmatprep.subr.mxu0 0.0
        %v2930 = vand.u32 %v1970, 4294901760
        %2931 = vmatpush1.msra.mxu0 %v2930
        %2932 = vmatprep.subr.mxu0 0.0
        %v2933 = vand.u32 %v1971, 4294901760
        %2934 = vmatpush1.msra.mxu0 %v2933
        %2935 = vmatprep.subr.mxu0 0.0
        %v2936 = vand.u32 %v1972, 4294901760
        %2937 = vmatpush1.msra.mxu0 %v2936
        %2938 = vmatprep.subr.mxu0 0.0
        %v2939 = vand.u32 %v1973, 4294901760
        %2940 = vmatpush1.msra.mxu0 %v2939
        %2941 = vmatprep.subr.mxu0 0.0
        %v2942 = vand.u32 %v1974, 4294901760
        %2943 = vmatpush1.msra.mxu0 %v2942
        %2944 = vmatprep.subr.mxu0 0.0
        %v2945 = vand.u32 %v1975, 4294901760
        %2946 = vmatpush1.msra.mxu0 %v2945
        %2947 = vmatprep.subr.mxu0 0.0
        %v2948 = vand.u32 %v1976, 4294901760
        %2949 = vmatpush1.msra.mxu0 %v2948
        %2950 = vmatprep.subr.mxu0 0.0
        %2951 = vmatpush1.msra.mxu0 0.0
        %2952 = vmatprep.subr.mxu0 0.0
        %2953 = vmatpush1.msra.mxu0 0.0
        %2954 = vmatprep.subr.mxu0 0.0
        %2955 = vmatpush1.msra.mxu0 0.0
        %2956 = vmatprep.subr.mxu0 0.0
        %2957 = vmatpush1.msra.mxu0 0.0
        %2958 = vmatprep.subr.mxu0 0.0
        %2959 = vmatpush1.msra.mxu0 0.0
        %2960 = vmatprep.subr.mxu0 0.0
        %2961 = vmatpush1.msra.mxu0 0.0
        %2962 = vmatprep.subr.mxu0 0.0
        %2963 = vmatpush1.msra.mxu0 0.0
        %2964 = vmatprep.subr.mxu0 0.0
        %2965 = vmatpush1.msra.mxu0 0.0
        %2966 = vmatprep.subr.mxu0 0.0
        %2967 = vmatpush1.msra.mxu0 0.0
        %2968 = vmatprep.subr.mxu0 0.0
        %2969 = vmatpush1.msra.mxu0 0.0
        %2970 = vmatprep.subr.mxu0 0.0
        %2971 = vmatpush1.msra.mxu0 0.0
        %2972 = vmatprep.subr.mxu0 0.0
        %2973 = vmatpush1.msra.mxu0 0.0
        %2974 = vmatprep.subr.mxu0 0.0
        %2975 = vmatpush1.msra.mxu0 0.0
        %2976 = vmatprep.subr.mxu0 0.0
        %2977 = vmatpush1.msra.mxu0 0.0
        %2978 = vmatprep.subr.mxu0 0.0
        %2979 = vmatpush1.msra.mxu0 0.0
        %2980 = vmatprep.subr.mxu0 0.0
        %2981 = vmatpush1.msra.mxu0 0.0
        %2982 = vmatprep.mubr.f32.mxu0 0.0
        %v2983 = vand.u32 %v1927, 4294901760
        %v2984 = vsub.f32 %v1927, %v2983
        %v2985 = vand.u32 %v2984, 4294901760
        %v2986 = vsub.f32 %v2984, %v2985
        %v2987 = vand.u32 %v2986, 4294901760
        %2988 = vmatmul.mubr.f32.gmra.mrb[0].mxu0 %v2987
        %v2989 = vpop.f32.mrb[0].mxu0
        %v2990 = vadd.f32 %v2892, %v2989
        %v2991 = vpop.f32.mrb[0].mxu0
        %2992 = vmatprep.mubr.f32.mxu0 0.0
        %v2993 = vand.u32 %v1928, 4294901760
        %v2994 = vsub.f32 %v1928, %v2993
        %v2995 = vand.u32 %v2994, 4294901760
        %v2996 = vsub.f32 %v2994, %v2995
        %v2997 = vand.u32 %v2996, 4294901760
        %2998 = vmatmul.mubr.f32.gmra.mrb[0].mxu0 %v2997
        %v2999 = vpop.f32.mrb[0].mxu0
        %v3000 = vadd.f32 %v2899, %v2999
        %v3001 = vpop.f32.mrb[0].mxu0
        %3002 = vdwg.mxu0
        %3003 = vmatprep.subr.mxu0 0.0
        %v3004 = vand.u32 %v1961, 4294901760
        %v3005 = vsub.f32 %v1961, %v3004
        %v3006 = vand.u32 %v3005, 4294901760
        %v3007 = vsub.f32 %v3005, %v3006
        %v3008 = vand.u32 %v3007, 4294901760
        %3009 = vmatpush1.msra.mxu0 %v3008
        %3010 = vmatprep.subr.mxu0 0.0
        %v3011 = vand.u32 %v1962, 4294901760
        %v3012 = vsub.f32 %v1962, %v3011
        %v3013 = vand.u32 %v3012, 4294901760
        %v3014 = vsub.f32 %v3012, %v3013
        %v3015 = vand.u32 %v3014, 4294901760
        %3016 = vmatpush1.msra.mxu0 %v3015
        %3017 = vmatprep.subr.mxu0 0.0
        %v3018 = vand.u32 %v1963, 4294901760
        %v3019 = vsub.f32 %v1963, %v3018
        %v3020 = vand.u32 %v3019, 4294901760
        %v3021 = vsub.f32 %v3019, %v3020
        %v3022 = vand.u32 %v3021, 4294901760
        %3023 = vmatpush1.msra.mxu0 %v3022
        %3024 = vmatprep.subr.mxu0 0.0
        %v3025 = vand.u32 %v1964, 4294901760
        %v3026 = vsub.f32 %v1964, %v3025
        %v3027 = vand.u32 %v3026, 4294901760
        %v3028 = vsub.f32 %v3026, %v3027
        %v3029 = vand.u32 %v3028, 4294901760
        %3030 = vmatpush1.msra.mxu0 %v3029
        %3031 = vmatprep.subr.mxu0 0.0
        %v3032 = vand.u32 %v1965, 4294901760
        %v3033 = vsub.f32 %v1965, %v3032
        %v3034 = vand.u32 %v3033, 4294901760
        %v3035 = vsub.f32 %v3033, %v3034
        %v3036 = vand.u32 %v3035, 4294901760
        %3037 = vmatpush1.msra.mxu0 %v3036
        %3038 = vmatprep.subr.mxu0 0.0
        %v3039 = vand.u32 %v1966, 4294901760
        %v3040 = vsub.f32 %v1966, %v3039
        %v3041 = vand.u32 %v3040, 4294901760
        %v3042 = vsub.f32 %v3040, %v3041
        %v3043 = vand.u32 %v3042, 4294901760
        %3044 = vmatpush1.msra.mxu0 %v3043
        %3045 = vmatprep.subr.mxu0 0.0
        %v3046 = vand.u32 %v1967, 4294901760
        %v3047 = vsub.f32 %v1967, %v3046
        %v3048 = vand.u32 %v3047, 4294901760
        %v3049 = vsub.f32 %v3047, %v3048
        %v3050 = vand.u32 %v3049, 4294901760
        %3051 = vmatpush1.msra.mxu0 %v3050
        %3052 = vmatprep.subr.mxu0 0.0
        %v3053 = vand.u32 %v1968, 4294901760
        %v3054 = vsub.f32 %v1968, %v3053
        %v3055 = vand.u32 %v3054, 4294901760
        %v3056 = vsub.f32 %v3054, %v3055
        %v3057 = vand.u32 %v3056, 4294901760
        %3058 = vmatpush1.msra.mxu0 %v3057
        %3059 = vmatprep.subr.mxu0 0.0
        %v3060 = vand.u32 %v1969, 4294901760
        %v3061 = vsub.f32 %v1969, %v3060
        %v3062 = vand.u32 %v3061, 4294901760
        %v3063 = vsub.f32 %v3061, %v3062
        %v3064 = vand.u32 %v3063, 4294901760
        %3065 = vmatpush1.msra.mxu0 %v3064
        %3066 = vmatprep.subr.mxu0 0.0
        %v3067 = vand.u32 %v1970, 4294901760
        %v3068 = vsub.f32 %v1970, %v3067
        %v3069 = vand.u32 %v3068, 4294901760
        %v3070 = vsub.f32 %v3068, %v3069
        %v3071 = vand.u32 %v3070, 4294901760
        %3072 = vmatpush1.msra.mxu0 %v3071
        %3073 = vmatprep.subr.mxu0 0.0
        %v3074 = vand.u32 %v1971, 4294901760
        %v3075 = vsub.f32 %v1971, %v3074
        %v3076 = vand.u32 %v3075, 4294901760
        %v3077 = vsub.f32 %v3075, %v3076
        %v3078 = vand.u32 %v3077, 4294901760
        %3079 = vmatpush1.msra.mxu0 %v3078
        %3080 = vmatprep.subr.mxu0 0.0
        %v3081 = vand.u32 %v1972, 4294901760
        %v3082 = vsub.f32 %v1972, %v3081
        %v3083 = vand.u32 %v3082, 4294901760
        %v3084 = vsub.f32 %v3082, %v3083
        %v3085 = vand.u32 %v3084, 4294901760
        %3086 = vmatpush1.msra.mxu0 %v3085
        %3087 = vmatprep.subr.mxu0 0.0
        %v3088 = vand.u32 %v1973, 4294901760
        %v3089 = vsub.f32 %v1973, %v3088
        %v3090 = vand.u32 %v3089, 4294901760
        %v3091 = vsub.f32 %v3089, %v3090
        %v3092 = vand.u32 %v3091, 4294901760
        %3093 = vmatpush1.msra.mxu0 %v3092
        %3094 = vmatprep.subr.mxu0 0.0
        %v3095 = vand.u32 %v1974, 4294901760
        %v3096 = vsub.f32 %v1974, %v3095
        %v3097 = vand.u32 %v3096, 4294901760
        %v3098 = vsub.f32 %v3096, %v3097
        %v3099 = vand.u32 %v3098, 4294901760
        %3100 = vmatpush1.msra.mxu0 %v3099
        %3101 = vmatprep.subr.mxu0 0.0
        %v3102 = vand.u32 %v1975, 4294901760
        %v3103 = vsub.f32 %v1975, %v3102
        %v3104 = vand.u32 %v3103, 4294901760
        %v3105 = vsub.f32 %v3103, %v3104
        %v3106 = vand.u32 %v3105, 4294901760
        %3107 = vmatpush1.msra.mxu0 %v3106
        %3108 = vmatprep.subr.mxu0 0.0
        %v3109 = vand.u32 %v1976, 4294901760
        %v3110 = vsub.f32 %v1976, %v3109
        %v3111 = vand.u32 %v3110, 4294901760
        %v3112 = vsub.f32 %v3110, %v3111
        %v3113 = vand.u32 %v3112, 4294901760
        %3114 = vmatpush1.msra.mxu0 %v3113
        %3115 = vmatprep.subr.mxu0 0.0
        %3116 = vmatpush1.msra.mxu0 0.0
        %3117 = vmatprep.subr.mxu0 0.0
        %3118 = vmatpush1.msra.mxu0 0.0
        %3119 = vmatprep.subr.mxu0 0.0
        %3120 = vmatpush1.msra.mxu0 0.0
        %3121 = vmatprep.subr.mxu0 0.0
        %3122 = vmatpush1.msra.mxu0 0.0
        %3123 = vmatprep.subr.mxu0 0.0
        %3124 = vmatpush1.msra.mxu0 0.0
        %3125 = vmatprep.subr.mxu0 0.0
        %3126 = vmatpush1.msra.mxu0 0.0
        %3127 = vmatprep.subr.mxu0 0.0
        %3128 = vmatpush1.msra.mxu0 0.0
        %3129 = vmatprep.subr.mxu0 0.0
        %3130 = vmatpush1.msra.mxu0 0.0
        %3131 = vmatprep.subr.mxu0 0.0
        %3132 = vmatpush1.msra.mxu0 0.0
        %3133 = vmatprep.subr.mxu0 0.0
        %3134 = vmatpush1.msra.mxu0 0.0
        %3135 = vmatprep.subr.mxu0 0.0
        %3136 = vmatpush1.msra.mxu0 0.0
        %3137 = vmatprep.subr.mxu0 0.0
        %3138 = vmatpush1.msra.mxu0 0.0
        %3139 = vmatprep.subr.mxu0 0.0
        %3140 = vmatpush1.msra.mxu0 0.0
        %3141 = vmatprep.subr.mxu0 0.0
        %3142 = vmatpush1.msra.mxu0 0.0
        %3143 = vmatprep.subr.mxu0 0.0
        %3144 = vmatpush1.msra.mxu0 0.0
        %3145 = vmatprep.subr.mxu0 0.0
        %3146 = vmatpush1.msra.mxu0 0.0
        %3147 = vmatprep.mubr.f32.mxu0 0.0
        %v3148 = vand.u32 %v1927, 4294901760
        %3149 = vmatmul.mubr.f32.gmra.mrb[0].mxu0 %v3148
        %v3150 = vpop.f32.mrb[0].mxu0
        %v3151 = vadd.f32 %v2990, %v3150
        %v3152 = vpop.f32.mrb[0].mxu0
        %3153 = vmatprep.mubr.f32.mxu0 0.0
        %v3154 = vand.u32 %v1928, 4294901760
        %3155 = vmatmul.mubr.f32.gmra.mrb[0].mxu0 %v3154
        %v3156 = vpop.f32.mrb[0].mxu0
        %v3157 = vadd.f32 %v3000, %v3156
        %v3158 = vpop.f32.mrb[0].mxu0
        %3159 = vdwg.mxu0
        %3160 = vmatprep.subr.mxu0 0.0
        %v3161 = vand.u32 %v1961, 4294901760
        %v3162 = vsub.f32 %v1961, %v3161
        %3163 = vmatpush1.msra.mxu0 %v3162
        %3164 = vmatprep.subr.mxu0 0.0
        %v3165 = vand.u32 %v1962, 4294901760
        %v3166 = vsub.f32 %v1962, %v3165
        %3167 = vmatpush1.msra.mxu0 %v3166
        %3168 = vmatprep.subr.mxu0 0.0
        %v3169 = vand.u32 %v1963, 4294901760
        %v3170 = vsub.f32 %v1963, %v3169
        %3171 = vmatpush1.msra.mxu0 %v3170
        %3172 = vmatprep.subr.mxu0 0.0
        %v3173 = vand.u32 %v1964, 4294901760
        %v3174 = vsub.f32 %v1964, %v3173
        %3175 = vmatpush1.msra.mxu0 %v3174
        %3176 = vmatprep.subr.mxu0 0.0
        %v3177 = vand.u32 %v1965, 4294901760
        %v3178 = vsub.f32 %v1965, %v3177
        %3179 = vmatpush1.msra.mxu0 %v3178
        %3180 = vmatprep.subr.mxu0 0.0
        %v3181 = vand.u32 %v1966, 4294901760
        %v3182 = vsub.f32 %v1966, %v3181
        %3183 = vmatpush1.msra.mxu0 %v3182
        %3184 = vmatprep.subr.mxu0 0.0
        %v3185 = vand.u32 %v1967, 4294901760
        %v3186 = vsub.f32 %v1967, %v3185
        %3187 = vmatpush1.msra.mxu0 %v3186
        %3188 = vmatprep.subr.mxu0 0.0
        %v3189 = vand.u32 %v1968, 4294901760
        %v3190 = vsub.f32 %v1968, %v3189
        %3191 = vmatpush1.msra.mxu0 %v3190
        %3192 = vmatprep.subr.mxu0 0.0
        %v3193 = vand.u32 %v1969, 4294901760
        %v3194 = vsub.f32 %v1969, %v3193
        %3195 = vmatpush1.msra.mxu0 %v3194
        %3196 = vmatprep.subr.mxu0 0.0
        %v3197 = vand.u32 %v1970, 4294901760
        %v3198 = vsub.f32 %v1970, %v3197
        %3199 = vmatpush1.msra.mxu0 %v3198
        %3200 = vmatprep.subr.mxu0 0.0
        %v3201 = vand.u32 %v1971, 4294901760
        %v3202 = vsub.f32 %v1971, %v3201
        %3203 = vmatpush1.msra.mxu0 %v3202
        %3204 = vmatprep.subr.mxu0 0.0
        %v3205 = vand.u32 %v1972, 4294901760
        %v3206 = vsub.f32 %v1972, %v3205
        %3207 = vmatpush1.msra.mxu0 %v3206
        %3208 = vmatprep.subr.mxu0 0.0
        %v3209 = vand.u32 %v1973, 4294901760
        %v3210 = vsub.f32 %v1973, %v3209
        %3211 = vmatpush1.msra.mxu0 %v3210
        %3212 = vmatprep.subr.mxu0 0.0
        %v3213 = vand.u32 %v1974, 4294901760
        %v3214 = vsub.f32 %v1974, %v3213
        %3215 = vmatpush1.msra.mxu0 %v3214
        %3216 = vmatprep.subr.mxu0 0.0
        %v3217 = vand.u32 %v1975, 4294901760
        %v3218 = vsub.f32 %v1975, %v3217
        %3219 = vmatpush1.msra.mxu0 %v3218
        %3220 = vmatprep.subr.mxu0 0.0
        %v3221 = vand.u32 %v1976, 4294901760
        %v3222 = vsub.f32 %v1976, %v3221
        %3223 = vmatpush1.msra.mxu0 %v3222
        %3224 = vmatprep.subr.mxu0 0.0
        %3225 = vmatpush1.msra.mxu0 0.0
        %3226 = vmatprep.subr.mxu0 0.0
        %3227 = vmatpush1.msra.mxu0 0.0
        %3228 = vmatprep.subr.mxu0 0.0
        %3229 = vmatpush1.msra.mxu0 0.0
        %3230 = vmatprep.subr.mxu0 0.0
        %3231 = vmatpush1.msra.mxu0 0.0
        %3232 = vmatprep.subr.mxu0 0.0
        %3233 = vmatpush1.msra.mxu0 0.0
        %3234 = vmatprep.subr.mxu0 0.0
        %3235 = vmatpush1.msra.mxu0 0.0
        %3236 = vmatprep.subr.mxu0 0.0
        %3237 = vmatpush1.msra.mxu0 0.0
        %3238 = vmatprep.subr.mxu0 0.0
        %3239 = vmatpush1.msra.mxu0 0.0
        %3240 = vmatprep.subr.mxu0 0.0
        %3241 = vmatpush1.msra.mxu0 0.0
        %3242 = vmatprep.subr.mxu0 0.0
        %3243 = vmatpush1.msra.mxu0 0.0
        %3244 = vmatprep.subr.mxu0 0.0
        %3245 = vmatpush1.msra.mxu0 0.0
        %3246 = vmatprep.subr.mxu0 0.0
        %3247 = vmatpush1.msra.mxu0 0.0
        %3248 = vmatprep.subr.mxu0 0.0
        %3249 = vmatpush1.msra.mxu0 0.0
        %3250 = vmatprep.subr.mxu0 0.0
        %3251 = vmatpush1.msra.mxu0 0.0
        %3252 = vmatprep.subr.mxu0 0.0
        %3253 = vmatpush1.msra.mxu0 0.0
        %3254 = vmatprep.subr.mxu0 0.0
        %3255 = vmatpush1.msra.mxu0 0.0
        %3256 = vmatprep.mubr.f32.mxu0 0.0
        %v3257 = vand.u32 %v1927, 4294901760
        %v3258 = vsub.f32 %v1927, %v3257
        %3259 = vmatmul.mubr.f32.gmra.mrb[0].mxu0 %v3258
        %v3260 = vpop.f32.mrb[0].mxu0
        %v3261 = vadd.f32 %v3151, %v3260
        %v3262 = vpop.f32.mrb[0].mxu0
        %3263 = vmatprep.mubr.f32.mxu0 0.0
        %v3264 = vand.u32 %v1928, 4294901760
        %v3265 = vsub.f32 %v1928, %v3264
        %3266 = vmatmul.mubr.f32.gmra.mrb[0].mxu0 %v3265
        %v3267 = vpop.f32.mrb[0].mxu0
        %v3268 = vadd.f32 %v3157, %v3267
        %v3269 = vpop.f32.mrb[0].mxu0
        %3270 = vdwg.mxu0
        %3271 = vmatprep.subr.mxu0 0.0
        %v3272 = vand.u32 %v1961, 4294901760
        %3273 = vmatpush1.msra.mxu0 %v3272
        %3274 = vmatprep.subr.mxu0 0.0
        %v3275 = vand.u32 %v1962, 4294901760
        %3276 = vmatpush1.msra.mxu0 %v3275
        %3277 = vmatprep.subr.mxu0 0.0
        %v3278 = vand.u32 %v1963, 4294901760
        %3279 = vmatpush1.msra.mxu0 %v3278
        %3280 = vmatprep.subr.mxu0 0.0
        %v3281 = vand.u32 %v1964, 4294901760
        %3282 = vmatpush1.msra.mxu0 %v3281
        %3283 = vmatprep.subr.mxu0 0.0
        %v3284 = vand.u32 %v1965, 4294901760
        %3285 = vmatpush1.msra.mxu0 %v3284
        %3286 = vmatprep.subr.mxu0 0.0
        %v3287 = vand.u32 %v1966, 4294901760
        %3288 = vmatpush1.msra.mxu0 %v3287
        %3289 = vmatprep.subr.mxu0 0.0
        %v3290 = vand.u32 %v1967, 4294901760
        %3291 = vmatpush1.msra.mxu0 %v3290
        %3292 = vmatprep.subr.mxu0 0.0
        %v3293 = vand.u32 %v1968, 4294901760
        %3294 = vmatpush1.msra.mxu0 %v3293
        %3295 = vmatprep.subr.mxu0 0.0
        %v3296 = vand.u32 %v1969, 4294901760
        %3297 = vmatpush1.msra.mxu0 %v3296
        %3298 = vmatprep.subr.mxu0 0.0
        %v3299 = vand.u32 %v1970, 4294901760
        %3300 = vmatpush1.msra.mxu0 %v3299
        %3301 = vmatprep.subr.mxu0 0.0
        %v3302 = vand.u32 %v1971, 4294901760
        %3303 = vmatpush1.msra.mxu0 %v3302
        %3304 = vmatprep.subr.mxu0 0.0
        %v3305 = vand.u32 %v1972, 4294901760
        %3306 = vmatpush1.msra.mxu0 %v3305
        %3307 = vmatprep.subr.mxu0 0.0
        %v3308 = vand.u32 %v1973, 4294901760
        %3309 = vmatpush1.msra.mxu0 %v3308
        %3310 = vmatprep.subr.mxu0 0.0
        %v3311 = vand.u32 %v1974, 4294901760
        %3312 = vmatpush1.msra.mxu0 %v3311
        %3313 = vmatprep.subr.mxu0 0.0
        %v3314 = vand.u32 %v1975, 4294901760
        %3315 = vmatpush1.msra.mxu0 %v3314
        %3316 = vmatprep.subr.mxu0 0.0
        %v3317 = vand.u32 %v1976, 4294901760
        %3318 = vmatpush1.msra.mxu0 %v3317
        %3319 = vmatprep.subr.mxu0 0.0
        %3320 = vmatpush1.msra.mxu0 0.0
        %3321 = vmatprep.subr.mxu0 0.0
        %3322 = vmatpush1.msra.mxu0 0.0
        %3323 = vmatprep.subr.mxu0 0.0
        %3324 = vmatpush1.msra.mxu0 0.0
        %3325 = vmatprep.subr.mxu0 0.0
        %3326 = vmatpush1.msra.mxu0 0.0
        %3327 = vmatprep.subr.mxu0 0.0
        %3328 = vmatpush1.msra.mxu0 0.0
        %3329 = vmatprep.subr.mxu0 0.0
        %3330 = vmatpush1.msra.mxu0 0.0
        %3331 = vmatprep.subr.mxu0 0.0
        %3332 = vmatpush1.msra.mxu0 0.0
        %3333 = vmatprep.subr.mxu0 0.0
        %3334 = vmatpush1.msra.mxu0 0.0
        %3335 = vmatprep.subr.mxu0 0.0
        %3336 = vmatpush1.msra.mxu0 0.0
        %3337 = vmatprep.subr.mxu0 0.0
        %3338 = vmatpush1.msra.mxu0 0.0
        %3339 = vmatprep.subr.mxu0 0.0
        %3340 = vmatpush1.msra.mxu0 0.0
        %3341 = vmatprep.subr.mxu0 0.0
        %3342 = vmatpush1.msra.mxu0 0.0
        %3343 = vmatprep.subr.mxu0 0.0
        %3344 = vmatpush1.msra.mxu0 0.0
        %3345 = vmatprep.subr.mxu0 0.0
        %3346 = vmatpush1.msra.mxu0 0.0
        %3347 = vmatprep.subr.mxu0 0.0
        %3348 = vmatpush1.msra.mxu0 0.0
        %3349 = vmatprep.subr.mxu0 0.0
        %3350 = vmatpush1.msra.mxu0 0.0
        %3351 = vmatprep.mubr.f32.mxu0 0.0
        %v3352 = vand.u32 %v1927, 4294901760
        %v3353 = vsub.f32 %v1927, %v3352
        %v3354 = vand.u32 %v3353, 4294901760
        %3355 = vmatmul.mubr.f32.gmra.mrb[0].mxu0 %v3354
        %v3356 = vpop.f32.mrb[0].mxu0
        %v3357 = vadd.f32 %v3261, %v3356
        %v3358 = vpop.f32.mrb[0].mxu0
        %3359 = vmatprep.mubr.f32.mxu0 0.0
        %v3360 = vand.u32 %v1928, 4294901760
        %v3361 = vsub.f32 %v1928, %v3360
        %v3362 = vand.u32 %v3361, 4294901760
        %3363 = vmatmul.mubr.f32.gmra.mrb[0].mxu0 %v3362
        %v3364 = vpop.f32.mrb[0].mxu0
        %v3365 = vadd.f32 %v3268, %v3364
        %v3366 = vpop.f32.mrb[0].mxu0
        %3367 = vdwg.mxu0
        %3368 = vmatprep.subr.mxu0 0.0
        %v3369 = vand.u32 %v1961, 4294901760
        %v3370 = vsub.f32 %v1961, %v3369
        %v3371 = vand.u32 %v3370, 4294901760
        %3372 = vmatpush1.msra.mxu0 %v3371
        %3373 = vmatprep.subr.mxu0 0.0
        %v3374 = vand.u32 %v1962, 4294901760
        %v3375 = vsub.f32 %v1962, %v3374
        %v3376 = vand.u32 %v3375, 4294901760
        %3377 = vmatpush1.msra.mxu0 %v3376
        %3378 = vmatprep.subr.mxu0 0.0
        %v3379 = vand.u32 %v1963, 4294901760
        %v3380 = vsub.f32 %v1963, %v3379
        %v3381 = vand.u32 %v3380, 4294901760
        %3382 = vmatpush1.msra.mxu0 %v3381
        %3383 = vmatprep.subr.mxu0 0.0
        %v3384 = vand.u32 %v1964, 4294901760
        %v3385 = vsub.f32 %v1964, %v3384
        %v3386 = vand.u32 %v3385, 4294901760
        %3387 = vmatpush1.msra.mxu0 %v3386
        %3388 = vmatprep.subr.mxu0 0.0
        %v3389 = vand.u32 %v1965, 4294901760
        %v3390 = vsub.f32 %v1965, %v3389
        %v3391 = vand.u32 %v3390, 4294901760
        %3392 = vmatpush1.msra.mxu0 %v3391
        %3393 = vmatprep.subr.mxu0 0.0
        %v3394 = vand.u32 %v1966, 4294901760
        %v3395 = vsub.f32 %v1966, %v3394
        %v3396 = vand.u32 %v3395, 4294901760
        %3397 = vmatpush1.msra.mxu0 %v3396
        %3398 = vmatprep.subr.mxu0 0.0
        %v3399 = vand.u32 %v1967, 4294901760
        %v3400 = vsub.f32 %v1967, %v3399
        %v3401 = vand.u32 %v3400, 4294901760
        %3402 = vmatpush1.msra.mxu0 %v3401
        %3403 = vmatprep.subr.mxu0 0.0
        %v3404 = vand.u32 %v1968, 4294901760
        %v3405 = vsub.f32 %v1968, %v3404
        %v3406 = vand.u32 %v3405, 4294901760
        %3407 = vmatpush1.msra.mxu0 %v3406
        %3408 = vmatprep.subr.mxu0 0.0
        %v3409 = vand.u32 %v1969, 4294901760
        %v3410 = vsub.f32 %v1969, %v3409
        %v3411 = vand.u32 %v3410, 4294901760
        %3412 = vmatpush1.msra.mxu0 %v3411
        %3413 = vmatprep.subr.mxu0 0.0
        %v3414 = vand.u32 %v1970, 4294901760
        %v3415 = vsub.f32 %v1970, %v3414
        %v3416 = vand.u32 %v3415, 4294901760
        %3417 = vmatpush1.msra.mxu0 %v3416
        %3418 = vmatprep.subr.mxu0 0.0
        %v3419 = vand.u32 %v1971, 4294901760
        %v3420 = vsub.f32 %v1971, %v3419
        %v3421 = vand.u32 %v3420, 4294901760
        %3422 = vmatpush1.msra.mxu0 %v3421
        %3423 = vmatprep.subr.mxu0 0.0
        %v3424 = vand.u32 %v1972, 4294901760
        %v3425 = vsub.f32 %v1972, %v3424
        %v3426 = vand.u32 %v3425, 4294901760
        %3427 = vmatpush1.msra.mxu0 %v3426
        %3428 = vmatprep.subr.mxu0 0.0
        %v3429 = vand.u32 %v1973, 4294901760
        %v3430 = vsub.f32 %v1973, %v3429
        %v3431 = vand.u32 %v3430, 4294901760
        %3432 = vmatpush1.msra.mxu0 %v3431
        %3433 = vmatprep.subr.mxu0 0.0
        %v3434 = vand.u32 %v1974, 4294901760
        %v3435 = vsub.f32 %v1974, %v3434
        %v3436 = vand.u32 %v3435, 4294901760
        %3437 = vmatpush1.msra.mxu0 %v3436
        %3438 = vmatprep.subr.mxu0 0.0
        %v3439 = vand.u32 %v1975, 4294901760
        %v3440 = vsub.f32 %v1975, %v3439
        %v3441 = vand.u32 %v3440, 4294901760
        %3442 = vmatpush1.msra.mxu0 %v3441
        %3443 = vmatprep.subr.mxu0 0.0
        %v3444 = vand.u32 %v1976, 4294901760
        %v3445 = vsub.f32 %v1976, %v3444
        %v3446 = vand.u32 %v3445, 4294901760
        %3447 = vmatpush1.msra.mxu0 %v3446
        %3448 = vmatprep.subr.mxu0 0.0
        %3449 = vmatpush1.msra.mxu0 0.0
        %3450 = vmatprep.subr.mxu0 0.0
        %3451 = vmatpush1.msra.mxu0 0.0
        %3452 = vmatprep.subr.mxu0 0.0
        %3453 = vmatpush1.msra.mxu0 0.0
        %3454 = vmatprep.subr.mxu0 0.0
        %3455 = vmatpush1.msra.mxu0 0.0
        %3456 = vmatprep.subr.mxu0 0.0
        %3457 = vmatpush1.msra.mxu0 0.0
        %3458 = vmatprep.subr.mxu0 0.0
        %3459 = vmatpush1.msra.mxu0 0.0
        %3460 = vmatprep.subr.mxu0 0.0
        %3461 = vmatpush1.msra.mxu0 0.0
        %3462 = vmatprep.subr.mxu0 0.0
        %3463 = vmatpush1.msra.mxu0 0.0
        %3464 = vmatprep.subr.mxu0 0.0
        %3465 = vmatpush1.msra.mxu0 0.0
        %3466 = vmatprep.subr.mxu0 0.0
        %3467 = vmatpush1.msra.mxu0 0.0
        %3468 = vmatprep.subr.mxu0 0.0
        %3469 = vmatpush1.msra.mxu0 0.0
        %3470 = vmatprep.subr.mxu0 0.0
        %3471 = vmatpush1.msra.mxu0 0.0
        %3472 = vmatprep.subr.mxu0 0.0
        %3473 = vmatpush1.msra.mxu0 0.0
        %3474 = vmatprep.subr.mxu0 0.0
        %3475 = vmatpush1.msra.mxu0 0.0
        %3476 = vmatprep.subr.mxu0 0.0
        %3477 = vmatpush1.msra.mxu0 0.0
        %3478 = vmatprep.subr.mxu0 0.0
        %3479 = vmatpush1.msra.mxu0 0.0
        %3480 = vmatprep.mubr.f32.mxu0 0.0
        %v3481 = vand.u32 %v1927, 4294901760
        %3482 = vmatmul.mubr.f32.gmra.mrb[0].mxu0 %v3481
        %v3483 = vpop.f32.mrb[0].mxu0
        %v3484 = vadd.f32 %v3357, %v3483
        %v3485 = vpop.f32.mrb[0].mxu0
        %3486 = vmatprep.mubr.f32.mxu0 0.0
        %v3487 = vand.u32 %v1928, 4294901760
        %3488 = vmatmul.mubr.f32.gmra.mrb[0].mxu0 %v3487
        %v3489 = vpop.f32.mrb[0].mxu0
        %v3490 = vadd.f32 %v3365, %v3489
        %v3491 = vpop.f32.mrb[0].mxu0
        %3492 = vdwg.mxu0
        %3493 = vmatprep.subr.mxu0 0.0
        %v3494 = vand.u32 %v1961, 4294901760
        %3495 = vmatpush1.msra.mxu0 %v3494
        %3496 = vmatprep.subr.mxu0 0.0
        %v3497 = vand.u32 %v1962, 4294901760
        %3498 = vmatpush1.msra.mxu0 %v3497
        %3499 = vmatprep.subr.mxu0 0.0
        %v3500 = vand.u32 %v1963, 4294901760
        %3501 = vmatpush1.msra.mxu0 %v3500
        %3502 = vmatprep.subr.mxu0 0.0
        %v3503 = vand.u32 %v1964, 4294901760
        %3504 = vmatpush1.msra.mxu0 %v3503
        %3505 = vmatprep.subr.mxu0 0.0
        %v3506 = vand.u32 %v1965, 4294901760
        %3507 = vmatpush1.msra.mxu0 %v3506
        %3508 = vmatprep.subr.mxu0 0.0
        %v3509 = vand.u32 %v1966, 4294901760
        %3510 = vmatpush1.msra.mxu0 %v3509
        %3511 = vmatprep.subr.mxu0 0.0
        %v3512 = vand.u32 %v1967, 4294901760
        %3513 = vmatpush1.msra.mxu0 %v3512
        %3514 = vmatprep.subr.mxu0 0.0
        %v3515 = vand.u32 %v1968, 4294901760
        %3516 = vmatpush1.msra.mxu0 %v3515
        %3517 = vmatprep.subr.mxu0 0.0
        %v3518 = vand.u32 %v1969, 4294901760
        %3519 = vmatpush1.msra.mxu0 %v3518
        %3520 = vmatprep.subr.mxu0 0.0
        %v3521 = vand.u32 %v1970, 4294901760
        %3522 = vmatpush1.msra.mxu0 %v3521
        %3523 = vmatprep.subr.mxu0 0.0
        %v3524 = vand.u32 %v1971, 4294901760
        %3525 = vmatpush1.msra.mxu0 %v3524
        %3526 = vmatprep.subr.mxu0 0.0
        %v3527 = vand.u32 %v1972, 4294901760
        %3528 = vmatpush1.msra.mxu0 %v3527
        %3529 = vmatprep.subr.mxu0 0.0
        %v3530 = vand.u32 %v1973, 4294901760
        %3531 = vmatpush1.msra.mxu0 %v3530
        %3532 = vmatprep.subr.mxu0 0.0
        %v3533 = vand.u32 %v1974, 4294901760
        %3534 = vmatpush1.msra.mxu0 %v3533
        %3535 = vmatprep.subr.mxu0 0.0
        %v3536 = vand.u32 %v1975, 4294901760
        %3537 = vmatpush1.msra.mxu0 %v3536
        %3538 = vmatprep.subr.mxu0 0.0
        %v3539 = vand.u32 %v1976, 4294901760
        %3540 = vmatpush1.msra.mxu0 %v3539
        %3541 = vmatprep.subr.mxu0 0.0
        %3542 = vmatpush1.msra.mxu0 0.0
        %3543 = vmatprep.subr.mxu0 0.0
        %3544 = vmatpush1.msra.mxu0 0.0
        %3545 = vmatprep.subr.mxu0 0.0
        %3546 = vmatpush1.msra.mxu0 0.0
        %3547 = vmatprep.subr.mxu0 0.0
        %3548 = vmatpush1.msra.mxu0 0.0
        %3549 = vmatprep.subr.mxu0 0.0
        %3550 = vmatpush1.msra.mxu0 0.0
        %3551 = vmatprep.subr.mxu0 0.0
        %3552 = vmatpush1.msra.mxu0 0.0
        %3553 = vmatprep.subr.mxu0 0.0
        %3554 = vmatpush1.msra.mxu0 0.0
        %3555 = vmatprep.subr.mxu0 0.0
        %3556 = vmatpush1.msra.mxu0 0.0
        %3557 = vmatprep.subr.mxu0 0.0
        %3558 = vmatpush1.msra.mxu0 0.0
        %3559 = vmatprep.subr.mxu0 0.0
        %3560 = vmatpush1.msra.mxu0 0.0
        %3561 = vmatprep.subr.mxu0 0.0
        %3562 = vmatpush1.msra.mxu0 0.0
        %3563 = vmatprep.subr.mxu0 0.0
        %3564 = vmatpush1.msra.mxu0 0.0
        %3565 = vmatprep.subr.mxu0 0.0
        %3566 = vmatpush1.msra.mxu0 0.0
        %3567 = vmatprep.subr.mxu0 0.0
        %3568 = vmatpush1.msra.mxu0 0.0
        %3569 = vmatprep.subr.mxu0 0.0
        %3570 = vmatpush1.msra.mxu0 0.0
        %3571 = vmatprep.subr.mxu0 0.0
        %3572 = vmatpush1.msra.mxu0 0.0
        %3573 = vmatprep.mubr.f32.mxu0 0.0
        %v3574 = vand.u32 %v1927, 4294901760
        %3575 = vmatmul.mubr.f32.gmra.mrb[0].mxu0 %v3574
        %v3576 = vpop.f32.mrb[0].mxu0
        %v3577 = vadd.f32 %v3484, %v3576
        %v3578 = vpop.f32.mrb[0].mxu0
        %3579 = vmatprep.mubr.f32.mxu0 0.0
        %v3580 = vand.u32 %v1928, 4294901760
        %3581 = vmatmul.mubr.f32.gmra.mrb[0].mxu0 %v3580
        %v3582 = vpop.f32.mrb[0].mxu0
        %v3583 = vadd.f32 %v3490, %v3582
        %v3584 = vpop.f32.mrb[0].mxu0
        %3585 = vdwg.mxu0
        %v3586 = vadd.f32 %v3577, %v256
        %v3587 = vadd.f32 %v3583, %v257
        %v3588 = vmax.f32 %v3586, 0.0
        %v3589 = vmax.f32 %v3587, 0.0
        %3590 = vst [vmem:[%s247] sm:$0xff] %v3588
        %3591 = vst [vmem:[%s247 + $0x8] sm:$0xff] %v3589
        %s3592 = sand.u32 %s139, 1
        %s3593 = scalar_lea.sflag [#allocation5], %s3592
        %s3594 = sand.u32 %s139, 1
        %s3595 = smul.addr %s3594, 16
        %s3596 = scalar_lea.vmem [#allocation8], %s3595
        // Predicated region
        $region49: #{tpu_custom_call.1} parent=39 // pred_check
          %p3597 = pneg %p149
        $region50: #{tpu_custom_call.1} parent=39 // pred_check_branch
          %3599 = sbr.rel (%p3597) target = $region52
        $region51: #{tpu_custom_call.1} parent=39 // pred_region
          %s3600 = smul.u32 2, %s21
          %s3602 = ssub.s32 256, 256
          %3603 = vsyncadd %s3593, %s3602
          %s3604 = smul.addr %s3600, 128
          %s3605 = scalar_lea.hbm %s5, %s3604
          %s3606 = sshll.u32 %s3596, 4
          %s3607 = int_to_ptr.vmem [resolvable:$true] %s3606
          %3612 = dma.vmem_to_hbm [thread:$0]  %s3607, 256, %s3605, %s3593, 128, 128, 8
        $region52: #{tpu_custom_call.1} parent=39 // pred_fallthru
          _
      $region40: #{tpu_custom_call.1} parent=5 // pred_fallthru
        _
      %p3613 = scmp.le.s32.totalorder 2, %s16
      // Predicated region
      $region53: #{tpu_custom_call.1} parent=5 // pred_check
        %p3614 = pneg %p3613
      $region54: #{tpu_custom_call.1} parent=5 // pred_check_branch
        %3616 = sbr.rel (%p3614) target = $region56
      $region55: #{tpu_custom_call.1} parent=5 // pred_region
        %s3617 = ssub.s32 %s16, 2
        // Predicated region
        $region57: #{tpu_custom_call.1} parent=55 // pred_check
          %p3618 = pneg %p155
        $region58: #{tpu_custom_call.1} parent=55 // pred_check_branch
          %3620 = sbr.rel (%p3618) target = $region60
        $region59: #{tpu_custom_call.1} parent=55 // pred_region
          %s3621 = sand.u32 %s140, 1
          %s3622 = scalar_lea.sflag [#allocation5], %s3621
          %s3623 = sand.u32 %s140, 1
          %s3624 = smul.addr %s3623, 16
          %s3625 = scalar_lea.vmem [#allocation8], %s3624
          %3626 = dma.done %s3622, 256
        $region60: #{tpu_custom_call.1} parent=55 // pred_fallthru
          _
      $region56: #{tpu_custom_call.1} parent=5 // pred_fallthru
        _
    $region6: #{tpu_custom_call.1} parent=1 // loop_footer
      %s20 = sadd.s32 1, %s16
    $region7: #{tpu_custom_call.1} parent=1 // loop_footer_branch
      %15 = sbr.rel target = $region3
    $region8: #{tpu_custom_call.1} parent=1 // loop_exit
      _
    %3627 = vsyncpa [#allocation4], 1
    %s3628 = scalar_lea.sflag [#allocation4], 1
    %3629 = vsyncpa %s3628, 1
    %3630 = vsyncpa [#allocation7], 1
    %3631 = vsyncpa [#allocation5], 1
    %s3632 = scalar_lea.sflag [#allocation5], 1
    %3633 = vsyncpa %s3632, 1

</llo_original>
